<compile_context>
chip_gen: v5e
topology: v5e:2x2
jax: 0.10.0
libtpu: 0.0.40
codegen_flags: <defaults>
</compile_context>

<pallas_src>
import math

import jax
import jax.numpy as jnp
from jax.experimental import pallas as pl
from jax.experimental.pallas import tpu as pltpu


# ---------------------------------------------------------------------------
# Chip-aware tile targets & VMEM budget
# ---------------------------------------------------------------------------
def _vmem_capacity_bytes():
    try:
        return int(getattr(pltpu.get_tpu_info(), "vmem_capacity_bytes", 64 << 20))
    except Exception:
        return 64 << 20


_VMEM_CAP = _vmem_capacity_bytes()
# v5e/v6e: 128 MiB VMEM -> bigger tiles; v7x: 64 MiB -> stay modest.
if _VMEM_CAP >= (100 << 20):
    TM, TN, TK, TH = 512, 512, 1024, 1024
else:
    TM, TN, TK, TH = 256, 256, 512, 512
VMEM_LIMIT = max(32 << 20, min((_VMEM_CAP * 3) // 4, 96 << 20))


def _cparams(dims):
    return pltpu.CompilerParams(dimension_semantics=dims,
                                vmem_limit_bytes=VMEM_LIMIT)


def _pick_lane_tile(dim, target):
    """Largest tile <= target dividing `dim`; prefer 256-aligned tiles (fill a
    256-wide MXU on v6e/v7x), fall back to 128-aligned, else the full dim
    (always legal for BlockSpec)."""
    if dim <= target:
        return dim
    for align in (256, 128):
        t = (target // align) * align
        while t >= align:
            if dim % t == 0:
                return t
            t -= align
    return dim


def _pick_row_tile(m, target):
    """Row (sublane) tile; aims for >=2 row tiles so megacore / 2-TC chips can
    shard the parallel grid axis."""
    if m >= 16:
        target = min(target, max(8, ((m // 2) // 8) * 8))
    if m <= target:
        return m
    t = (target // 8) * 8
    while t >= 8:
        if m % t == 0:
            return t
        t -= 8
    return m


def _pad_cols_to(w, mult=128):
    n = w.shape[1]
    npad = ((n + mult - 1) // mult) * mult
    if npad == n:
        return w
    return jnp.pad(w, ((0, 0), (0, npad - n)))


# ---------------------------------------------------------------------------
# In-kernel helpers
# ---------------------------------------------------------------------------
def _gelu_exact(x):
    # Exact erf-GELU via Abramowitz-Stegun 7.1.26 (|err| < ~1e-6 with the approx
    # reciprocal): exp on the EUP, divide replaced by pl.reciprocal (EUP slot).
    z = x * (1.0 / math.sqrt(2.0))
    a = jnp.abs(z)
    t = pl.reciprocal(1.0 + 0.3275911 * a, approx=True)
    poly = t * (0.254829592 + t * (-0.284496736 + t * (1.421413741
                + t * (-1.453152027 + t * 1.061405429))))
    erf_abs = 1.0 - poly * jnp.exp(-a * a)
    erf = jnp.where(z < 0.0, -erf_abs, erf_abs)
    return 0.5 * x * (1.0 + erf)


def _layernorm_f32(x, g, b):
    mu = jnp.mean(x, axis=-1, keepdims=True)
    var = jnp.mean(jnp.square(x - mu), axis=-1, keepdims=True)
    return (x - mu) * jax.lax.rsqrt(var + 1e-5) * g + b


# ---------------------------------------------------------------------------
# Pallas kernels
# ---------------------------------------------------------------------------
def _matmul_kernel(x_ref, w_ref, o_ref, acc_ref):
    @pl.when(pl.program_id(2) == 0)
    def _():
        acc_ref[...] = jnp.zeros_like(acc_ref)

    acc_ref[...] += jnp.dot(x_ref[...].astype(jnp.bfloat16), w_ref[...],
                            preferred_element_type=jnp.float32)

    @pl.when(pl.program_id(2) == pl.num_programs(2) - 1)
    def _():
        o_ref[...] = acc_ref[...].astype(o_ref.dtype)


def _matmul_bias_kernel(x_ref, w_ref, b_ref, o_ref, acc_ref):
    @pl.when(pl.program_id(2) == 0)
    def _():
        acc_ref[...] = jnp.zeros_like(acc_ref)

    acc_ref[...] += jnp.dot(x_ref[...].astype(jnp.bfloat16), w_ref[...],
                            preferred_element_type=jnp.float32)

    @pl.when(pl.program_id(2) == pl.num_programs(2) - 1)
    def _():
        o_ref[...] = (acc_ref[...] + b_ref[...]).astype(o_ref.dtype)


def _ln_matmul_kernel(x_ref, g_ref, beta_ref, w_ref, o_ref, xn_ref):
    # LayerNorm fused into the following (bias-free) matmul.  The LN result is
    # cached in a bf16 VMEM scratch and computed only once per row tile (j==0),
    # then reused for every output-column tile.
    @pl.when(pl.program_id(1) == 0)
    def _():
        xn_ref[...] = _layernorm_f32(x_ref[...].astype(jnp.float32),
                                     g_ref[...], beta_ref[...]).astype(jnp.bfloat16)

    o_ref[...] = jnp.dot(xn_ref[...], w_ref[...],
                         preferred_element_type=jnp.float32).astype(o_ref.dtype)


def _mlp_kernel(x_ref, g_ref, beta_ref, fcw_ref, fcb_ref, pw_ref, pb_ref, o_ref,
                xn_ref, acc_ref):
    # Fused ln2 -> fc -> GELU -> proj -> (+residual). Grid = (rows, hidden tiles).
    j = pl.program_id(1)

    @pl.when(j == 0)
    def _():
        xn_ref[...] = _layernorm_f32(x_ref[...].astype(jnp.float32),
                                     g_ref[...], beta_ref[...]).astype(jnp.bfloat16)
        acc_ref[...] = jnp.zeros_like(acc_ref)

    h = (jnp.dot(xn_ref[...], fcw_ref[...], preferred_element_type=jnp.float32)
         + fcb_ref[...])
    h = _gelu_exact(h)
    acc_ref[...] += jnp.dot(h.astype(jnp.bfloat16), pw_ref[...],
                            preferred_element_type=jnp.float32)

    @pl.when(j == pl.num_programs(1) - 1)
    def _():
        o_ref[...] = (acc_ref[...] + pb_ref[...]
                      + x_ref[...].astype(jnp.float32)).astype(o_ref.dtype)


def _attn_block_kernel(x_ref, g_ref, b_ref, wq_ref, wk_ref, wv_ref,
                       bq_ref, bk_ref, bv_ref, wo_ref, bo_ref, o_ref):
    # Whole attention sub-block, one batch per grid step:
    #   ln1 -> per-head (q,k,v) projections -> causal softmax attention
    #       -> output projection (accumulated per head) -> +residual.
    # Heads are handled via pre-split (H,C,D)/(H,D,C) weights, so there is no
    # sub-128-lane activation slicing and no concatenate epilogue.
    S = x_ref.shape[1]
    H, C, D = wq_ref.shape
    scale = 1.0 / math.sqrt(D)

    x = x_ref[0].astype(jnp.float32)                               # (S, C)
    xn = _layernorm_f32(x, g_ref[...], b_ref[...]).astype(jnp.bfloat16)

    row = jax.lax.broadcasted_iota(jnp.int32, (S, S), 0)
    col = jax.lax.broadcasted_iota(jnp.int32, (S, S), 1)
    causal = col <= row

    acc = jnp.zeros((S, C), jnp.float32)
    for h in range(H):
        q = jnp.dot(xn, wq_ref[h], preferred_element_type=jnp.float32) + bq_ref[h]
        k = jnp.dot(xn, wk_ref[h], preferred_element_type=jnp.float32) + bk_ref[h]
        v = jnp.dot(xn, wv_ref[h], preferred_element_type=jnp.float32) + bv_ref[h]
        s = jax.lax.dot_general(q.astype(jnp.bfloat16), k.astype(jnp.bfloat16),
                                (((1,), (1,)), ((), ())),
                                preferred_element_type=jnp.float32) * scale
        s = jnp.where(causal, s, jnp.float32(-1e30))   # finite mask (NaN-safe)
        m = jnp.max(s, axis=-1, keepdims=True)
        p = jnp.exp(s - m)
        inv = pl.reciprocal(jnp.sum(p, axis=-1, keepdims=True), approx=True)
        p = p * inv
        y = jnp.dot(p.astype(jnp.bfloat16), v.astype(jnp.bfloat16),
                    preferred_element_type=jnp.float32)            # (S, D)
        acc = acc + jnp.dot(y.astype(jnp.bfloat16), wo_ref[h],
                            preferred_element_type=jnp.float32)    # (S, C)

    o_ref[0] = (x + acc + bo_ref[...]).astype(o_ref.dtype)
    # TODO(synk): flash-style KV tiling (online softmax, causal-tile skipping) for
    # long sequences; at block_size=16 the full SxS scores trivially fit VMEM.


# ---------------------------------------------------------------------------
# Wrappers
# ---------------------------------------------------------------------------
def linear(x, w, b=None, out_dtype=jnp.float32):
    """Tiled bf16 matmul (+bias) with f32 accumulation (used for embeddings)."""
    M, K = x.shape
    N = w.shape[1]
    tm = _pick_row_tile(M, TM)
    tn = _pick_lane_tile(N, TN)
    tk = _pick_lane_tile(K, TK)
    grid = (M // tm, N // tn, K // tk)

    x_spec = pl.BlockSpec((tm, tk), lambda i, j, k: (i, k))
    w_spec = pl.BlockSpec((tk, tn), lambda i, j, k: (k, j))
    b_spec = pl.BlockSpec((1, tn), lambda i, j, k: (0, j))
    o_spec = pl.BlockSpec((tm, tn), lambda i, j, k: (i, j))

    out_shape = jax.ShapeDtypeStruct((M, N), out_dtype)
    scratch = [pltpu.VMEM((tm, tn), jnp.float32)]
    cp = _cparams(("parallel", "parallel", "arbitrary"))

    if b is None:
        return pl.pallas_call(_matmul_kernel, out_shape=out_shape, grid=grid,
                              in_specs=[x_spec, w_spec], out_specs=o_spec,
                              scratch_shapes=scratch, compiler_params=cp)(x, w)
    return pl.pallas_call(_matmul_bias_kernel, out_shape=out_shape, grid=grid,
                          in_specs=[x_spec, w_spec, b_spec], out_specs=o_spec,
                          scratch_shapes=scratch, compiler_params=cp)(
        x, w, b.reshape(1, N))


def ln_linear(x, g, beta, w, out_dtype=jnp.float32):
    """LayerNorm fused into the following (bias-free) matmul, LN cached in VMEM."""
    M, C = x.shape
    N = w.shape[1]
    tm = _pick_row_tile(M, TM)
    tn = _pick_lane_tile(N, TN)
    grid = (M // tm, N // tn)

    x_spec = pl.BlockSpec((tm, C), lambda i, j: (i, 0))
    v_spec = pl.BlockSpec((1, C), lambda i, j: (0, 0))
    w_spec = pl.BlockSpec((C, tn), lambda i, j: (0, j))
    o_spec = pl.BlockSpec((tm, tn), lambda i, j: (i, j))

    return pl.pallas_call(
        _ln_matmul_kernel, out_shape=jax.ShapeDtypeStruct((M, N), out_dtype),
        grid=grid, in_specs=[x_spec, v_spec, v_spec, w_spec], out_specs=o_spec,
        scratch_shapes=[pltpu.VMEM((tm, C), jnp.bfloat16)],
        compiler_params=_cparams(("parallel", "arbitrary")))(x, g, beta, w)


def mlp_block(x, blk):
    """Fused ln2 + fc + GELU + proj + residual; (M, 4C) hidden never hits HBM."""
    M, C = x.shape
    HID = blk["fc_w"].shape[1]
    tm = _pick_row_tile(M, TM)
    th = _pick_lane_tile(HID, TH)
    grid = (M // tm, HID // th)

    x_spec = pl.BlockSpec((tm, C), lambda i, j: (i, 0))
    vc_spec = pl.BlockSpec((1, C), lambda i, j: (0, 0))
    fcw_spec = pl.BlockSpec((C, th), lambda i, j: (0, j))
    fcb_spec = pl.BlockSpec((1, th), lambda i, j: (0, j))
    pw_spec = pl.BlockSpec((th, C), lambda i, j: (j, 0))
    o_spec = pl.BlockSpec((tm, C), lambda i, j: (i, 0))

    return pl.pallas_call(
        _mlp_kernel, out_shape=jax.ShapeDtypeStruct((M, C), jnp.bfloat16),
        grid=grid,
        in_specs=[x_spec, vc_spec, vc_spec, fcw_spec, fcb_spec, pw_spec, vc_spec],
        out_specs=o_spec,
        scratch_shapes=[pltpu.VMEM((tm, C), jnp.bfloat16),
                        pltpu.VMEM((tm, C), jnp.float32)],
        compiler_params=_cparams(("parallel", "arbitrary")))(
        x, blk["ln2_g"], blk["ln2_b"], blk["fc_w"], blk["fc_b"],
        blk["pw"], blk["pb"])


def attention_block(x, blk):
    """Fused ln1 + qkv + causal attention + output projection + residual.
    x: (B, S, C) bf16 -> (B, S, C) bf16; one batch element per grid step."""
    B, S, C = x.shape
    H, _, D = blk["wq"].shape

    x_spec = pl.BlockSpec((1, S, C), lambda b: (b, 0, 0))
    vc_spec = pl.BlockSpec((1, C), lambda b: (0, 0))
    wh_spec = pl.BlockSpec((H, C, D), lambda b: (0, 0, 0))
    bh_spec = pl.BlockSpec((H, 1, D), lambda b: (0, 0, 0))
    wo_spec = pl.BlockSpec((H, D, C), lambda b: (0, 0, 0))
    o_spec = pl.BlockSpec((1, S, C), lambda b: (b, 0, 0))

    return pl.pallas_call(
        _attn_block_kernel,
        out_shape=jax.ShapeDtypeStruct((B, S, C), jnp.bfloat16),
        grid=(B,),
        in_specs=[x_spec, vc_spec, vc_spec, wh_spec, wh_spec, wh_spec,
                  bh_spec, bh_spec, bh_spec, wo_spec, vc_spec],
        out_specs=o_spec,
        compiler_params=_cparams(("parallel",)))(
        x, blk["ln1_g"], blk["ln1_b"], blk["wq"], blk["wk"], blk["wv"],
        blk["bq"], blk["bk"], blk["bv"], blk["wo"], blk["bo"])


# ---------------------------------------------------------------------------
# Parameter preparation (one-time layout / dtype work kept out of the forward)
# ---------------------------------------------------------------------------
def prepare_params(params, cfg):
    """Pre-cast matmul weights to bf16, pre-split attention weights per head,
    pad the lm_head output to a multiple of 128 lanes."""
    C = cfg["n_embd"]
    H = cfg["n_head"]
    D = C // H
    bf = lambda a: a.astype(jnp.bfloat16)

    def prep_block(blk):
        aw, ab = blk["attn_w"], blk["attn_b"]
        split = lambda w: w.reshape(C, H, D).transpose(1, 0, 2)     # (H, C, D)
        return dict(
            ln1_g=blk["ln1_w"].reshape(1, C), ln1_b=blk["ln1_b"].reshape(1, C),
            wq=bf(split(aw[:, 0 * C:1 * C])),
            wk=bf(split(aw[:, 1 * C:2 * C])),
            wv=bf(split(aw[:, 2 * C:3 * C])),
            bq=ab[0 * C:1 * C].reshape(H, 1, D),
            bk=ab[1 * C:2 * C].reshape(H, 1, D),
            bv=ab[2 * C:3 * C].reshape(H, 1, D),
            wo=bf(blk["attn_proj_w"].reshape(H, D, C)),
            bo=blk["attn_proj_b"].reshape(1, C),
            ln2_g=blk["ln2_w"].reshape(1, C), ln2_b=blk["ln2_b"].reshape(1, C),
            fc_w=bf(blk["fc_w"]), fc_b=blk["fc_b"].reshape(1, 4 * C),
            pw=bf(blk["mlp_proj_w"]), pb=blk["mlp_proj_b"].reshape(1, C),
        )

    return dict(
        wte_w=bf(params["wte_w"]),
        ctxe_w=bf(params["ctxe_w"]), ctxe_b=params["ctxe_b"],
        wpe=params["wpe"],
        lnf_g=params["lnf_w"].reshape(1, C), lnf_b=params["lnf_b"].reshape(1, C),
        lm_head_w=bf(_pad_cols_to(params["lm_head_w"], 128)),
        blocks=[prep_block(b) for b in params["blocks"]],
    )


# ---------------------------------------------------------------------------
# GPT forward (Pallas-backed).  dropout=0 (eval) -> identity; mask=None path.
# ---------------------------------------------------------------------------
def gpt_forward(prep, idx, context, cfg):
    B, T, n_inp = idx.shape
    C = cfg["n_embd"]
    n_out = cfg["input_dim"]
    assert T <= cfg["block_size"]

    # Embeddings (tiny projections) + vanilla PE; concat/add glue stays in XLA.
    tok = linear(idx.reshape(B * T, n_inp), prep["wte_w"]).reshape(B, T, C)
    ctx = linear(context, prep["ctxe_w"], prep["ctxe_b"])[:, None, :]
    x = jnp.concatenate([ctx, tok], axis=1)              # (B, T+1, C) f32
    S = T + 1
    x = x + prep["wpe"][:S][None, :, :]                   # dropout p=0 -> identity
    x = x.astype(jnp.bfloat16)                            # bf16 residual stream

    for blk in prep["blocks"]:
        x = attention_block(x, blk)                        # fused attn sub-block
        x = mlp_block(x.reshape(B * S, C), blk).reshape(B, S, C)  # fused MLP

    # lnf + lm_head fused; output padded to 128 lanes for lane-dense stores.
    logits = ln_linear(x.reshape(B * S, C), prep["lnf_g"], prep["lnf_b"],
                       prep["lm_head_w"])
    logits = logits.reshape(B, S, -1)[:, 1:, :n_out]       # drop context pos + pad
    return logits


# ---------------------------------------------------------------------------
# Pure-JAX f32 reference (same math as the PyTorch module)
# ---------------------------------------------------------------------------
def _ref_ln(x, w, b):
    mu = x.mean(-1, keepdims=True)
    var = ((x - mu) ** 2).mean(-1, keepdims=True)
    return (x - mu) / jnp.sqrt(var + 1e-5) * w + b


def _ref_gelu(x):
    return 0.5 * x * (1.0 + jax.scipy.special.erf(x / math.sqrt(2.0)))


def gpt_reference(params, idx, context, cfg):
    B, T, n_inp = idx.shape
    C = cfg["n_embd"]
    H = cfg["n_head"]
    D = C // H
    tok = idx @ params["wte_w"]
    ctx = (context @ params["ctxe_w"] + params["ctxe_b"])[:, None, :]
    x = jnp.concatenate([ctx, tok], axis=1)
    S = T + 1
    x = x + params["wpe"][:S][None, :, :]
    mask = jnp.tril(jnp.ones((S, S), bool))
    for blk in params["blocks"]:
        h = _ref_ln(x, blk["ln1_w"], blk["ln1_b"])
        qkv = h @ blk["attn_w"] + blk["attn_b"]
        q, k, v = jnp.split(qkv, 3, axis=2)

        def hs(t):
            return t.reshape(B, S, H, D).transpose(0, 2, 1, 3)

        q, k, v = hs(q), hs(k), hs(v)
        s = jnp.einsum("bhqd,bhkd->bhqk", q, k) / math.sqrt(D)
        s = jnp.where(mask, s, -jnp.inf)
        p = jax.nn.softmax(s, axis=-1)
        y = jnp.einsum("bhqk,bhkd->bhqd", p, v)
        y = y.transpose(0, 2, 1, 3).reshape(B, S, C)
        x = x + (y @ blk["attn_proj_w"] + blk["attn_proj_b"])

        h = _ref_ln(x, blk["ln2_w"], blk["ln2_b"])
        h = _ref_gelu(h @ blk["fc_w"] + blk["fc_b"])
        x = x + (h @ blk["mlp_proj_w"] + blk["mlp_proj_b"])
    xf = _ref_ln(x, params["lnf_w"], params["lnf_b"])
    logits = xf @ params["lm_head_w"]
    return logits[:, 1:, :]


# ---------------------------------------------------------------------------
# Deterministic parameter init (matching the module's _init_weights scheme)
# ---------------------------------------------------------------------------
def init_params(key, cfg):
    C = cfg["n_embd"]
    std = 0.02
    proj_std = 0.02 / math.sqrt(2 * cfg["n_layer"])
    keys = iter(jax.random.split(key, 64))

    def nrm(shape, s=std):
        return (s * jax.random.normal(next(keys), shape)).astype(jnp.float32)

    params = dict(
        wte_w=nrm((cfg["input_dim"], C)),
        ctxe_w=nrm((cfg["context_dim"], C)),
        ctxe_b=jnp.zeros((C,), jnp.float32),
        wpe=nrm((cfg["block_size"], C)),
        lnf_w=jnp.ones((C,), jnp.float32),
        lnf_b=jnp.zeros((C,), jnp.float32),
        lm_head_w=nrm((C, cfg["input_dim"])),
        blocks=[],
    )
    for _ in range(cfg["n_layer"]):
        params["blocks"].append(
            dict(
                ln1_w=jnp.ones((C,), jnp.float32),
                ln1_b=jnp.zeros((C,), jnp.float32),
                attn_w=nrm((C, 3 * C)),
                attn_b=jnp.zeros((3 * C,), jnp.float32),
                attn_proj_w=nrm((C, C), proj_std),
                attn_proj_b=jnp.zeros((C,), jnp.float32),
                ln2_w=jnp.ones((C,), jnp.float32),
                ln2_b=jnp.zeros((C,), jnp.float32),
                fc_w=nrm((C, 4 * C)),
                fc_b=jnp.zeros((4 * C,), jnp.float32),
                mlp_proj_w=nrm((4 * C, C), proj_std),
                mlp_proj_b=jnp.zeros((C,), jnp.float32),
            )
        )
    return params


if __name__ == "__main__":
    cfg = dict(
        input_dim=4,
        context_dim=3,
        n_embd=32,
        n_head=4,
        n_layer=2,
        block_size=16,
        dropout=0.0,
        bias=True,
        use_pe=True,
        use_rope=False,
        tokenized=False,
    )
    key = jax.random.PRNGKey(0)
    kp, kx, kc = jax.random.split(key, 3)
    params_f32 = init_params(kp, cfg)
    prep = prepare_params(params_f32, cfg)

    B, T = 2, 7
    idx = jax.random.normal(kx, (B, T, cfg["input_dim"]), jnp.float32)
    context = jax.random.normal(kc, (B, cfg["context_dim"]), jnp.float32)

    fwd = jax.jit(lambda p, i, c: gpt_forward(p, i, c, cfg))
    out = jax.block_until_ready(fwd(prep, idx, context))
    assert out.shape == (B, T, cfg["input_dim"]), out.shape
    assert bool(jnp.all(jnp.isfinite(out)))

    ref = gpt_reference(params_f32, idx, context, cfg)
    err = float(jnp.max(jnp.abs(out - ref)))
    # bf16 MXU inputs + bf16 residual stream + approx softmax/GELU reciprocals vs
    # a pure-f32 reference: allow a small absolute tolerance.
    if err > 3e-2:
        raise SystemExit(f"mismatch vs reference: max abs err {err:e}")

    print("KERNEL_OK")
</pallas_src>

<mosaic_0001>
module attributes {stable_mosaic.version = 11 : i64} {
  func.func @_matmul_kernel(%arg0: i32, %arg1: i32, %arg2: i32, %arg3: memref<14x4xf32, #tpu.memory_space<vmem>>, %arg4: memref<4x32xbf16, #tpu.memory_space<vmem>>, %arg5: memref<14x32xf32, #tpu.memory_space<vmem>>, %arg6: memref<14x32xf32, #tpu.memory_space<vmem>>) attributes {dimension_semantics = [#tpu.dimension_semantics<parallel>, #tpu.dimension_semantics<parallel>, #tpu.dimension_semantics<arbitrary>], iteration_bounds = array<i64: 1, 1, 1>, scalar_prefetch = 0 : i64, scratch_operands = 1 : i64, tpu.core_type = #tpu.core_type<tc>, window_params = [{transform_indices = @transform_0, window_bounds = array<i64: 14, 4>}, {transform_indices = @transform_1, window_bounds = array<i64: 4, 32>}, {transform_indices = @transform_2, window_bounds = array<i64: 14, 32>}]} {
    %c0_i32 = arith.constant 0 : i32
    %0 = arith.cmpi eq, %arg2, %c0_i32 : i32
    %1 = arith.extui %0 : i1 to i32
    %c0_i32_0 = arith.constant 0 : i32
    %2 = arith.cmpi ne, %1, %c0_i32_0 : i32
    scf.if %2 {
      %cst_10 = arith.constant 0.000000e+00 : f32
      %13 = vector.broadcast %cst_10 : f32 to vector<14x32xf32>
      %c0_11 = arith.constant 0 : index
      %c0_12 = arith.constant 0 : index
      %14 = vector.load %arg6[%c0_11, %c0_12] : memref<14x32xf32, #tpu.memory_space<vmem>>, vector<14x32xf32>
      tpu.vector_store %arg6[%c0_11, %c0_12], %13 {strides = array<i32>} : memref<14x32xf32, #tpu.memory_space<vmem>>, vector<14x32xf32>,
    } else {
    }
    %c0 = arith.constant 0 : index
    %c0_1 = arith.constant 0 : index
    %3 = vector.load %arg6[%c0, %c0_1] : memref<14x32xf32, #tpu.memory_space<vmem>>, vector<14x32xf32>
    %c0_2 = arith.constant 0 : index
    %c0_3 = arith.constant 0 : index
    %4 = vector.load %arg3[%c0_2, %c0_3] : memref<14x4xf32, #tpu.memory_space<vmem>>, vector<14x4xf32>
    %5 = arith.truncf %4 : vector<14x4xf32> to vector<14x4xbf16>
    %c0_4 = arith.constant 0 : index
    %c0_5 = arith.constant 0 : index
    %6 = vector.load %arg4[%c0_4, %c0_5] : memref<4x32xbf16, #tpu.memory_space<vmem>>, vector<4x32xbf16>
    %cst = arith.constant dense<0.000000e+00> : vector<14x32xf32>
    %7 = tpu.matmul %5, %6, %cst {dimension_numbers = #tpu.dot_dimension_numbers<[1], [0], [0], [1], [0, 0, 1, 1], [], []>} : vector<14x4xbf16>, vector<4x32xbf16>, vector<14x32xf32> -> vector<14x32xf32>
    %8 = arith.addf %3, %7 : vector<14x32xf32>
    %c0_6 = arith.constant 0 : index
    %c0_7 = arith.constant 0 : index
    %9 = vector.load %arg6[%c0_6, %c0_7] : memref<14x32xf32, #tpu.memory_space<vmem>>, vector<14x32xf32>
    tpu.vector_store %arg6[%c0_6, %c0_7], %8 {strides = array<i32>} : memref<14x32xf32, #tpu.memory_space<vmem>>, vector<14x32xf32>,
    %c0_i32_8 = arith.constant 0 : i32
    %10 = arith.cmpi eq, %arg2, %c0_i32_8 : i32
    %11 = arith.extui %10 : i1 to i32
    %c0_i32_9 = arith.constant 0 : i32
    %12 = arith.cmpi ne, %11, %c0_i32_9 : i32
    scf.if %12 {
      %c0_10 = arith.constant 0 : index
      %c0_11 = arith.constant 0 : index
      %13 = vector.load %arg6[%c0_10, %c0_11] : memref<14x32xf32, #tpu.memory_space<vmem>>, vector<14x32xf32>
      %c0_12 = arith.constant 0 : index
      %c0_13 = arith.constant 0 : index
      %14 = vector.load %arg5[%c0_12, %c0_13] : memref<14x32xf32, #tpu.memory_space<vmem>>, vector<14x32xf32>
      tpu.vector_store %arg5[%c0_12, %c0_13], %13 {strides = array<i32>} : memref<14x32xf32, #tpu.memory_space<vmem>>, vector<14x32xf32>,
    } else {
    }
    return
  }
  func.func @transform_0(%arg0: i32, %arg1: i32, %arg2: i32) -> (i32, i32) {
    %c0_i32 = arith.constant 0 : i32
    return %arg0, %arg2 : i32, i32
  }
  func.func @transform_1(%arg0: i32, %arg1: i32, %arg2: i32) -> (i32, i32) {
    %c0_i32 = arith.constant 0 : i32
    return %arg2, %arg1 : i32, i32
  }
  func.func @transform_2(%arg0: i32, %arg1: i32, %arg2: i32) -> (i32, i32) {
    %c0_i32 = arith.constant 0 : i32
    return %arg0, %arg1 : i32, i32
  }
}

module attributes {stable_mosaic.version = 11 : i64} {
  func.func @_matmul_bias_kernel(%arg0: i32, %arg1: i32, %arg2: i32, %arg3: memref<2x3xf32, #tpu.memory_space<vmem>>, %arg4: memref<3x32xbf16, #tpu.memory_space<vmem>>, %arg5: memref<1x32xf32, #tpu.memory_space<vmem>>, %arg6: memref<2x32xf32, #tpu.memory_space<vmem>>, %arg7: memref<2x32xf32, #tpu.memory_space<vmem>>) attributes {dimension_semantics = [#tpu.dimension_semantics<parallel>, #tpu.dimension_semantics<parallel>, #tpu.dimension_semantics<arbitrary>], iteration_bounds = array<i64: 1, 1, 1>, scalar_prefetch = 0 : i64, scratch_operands = 1 : i64, tpu.core_type = #tpu.core_type<tc>, window_params = [{transform_indices = @transform_0, window_bounds = array<i64: 2, 3>}, {transform_indices = @transform_1, window_bounds = array<i64: 3, 32>}, {transform_indices = @transform_2, window_bounds = array<i64: 1, 32>}, {transform_indices = @transform_3, window_bounds = array<i64: 2, 32>}]} {
    %c0_i32 = arith.constant 0 : i32
    %0 = arith.cmpi eq, %arg2, %c0_i32 : i32
    %1 = arith.extui %0 : i1 to i32
    %c0_i32_0 = arith.constant 0 : i32
    %2 = arith.cmpi ne, %1, %c0_i32_0 : i32
    scf.if %2 {
      %cst_10 = arith.constant 0.000000e+00 : f32
      %13 = vector.broadcast %cst_10 : f32 to vector<2x32xf32>
      %c0_11 = arith.constant 0 : index
      %c0_12 = arith.constant 0 : index
      %14 = vector.load %arg7[%c0_11, %c0_12] : memref<2x32xf32, #tpu.memory_space<vmem>>, vector<2x32xf32>
      tpu.vector_store %arg7[%c0_11, %c0_12], %13 {strides = array<i32>} : memref<2x32xf32, #tpu.memory_space<vmem>>, vector<2x32xf32>,
    } else {
    }
    %c0 = arith.constant 0 : index
    %c0_1 = arith.constant 0 : index
    %3 = vector.load %arg7[%c0, %c0_1] : memref<2x32xf32, #tpu.memory_space<vmem>>, vector<2x32xf32>
    %c0_2 = arith.constant 0 : index
    %c0_3 = arith.constant 0 : index
    %4 = vector.load %arg3[%c0_2, %c0_3] : memref<2x3xf32, #tpu.memory_space<vmem>>, vector<2x3xf32>
    %5 = arith.truncf %4 : vector<2x3xf32> to vector<2x3xbf16>
    %c0_4 = arith.constant 0 : index
    %c0_5 = arith.constant 0 : index
    %6 = vector.load %arg4[%c0_4, %c0_5] : memref<3x32xbf16, #tpu.memory_space<vmem>>, vector<3x32xbf16>
    %cst = arith.constant dense<0.000000e+00> : vector<2x32xf32>
    %7 = tpu.matmul %5, %6, %cst {dimension_numbers = #tpu.dot_dimension_numbers<[1], [0], [0], [1], [0, 0, 1, 1], [], []>} : vector<2x3xbf16>, vector<3x32xbf16>, vector<2x32xf32> -> vector<2x32xf32>
    %8 = arith.addf %3, %7 : vector<2x32xf32>
    %c0_6 = arith.constant 0 : index
    %c0_7 = arith.constant 0 : index
    %9 = vector.load %arg7[%c0_6, %c0_7] : memref<2x32xf32, #tpu.memory_space<vmem>>, vector<2x32xf32>
    tpu.vector_store %arg7[%c0_6, %c0_7], %8 {strides = array<i32>} : memref<2x32xf32, #tpu.memory_space<vmem>>, vector<2x32xf32>,
    %c0_i32_8 = arith.constant 0 : i32
    %10 = arith.cmpi eq, %arg2, %c0_i32_8 : i32
    %11 = arith.extui %10 : i1 to i32
    %c0_i32_9 = arith.constant 0 : i32
    %12 = arith.cmpi ne, %11, %c0_i32_9 : i32
    scf.if %12 {
      %c0_10 = arith.constant 0 : index
      %c0_11 = arith.constant 0 : index
      %13 = vector.load %arg7[%c0_10, %c0_11] : memref<2x32xf32, #tpu.memory_space<vmem>>, vector<2x32xf32>
      %c0_12 = arith.constant 0 : index
      %c0_13 = arith.constant 0 : index
      %14 = vector.load %arg5[%c0_12, %c0_13] : memref<1x32xf32, #tpu.memory_space<vmem>>, vector<1x32xf32>
      %15 = vector.broadcast %14 : vector<1x32xf32> to vector<2x32xf32>
      %16 = arith.addf %13, %15 : vector<2x32xf32>
      %c0_14 = arith.constant 0 : index
      %c0_15 = arith.constant 0 : index
      %17 = vector.load %arg6[%c0_14, %c0_15] : memref<2x32xf32, #tpu.memory_space<vmem>>, vector<2x32xf32>
      tpu.vector_store %arg6[%c0_14, %c0_15], %16 {strides = array<i32>} : memref<2x32xf32, #tpu.memory_space<vmem>>, vector<2x32xf32>,
    } else {
    }
    return
  }
  func.func @transform_0(%arg0: i32, %arg1: i32, %arg2: i32) -> (i32, i32) {
    %c0_i32 = arith.constant 0 : i32
    return %arg0, %arg2 : i32, i32
  }
  func.func @transform_1(%arg0: i32, %arg1: i32, %arg2: i32) -> (i32, i32) {
    %c0_i32 = arith.constant 0 : i32
    return %arg2, %arg1 : i32, i32
  }
  func.func @transform_2(%arg0: i32, %arg1: i32, %arg2: i32) -> (i32, i32) {
    %c0_i32 = arith.constant 0 : i32
    %c0_i32_0 = arith.constant 0 : i32
    return %c0_i32, %arg1 : i32, i32
  }
  func.func @transform_3(%arg0: i32, %arg1: i32, %arg2: i32) -> (i32, i32) {
    %c0_i32 = arith.constant 0 : i32
    return %arg0, %arg1 : i32, i32
  }
}

module attributes {stable_mosaic.version = 11 : i64} {
  func.func @_attn_block_kernel(%arg0: i32, %arg1: memref<1x8x32xbf16, #tpu.memory_space<vmem>>, %arg2: memref<1x32xf32, #tpu.memory_space<vmem>>, %arg3: memref<1x32xf32, #tpu.memory_space<vmem>>, %arg4: memref<4x32x8xbf16, #tpu.memory_space<vmem>>, %arg5: memref<4x32x8xbf16, #tpu.memory_space<vmem>>, %arg6: memref<4x32x8xbf16, #tpu.memory_space<vmem>>, %arg7: memref<4x1x8xf32, #tpu.memory_space<vmem>>, %arg8: memref<4x1x8xf32, #tpu.memory_space<vmem>>, %arg9: memref<4x1x8xf32, #tpu.memory_space<vmem>>, %arg10: memref<4x8x32xbf16, #tpu.memory_space<vmem>>, %arg11: memref<1x32xf32, #tpu.memory_space<vmem>>, %arg12: memref<1x8x32xbf16, #tpu.memory_space<vmem>>) attributes {dimension_semantics = [#tpu.dimension_semantics<parallel>], iteration_bounds = array<i64: 2>, scalar_prefetch = 0 : i64, scratch_operands = 0 : i64, tpu.core_type = #tpu.core_type<tc>, window_params = [{transform_indices = @transform_0, window_bounds = array<i64: 1, 8, 32>}, {pipeline_mode = #tpu.pipeline_mode<synchronous>, transform_indices = @transform_1, window_bounds = array<i64: 1, 32>}, {pipeline_mode = #tpu.pipeline_mode<synchronous>, transform_indices = @transform_2, window_bounds = array<i64: 1, 32>}, {pipeline_mode = #tpu.pipeline_mode<synchronous>, transform_indices = @transform_3, window_bounds = array<i64: 4, 32, 8>}, {pipeline_mode = #tpu.pipeline_mode<synchronous>, transform_indices = @transform_4, window_bounds = array<i64: 4, 32, 8>}, {pipeline_mode = #tpu.pipeline_mode<synchronous>, transform_indices = @transform_5, window_bounds = array<i64: 4, 32, 8>}, {pipeline_mode = #tpu.pipeline_mode<synchronous>, transform_indices = @transform_6, window_bounds = array<i64: 4, 1, 8>}, {pipeline_mode = #tpu.pipeline_mode<synchronous>, transform_indices = @transform_7, window_bounds = array<i64: 4, 1, 8>}, {pipeline_mode = #tpu.pipeline_mode<synchronous>, transform_indices = @transform_8, window_bounds = array<i64: 4, 1, 8>}, {pipeline_mode = #tpu.pipeline_mode<synchronous>, transform_indices = @transform_9, window_bounds = array<i64: 4, 8, 32>}, {pipeline_mode = #tpu.pipeline_mode<synchronous>, transform_indices = @transform_10, window_bounds = array<i64: 1, 32>}, {transform_indices = @transform_11, window_bounds = array<i64: 1, 8, 32>}]} {
    %c0 = arith.constant 0 : index
    %c0_0 = arith.constant 0 : index
    %c0_1 = arith.constant 0 : index
    %0 = vector.load %arg1[%c0, %c0_0, %c0_1] : memref<1x8x32xbf16, #tpu.memory_space<vmem>>, vector<1x8x32xbf16>
    %1 = vector.shape_cast %0 : vector<1x8x32xbf16> to vector<8x32xbf16>
    %2 = arith.extf %1 : vector<8x32xbf16> to vector<8x32xf32>
    %c0_2 = arith.constant 0 : index
    %c0_3 = arith.constant 0 : index
    %3 = vector.load %arg2[%c0_2, %c0_3] : memref<1x32xf32, #tpu.memory_space<vmem>>, vector<1x32xf32>
    %c0_4 = arith.constant 0 : index
    %c0_5 = arith.constant 0 : index
    %4 = vector.load %arg3[%c0_4, %c0_5] : memref<1x32xf32, #tpu.memory_space<vmem>>, vector<1x32xf32>
    %cst = arith.constant dense<0.000000e+00> : vector<8xf32>
    %5 = vector.multi_reduction <add>, %2, %cst [1] : vector<8x32xf32> to vector<8xf32>
    %6 = vector.shape_cast %5 : vector<8xf32> to vector<8x1xf32>
    %cst_6 = arith.constant 3.200000e+01 : f32
    %7 = vector.broadcast %cst_6 : f32 to vector<8x1xf32>
    %8 = arith.divf %6, %7 : vector<8x1xf32>
    %9 = vector.broadcast %8 : vector<8x1xf32> to vector<8x32xf32>
    %10 = arith.subf %2, %9 : vector<8x32xf32>
    %11 = arith.mulf %10, %10 : vector<8x32xf32>
    %cst_7 = arith.constant dense<0.000000e+00> : vector<8xf32>
    %12 = vector.multi_reduction <add>, %11, %cst_7 [1] : vector<8x32xf32> to vector<8xf32>
    %13 = vector.shape_cast %12 : vector<8xf32> to vector<8x1xf32>
    %cst_8 = arith.constant 3.200000e+01 : f32
    %14 = vector.broadcast %cst_8 : f32 to vector<8x1xf32>
    %15 = arith.divf %13, %14 : vector<8x1xf32>
    %16 = vector.broadcast %8 : vector<8x1xf32> to vector<8x32xf32>
    %17 = arith.subf %2, %16 : vector<8x32xf32>
    %cst_9 = arith.constant 9.99999974E-6 : f32
    %18 = vector.broadcast %cst_9 : f32 to vector<8x1xf32>
    %19 = arith.addf %15, %18 : vector<8x1xf32>
    %20 = math.rsqrt %19 : vector<8x1xf32>
    %21 = vector.broadcast %20 : vector<8x1xf32> to vector<8x32xf32>
    %22 = arith.mulf %17, %21 : vector<8x32xf32>
    %23 = vector.broadcast %3 : vector<1x32xf32> to vector<8x32xf32>
    %24 = arith.mulf %22, %23 : vector<8x32xf32>
    %25 = vector.broadcast %4 : vector<1x32xf32> to vector<8x32xf32>
    %26 = arith.addf %24, %25 : vector<8x32xf32>
    %27 = arith.truncf %26 : vector<8x32xf32> to vector<8x32xbf16>
    %28 = tpu.iota {dimensions = array<i32: 0>} : vector<8x8xi32>
    %29 = tpu.iota {dimensions = array<i32: 1>} : vector<8x8xi32>
    %30 = arith.cmpi sle, %29, %28 : vector<8x8xi32>
    %cst_10 = arith.constant 0.000000e+00 : f32
    %31 = vector.broadcast %cst_10 : f32 to vector<8x32xf32>
    %c0_11 = arith.constant 0 : index
    %c0_12 = arith.constant 0 : index
    %c0_13 = arith.constant 0 : index
    %32 = vector.load %arg4[%c0_11, %c0_12, %c0_13] : memref<4x32x8xbf16, #tpu.memory_space<vmem>>, vector<1x32x8xbf16>
    %33 = vector.shape_cast %32 : vector<1x32x8xbf16> to vector<32x8xbf16>
    %cst_14 = arith.constant dense<0.000000e+00> : vector<8x8xf32>
    %34 = tpu.matmul %27, %33, %cst_14 {dimension_numbers = #tpu.dot_dimension_numbers<[1], [0], [0], [1], [0, 0, 1, 1], [], []>} : vector<8x32xbf16>, vector<32x8xbf16>, vector<8x8xf32> -> vector<8x8xf32>
    %c0_15 = arith.constant 0 : index
    %c0_16 = arith.constant 0 : index
    %c0_17 = arith.constant 0 : index
    %35 = vector.load %arg7[%c0_15, %c0_16, %c0_17] : memref<4x1x8xf32, #tpu.memory_space<vmem>>, vector<1x1x8xf32>
    %36 = vector.shape_cast %35 : vector<1x1x8xf32> to vector<1x8xf32>
    %37 = vector.broadcast %36 : vector<1x8xf32> to vector<8x8xf32>
    %38 = arith.addf %34, %37 : vector<8x8xf32>
    %c0_18 = arith.constant 0 : index
    %c0_19 = arith.constant 0 : index
    %c0_20 = arith.constant 0 : index
    %39 = vector.load %arg5[%c0_18, %c0_19, %c0_20] : memref<4x32x8xbf16, #tpu.memory_space<vmem>>, vector<1x32x8xbf16>
    %40 = vector.shape_cast %39 : vector<1x32x8xbf16> to vector<32x8xbf16>
    %cst_21 = arith.constant dense<0.000000e+00> : vector<8x8xf32>
    %41 = tpu.matmul %27, %40, %cst_21 {dimension_numbers = #tpu.dot_dimension_numbers<[1], [0], [0], [1], [0, 0, 1, 1], [], []>} : vector<8x32xbf16>, vector<32x8xbf16>, vector<8x8xf32> -> vector<8x8xf32>
    %c0_22 = arith.constant 0 : index
    %c0_23 = arith.constant 0 : index
    %c0_24 = arith.constant 0 : index
    %42 = vector.load %arg8[%c0_22, %c0_23, %c0_24] : memref<4x1x8xf32, #tpu.memory_space<vmem>>, vector<1x1x8xf32>
    %43 = vector.shape_cast %42 : vector<1x1x8xf32> to vector<1x8xf32>
    %44 = vector.broadcast %43 : vector<1x8xf32> to vector<8x8xf32>
    %45 = arith.addf %41, %44 : vector<8x8xf32>
    %c0_25 = arith.constant 0 : index
    %c0_26 = arith.constant 0 : index
    %c0_27 = arith.constant 0 : index
    %46 = vector.load %arg6[%c0_25, %c0_26, %c0_27] : memref<4x32x8xbf16, #tpu.memory_space<vmem>>, vector<1x32x8xbf16>
    %47 = vector.shape_cast %46 : vector<1x32x8xbf16> to vector<32x8xbf16>
    %cst_28 = arith.constant dense<0.000000e+00> : vector<8x8xf32>
    %48 = tpu.matmul %27, %47, %cst_28 {dimension_numbers = #tpu.dot_dimension_numbers<[1], [0], [0], [1], [0, 0, 1, 1], [], []>} : vector<8x32xbf16>, vector<32x8xbf16>, vector<8x8xf32> -> vector<8x8xf32>
    %c0_29 = arith.constant 0 : index
    %c0_30 = arith.constant 0 : index
    %c0_31 = arith.constant 0 : index
    %49 = vector.load %arg9[%c0_29, %c0_30, %c0_31] : memref<4x1x8xf32, #tpu.memory_space<vmem>>, vector<1x1x8xf32>
    %50 = vector.shape_cast %49 : vector<1x1x8xf32> to vector<1x8xf32>
    %51 = vector.broadcast %50 : vector<1x8xf32> to vector<8x8xf32>
    %52 = arith.addf %48, %51 : vector<8x8xf32>
    %53 = arith.truncf %38 : vector<8x8xf32> to vector<8x8xbf16>
    %54 = arith.truncf %45 : vector<8x8xf32> to vector<8x8xbf16>
    %cst_32 = arith.constant dense<0.000000e+00> : vector<8x8xf32>
    %55 = tpu.matmul %53, %54, %cst_32 {dimension_numbers = #tpu.dot_dimension_numbers<[1], [1], [0], [0], [0, 0, 1, 0], [], []>} : vector<8x8xbf16>, vector<8x8xbf16>, vector<8x8xf32> -> vector<8x8xf32>
    %cst_33 = arith.constant 0.353553385 : f32
    %56 = vector.broadcast %cst_33 : f32 to vector<8x8xf32>
    %57 = arith.mulf %55, %56 : vector<8x8xf32>
    %cst_34 = arith.constant -1.000000e+30 : f32
    %58 = vector.broadcast %cst_34 : f32 to vector<8x8xf32>
    %59 = arith.select %30, %57, %58 : vector<8x8xi1>, vector<8x8xf32>
    %cst_35 = arith.constant dense<0xFF800000> : vector<8xf32>
    %60 = vector.multi_reduction <maximumf>, %59, %cst_35 [1] : vector<8x8xf32> to vector<8xf32>
    %61 = vector.shape_cast %60 : vector<8xf32> to vector<8x1xf32>
    %62 = vector.broadcast %61 : vector<8x1xf32> to vector<8x8xf32>
    %63 = arith.subf %59, %62 : vector<8x8xf32>
    %64 = math.exp %63 : vector<8x8xf32>
    %cst_36 = arith.constant dense<0.000000e+00> : vector<8xf32>
    %65 = vector.multi_reduction <add>, %64, %cst_36 [1] : vector<8x8xf32> to vector<8xf32>
    %66 = vector.shape_cast %65 : vector<8xf32> to vector<8x1xf32>
    %67 = tpu.reciprocal %66 {approx = true} : vector<8x1xf32> -> vector<8x1xf32>
    %68 = vector.broadcast %67 : vector<8x1xf32> to vector<8x8xf32>
    %69 = arith.mulf %64, %68 : vector<8x8xf32>
    %70 = arith.truncf %69 : vector<8x8xf32> to vector<8x8xbf16>
    %71 = arith.truncf %52 : vector<8x8xf32> to vector<8x8xbf16>
    %cst_37 = arith.constant dense<0.000000e+00> : vector<8x8xf32>
    %72 = tpu.matmul %70, %71, %cst_37 {dimension_numbers = #tpu.dot_dimension_numbers<[1], [0], [0], [1], [0, 0, 1, 1], [], []>} : vector<8x8xbf16>, vector<8x8xbf16>, vector<8x8xf32> -> vector<8x8xf32>
    %73 = arith.truncf %72 : vector<8x8xf32> to vector<8x8xbf16>
    %c0_38 = arith.constant 0 : index
    %c0_39 = arith.constant 0 : index
    %c0_40 = arith.constant 0 : index
    %74 = vector.load %arg10[%c0_38, %c0_39, %c0_40] : memref<4x8x32xbf16, #tpu.memory_space<vmem>>, vector<1x8x32xbf16>
    %75 = vector.shape_cast %74 : vector<1x8x32xbf16> to vector<8x32xbf16>
    %cst_41 = arith.constant dense<0.000000e+00> : vector<8x32xf32>
    %76 = tpu.matmul %73, %75, %cst_41 {dimension_numbers = #tpu.dot_dimension_numbers<[1], [0], [0], [1], [0, 0, 1, 1], [], []>} : vector<8x8xbf16>, vector<8x32xbf16>, vector<8x32xf32> -> vector<8x32xf32>
    %77 = arith.addf %31, %76 : vector<8x32xf32>
    %c1 = arith.constant 1 : index
    %c0_42 = arith.constant 0 : index
    %c0_43 = arith.constant 0 : index
    %78 = vector.load %arg4[%c1, %c0_42, %c0_43] : memref<4x32x8xbf16, #tpu.memory_space<vmem>>, vector<1x32x8xbf16>
    %79 = vector.shape_cast %78 : vector<1x32x8xbf16> to vector<32x8xbf16>
    %cst_44 = arith.constant dense<0.000000e+00> : vector<8x8xf32>
    %80 = tpu.matmul %27, %79, %cst_44 {dimension_numbers = #tpu.dot_dimension_numbers<[1], [0], [0], [1], [0, 0, 1, 1], [], []>} : vector<8x32xbf16>, vector<32x8xbf16>, vector<8x8xf32> -> vector<8x8xf32>
    %c1_45 = arith.constant 1 : index
    %c0_46 = arith.constant 0 : index
    %c0_47 = arith.constant 0 : index
    %81 = vector.load %arg7[%c1_45, %c0_46, %c0_47] : memref<4x1x8xf32, #tpu.memory_space<vmem>>, vector<1x1x8xf32>
    %82 = vector.shape_cast %81 : vector<1x1x8xf32> to vector<1x8xf32>
    %83 = vector.broadcast %82 : vector<1x8xf32> to vector<8x8xf32>
    %84 = arith.addf %80, %83 : vector<8x8xf32>
    %c1_48 = arith.constant 1 : index
    %c0_49 = arith.constant 0 : index
    %c0_50 = arith.constant 0 : index
    %85 = vector.load %arg5[%c1_48, %c0_49, %c0_50] : memref<4x32x8xbf16, #tpu.memory_space<vmem>>, vector<1x32x8xbf16>
    %86 = vector.shape_cast %85 : vector<1x32x8xbf16> to vector<32x8xbf16>
    %cst_51 = arith.constant dense<0.000000e+00> : vector<8x8xf32>
    %87 = tpu.matmul %27, %86, %cst_51 {dimension_numbers = #tpu.dot_dimension_numbers<[1], [0], [0], [1], [0, 0, 1, 1], [], []>} : vector<8x32xbf16>, vector<32x8xbf16>, vector<8x8xf32> -> vector<8x8xf32>
    %c1_52 = arith.constant 1 : index
    %c0_53 = arith.constant 0 : index
    %c0_54 = arith.constant 0 : index
    %88 = vector.load %arg8[%c1_52, %c0_53, %c0_54] : memref<4x1x8xf32, #tpu.memory_space<vmem>>, vector<1x1x8xf32>
    %89 = vector.shape_cast %88 : vector<1x1x8xf32> to vector<1x8xf32>
    %90 = vector.broadcast %89 : vector<1x8xf32> to vector<8x8xf32>
    %91 = arith.addf %87, %90 : vector<8x8xf32>
    %c1_55 = arith.constant 1 : index
    %c0_56 = arith.constant 0 : index
    %c0_57 = arith.constant 0 : index
    %92 = vector.load %arg6[%c1_55, %c0_56, %c0_57] : memref<4x32x8xbf16, #tpu.memory_space<vmem>>, vector<1x32x8xbf16>
    %93 = vector.shape_cast %92 : vector<1x32x8xbf16> to vector<32x8xbf16>
    %cst_58 = arith.constant dense<0.000000e+00> : vector<8x8xf32>
    %94 = tpu.matmul %27, %93, %cst_58 {dimension_numbers = #tpu.dot_dimension_numbers<[1], [0], [0], [1], [0, 0, 1, 1], [], []>} : vector<8x32xbf16>, vector<32x8xbf16>, vector<8x8xf32> -> vector<8x8xf32>
    %c1_59 = arith.constant 1 : index
    %c0_60 = arith.constant 0 : index
    %c0_61 = arith.constant 0 : index
    %95 = vector.load %arg9[%c1_59, %c0_60, %c0_61] : memref<4x1x8xf32, #tpu.memory_space<vmem>>, vector<1x1x8xf32>
    %96 = vector.shape_cast %95 : vector<1x1x8xf32> to vector<1x8xf32>
    %97 = vector.broadcast %96 : vector<1x8xf32> to vector<8x8xf32>
    %98 = arith.addf %94, %97 : vector<8x8xf32>
    %99 = arith.truncf %84 : vector<8x8xf32> to vector<8x8xbf16>
    %100 = arith.truncf %91 : vector<8x8xf32> to vector<8x8xbf16>
    %cst_62 = arith.constant dense<0.000000e+00> : vector<8x8xf32>
    %101 = tpu.matmul %99, %100, %cst_62 {dimension_numbers = #tpu.dot_dimension_numbers<[1], [1], [0], [0], [0, 0, 1, 0], [], []>} : vector<8x8xbf16>, vector<8x8xbf16>, vector<8x8xf32> -> vector<8x8xf32>
    %cst_63 = arith.constant 0.353553385 : f32
    %102 = vector.broadcast %cst_63 : f32 to vector<8x8xf32>
    %103 = arith.mulf %101, %102 : vector<8x8xf32>
    %cst_64 = arith.constant -1.000000e+30 : f32
    %104 = vector.broadcast %cst_64 : f32 to vector<8x8xf32>
    %105 = arith.select %30, %103, %104 : vector<8x8xi1>, vector<8x8xf32>
    %cst_65 = arith.constant dense<0xFF800000> : vector<8xf32>
    %106 = vector.multi_reduction <maximumf>, %105, %cst_65 [1] : vector<8x8xf32> to vector<8xf32>
    %107 = vector.shape_cast %106 : vector<8xf32> to vector<8x1xf32>
    %108 = vector.broadcast %107 : vector<8x1xf32> to vector<8x8xf32>
    %109 = arith.subf %105, %108 : vector<8x8xf32>
    %110 = math.exp %109 : vector<8x8xf32>
    %cst_66 = arith.constant dense<0.000000e+00> : vector<8xf32>
    %111 = vector.multi_reduction <add>, %110, %cst_66 [1] : vector<8x8xf32> to vector<8xf32>
    %112 = vector.shape_cast %111 : vector<8xf32> to vector<8x1xf32>
    %113 = tpu.reciprocal %112 {approx = true} : vector<8x1xf32> -> vector<8x1xf32>
    %114 = vector.broadcast %113 : vector<8x1xf32> to vector<8x8xf32>
    %115 = arith.mulf %110, %114 : vector<8x8xf32>
    %116 = arith.truncf %115 : vector<8x8xf32> to vector<8x8xbf16>
    %117 = arith.truncf %98 : vector<8x8xf32> to vector<8x8xbf16>
    %cst_67 = arith.constant dense<0.000000e+00> : vector<8x8xf32>
    %118 = tpu.matmul %116, %117, %cst_67 {dimension_numbers = #tpu.dot_dimension_numbers<[1], [0], [0], [1], [0, 0, 1, 1], [], []>} : vector<8x8xbf16>, vector<8x8xbf16>, vector<8x8xf32> -> vector<8x8xf32>
    %119 = arith.truncf %118 : vector<8x8xf32> to vector<8x8xbf16>
    %c1_68 = arith.constant 1 : index
    %c0_69 = arith.constant 0 : index
    %c0_70 = arith.constant 0 : index
    %120 = vector.load %arg10[%c1_68, %c0_69, %c0_70] : memref<4x8x32xbf16, #tpu.memory_space<vmem>>, vector<1x8x32xbf16>
    %121 = vector.shape_cast %120 : vector<1x8x32xbf16> to vector<8x32xbf16>
    %cst_71 = arith.constant dense<0.000000e+00> : vector<8x32xf32>
    %122 = tpu.matmul %119, %121, %cst_71 {dimension_numbers = #tpu.dot_dimension_numbers<[1], [0], [0], [1], [0, 0, 1, 1], [], []>} : vector<8x8xbf16>, vector<8x32xbf16>, vector<8x32xf32> -> vector<8x32xf32>
    %123 = arith.addf %77, %122 : vector<8x32xf32>
    %c2 = arith.constant 2 : index
    %c0_72 = arith.constant 0 : index
    %c0_73 = arith.constant 0 : index
    %124 = vector.load %arg4[%c2, %c0_72, %c0_73] : memref<4x32x8xbf16, #tpu.memory_space<vmem>>, vector<1x32x8xbf16>
    %125 = vector.shape_cast %124 : vector<1x32x8xbf16> to vector<32x8xbf16>
    %cst_74 = arith.constant dense<0.000000e+00> : vector<8x8xf32>
    %126 = tpu.matmul %27, %125, %cst_74 {dimension_numbers = #tpu.dot_dimension_numbers<[1], [0], [0], [1], [0, 0, 1, 1], [], []>} : vector<8x32xbf16>, vector<32x8xbf16>, vector<8x8xf32> -> vector<8x8xf32>
    %c2_75 = arith.constant 2 : index
    %c0_76 = arith.constant 0 : index
    %c0_77 = arith.constant 0 : index
    %127 = vector.load %arg7[%c2_75, %c0_76, %c0_77] : memref<4x1x8xf32, #tpu.memory_space<vmem>>, vector<1x1x8xf32>
    %128 = vector.shape_cast %127 : vector<1x1x8xf32> to vector<1x8xf32>
    %129 = vector.broadcast %128 : vector<1x8xf32> to vector<8x8xf32>
    %130 = arith.addf %126, %129 : vector<8x8xf32>
    %c2_78 = arith.constant 2 : index
    %c0_79 = arith.constant 0 : index
    %c0_80 = arith.constant 0 : index
    %131 = vector.load %arg5[%c2_78, %c0_79, %c0_80] : memref<4x32x8xbf16, #tpu.memory_space<vmem>>, vector<1x32x8xbf16>
    %132 = vector.shape_cast %131 : vector<1x32x8xbf16> to vector<32x8xbf16>
    %cst_81 = arith.constant dense<0.000000e+00> : vector<8x8xf32>
    %133 = tpu.matmul %27, %132, %cst_81 {dimension_numbers = #tpu.dot_dimension_numbers<[1], [0], [0], [1], [0, 0, 1, 1], [], []>} : vector<8x32xbf16>, vector<32x8xbf16>, vector<8x8xf32> -> vector<8x8xf32>
    %c2_82 = arith.constant 2 : index
    %c0_83 = arith.constant 0 : index
    %c0_84 = arith.constant 0 : index
    %134 = vector.load %arg8[%c2_82, %c0_83, %c0_84] : memref<4x1x8xf32, #tpu.memory_space<vmem>>, vector<1x1x8xf32>
    %135 = vector.shape_cast %134 : vector<1x1x8xf32> to vector<1x8xf32>
    %136 = vector.broadcast %135 : vector<1x8xf32> to vector<8x8xf32>
    %137 = arith.addf %133, %136 : vector<8x8xf32>
    %c2_85 = arith.constant 2 : index
    %c0_86 = arith.constant 0 : index
    %c0_87 = arith.constant 0 : index
    %138 = vector.load %arg6[%c2_85, %c0_86, %c0_87] : memref<4x32x8xbf16, #tpu.memory_space<vmem>>, vector<1x32x8xbf16>
    %139 = vector.shape_cast %138 : vector<1x32x8xbf16> to vector<32x8xbf16>
    %cst_88 = arith.constant dense<0.000000e+00> : vector<8x8xf32>
    %140 = tpu.matmul %27, %139, %cst_88 {dimension_numbers = #tpu.dot_dimension_numbers<[1], [0], [0], [1], [0, 0, 1, 1], [], []>} : vector<8x32xbf16>, vector<32x8xbf16>, vector<8x8xf32> -> vector<8x8xf32>
    %c2_89 = arith.constant 2 : index
    %c0_90 = arith.constant 0 : index
    %c0_91 = arith.constant 0 : index
    %141 = vector.load %arg9[%c2_89, %c0_90, %c0_91] : memref<4x1x8xf32, #tpu.memory_space<vmem>>, vector<1x1x8xf32>
    %142 = vector.shape_cast %141 : vector<1x1x8xf32> to vector<1x8xf32>
    %143 = vector.broadcast %142 : vector<1x8xf32> to vector<8x8xf32>
    %144 = arith.addf %140, %143 : vector<8x8xf32>
    %145 = arith.truncf %130 : vector<8x8xf32> to vector<8x8xbf16>
    %146 = arith.truncf %137 : vector<8x8xf32> to vector<8x8xbf16>
    %cst_92 = arith.constant dense<0.000000e+00> : vector<8x8xf32>
    %147 = tpu.matmul %145, %146, %cst_92 {dimension_numbers = #tpu.dot_dimension_numbers<[1], [1], [0], [0], [0, 0, 1, 0], [], []>} : vector<8x8xbf16>, vector<8x8xbf16>, vector<8x8xf32> -> vector<8x8xf32>
    %cst_93 = arith.constant 0.353553385 : f32
    %148 = vector.broadcast %cst_93 : f32 to vector<8x8xf32>
    %149 = arith.mulf %147, %148 : vector<8x8xf32>
    %cst_94 = arith.constant -1.000000e+30 : f32
    %150 = vector.broadcast %cst_94 : f32 to vector<8x8xf32>
    %151 = arith.select %30, %149, %150 : vector<8x8xi1>, vector<8x8xf32>
    %cst_95 = arith.constant dense<0xFF800000> : vector<8xf32>
    %152 = vector.multi_reduction <maximumf>, %151, %cst_95 [1] : vector<8x8xf32> to vector<8xf32>
    %153 = vector.shape_cast %152 : vector<8xf32> to vector<8x1xf32>
    %154 = vector.broadcast %153 : vector<8x1xf32> to vector<8x8xf32>
    %155 = arith.subf %151, %154 : vector<8x8xf32>
    %156 = math.exp %155 : vector<8x8xf32>
    %cst_96 = arith.constant dense<0.000000e+00> : vector<8xf32>
    %157 = vector.multi_reduction <add>, %156, %cst_96 [1] : vector<8x8xf32> to vector<8xf32>
    %158 = vector.shape_cast %157 : vector<8xf32> to vector<8x1xf32>
    %159 = tpu.reciprocal %158 {approx = true} : vector<8x1xf32> -> vector<8x1xf32>
    %160 = vector.broadcast %159 : vector<8x1xf32> to vector<8x8xf32>
    %161 = arith.mulf %156, %160 : vector<8x8xf32>
    %162 = arith.truncf %161 : vector<8x8xf32> to vector<8x8xbf16>
    %163 = arith.truncf %144 : vector<8x8xf32> to vector<8x8xbf16>
    %cst_97 = arith.constant dense<0.000000e+00> : vector<8x8xf32>
    %164 = tpu.matmul %162, %163, %cst_97 {dimension_numbers = #tpu.dot_dimension_numbers<[1], [0], [0], [1], [0, 0, 1, 1], [], []>} : vector<8x8xbf16>, vector<8x8xbf16>, vector<8x8xf32> -> vector<8x8xf32>
    %165 = arith.truncf %164 : vector<8x8xf32> to vector<8x8xbf16>
    %c2_98 = arith.constant 2 : index
    %c0_99 = arith.constant 0 : index
    %c0_100 = arith.constant 0 : index
    %166 = vector.load %arg10[%c2_98, %c0_99, %c0_100] : memref<4x8x32xbf16, #tpu.memory_space<vmem>>, vector<1x8x32xbf16>
    %167 = vector.shape_cast %166 : vector<1x8x32xbf16> to vector<8x32xbf16>
    %cst_101 = arith.constant dense<0.000000e+00> : vector<8x32xf32>
    %168 = tpu.matmul %165, %167, %cst_101 {dimension_numbers = #tpu.dot_dimension_numbers<[1], [0], [0], [1], [0, 0, 1, 1], [], []>} : vector<8x8xbf16>, vector<8x32xbf16>, vector<8x32xf32> -> vector<8x32xf32>
    %169 = arith.addf %123, %168 : vector<8x32xf32>
    %c3 = arith.constant 3 : index
    %c0_102 = arith.constant 0 : index
    %c0_103 = arith.constant 0 : index
    %170 = vector.load %arg4[%c3, %c0_102, %c0_103] : memref<4x32x8xbf16, #tpu.memory_space<vmem>>, vector<1x32x8xbf16>
    %171 = vector.shape_cast %170 : vector<1x32x8xbf16> to vector<32x8xbf16>
    %cst_104 = arith.constant dense<0.000000e+00> : vector<8x8xf32>
    %172 = tpu.matmul %27, %171, %cst_104 {dimension_numbers = #tpu.dot_dimension_numbers<[1], [0], [0], [1], [0, 0, 1, 1], [], []>} : vector<8x32xbf16>, vector<32x8xbf16>, vector<8x8xf32> -> vector<8x8xf32>
    %c3_105 = arith.constant 3 : index
    %c0_106 = arith.constant 0 : index
    %c0_107 = arith.constant 0 : index
    %173 = vector.load %arg7[%c3_105, %c0_106, %c0_107] : memref<4x1x8xf32, #tpu.memory_space<vmem>>, vector<1x1x8xf32>
    %174 = vector.shape_cast %173 : vector<1x1x8xf32> to vector<1x8xf32>
    %175 = vector.broadcast %174 : vector<1x8xf32> to vector<8x8xf32>
    %176 = arith.addf %172, %175 : vector<8x8xf32>
    %c3_108 = arith.constant 3 : index
    %c0_109 = arith.constant 0 : index
    %c0_110 = arith.constant 0 : index
    %177 = vector.load %arg5[%c3_108, %c0_109, %c0_110] : memref<4x32x8xbf16, #tpu.memory_space<vmem>>, vector<1x32x8xbf16>
    %178 = vector.shape_cast %177 : vector<1x32x8xbf16> to vector<32x8xbf16>
    %cst_111 = arith.constant dense<0.000000e+00> : vector<8x8xf32>
    %179 = tpu.matmul %27, %178, %cst_111 {dimension_numbers = #tpu.dot_dimension_numbers<[1], [0], [0], [1], [0, 0, 1, 1], [], []>} : vector<8x32xbf16>, vector<32x8xbf16>, vector<8x8xf32> -> vector<8x8xf32>
    %c3_112 = arith.constant 3 : index
    %c0_113 = arith.constant 0 : index
    %c0_114 = arith.constant 0 : index
    %180 = vector.load %arg8[%c3_112, %c0_113, %c0_114] : memref<4x1x8xf32, #tpu.memory_space<vmem>>, vector<1x1x8xf32>
    %181 = vector.shape_cast %180 : vector<1x1x8xf32> to vector<1x8xf32>
    %182 = vector.broadcast %181 : vector<1x8xf32> to vector<8x8xf32>
    %183 = arith.addf %179, %182 : vector<8x8xf32>
    %c3_115 = arith.constant 3 : index
    %c0_116 = arith.constant 0 : index
    %c0_117 = arith.constant 0 : index
    %184 = vector.load %arg6[%c3_115, %c0_116, %c0_117] : memref<4x32x8xbf16, #tpu.memory_space<vmem>>, vector<1x32x8xbf16>
    %185 = vector.shape_cast %184 : vector<1x32x8xbf16> to vector<32x8xbf16>
    %cst_118 = arith.constant dense<0.000000e+00> : vector<8x8xf32>
    %186 = tpu.matmul %27, %185, %cst_118 {dimension_numbers = #tpu.dot_dimension_numbers<[1], [0], [0], [1], [0, 0, 1, 1], [], []>} : vector<8x32xbf16>, vector<32x8xbf16>, vector<8x8xf32> -> vector<8x8xf32>
    %c3_119 = arith.constant 3 : index
    %c0_120 = arith.constant 0 : index
    %c0_121 = arith.constant 0 : index
    %187 = vector.load %arg9[%c3_119, %c0_120, %c0_121] : memref<4x1x8xf32, #tpu.memory_space<vmem>>, vector<1x1x8xf32>
    %188 = vector.shape_cast %187 : vector<1x1x8xf32> to vector<1x8xf32>
    %189 = vector.broadcast %188 : vector<1x8xf32> to vector<8x8xf32>
    %190 = arith.addf %186, %189 : vector<8x8xf32>
    %191 = arith.truncf %176 : vector<8x8xf32> to vector<8x8xbf16>
    %192 = arith.truncf %183 : vector<8x8xf32> to vector<8x8xbf16>
    %cst_122 = arith.constant dense<0.000000e+00> : vector<8x8xf32>
    %193 = tpu.matmul %191, %192, %cst_122 {dimension_numbers = #tpu.dot_dimension_numbers<[1], [1], [0], [0], [0, 0, 1, 0], [], []>} : vector<8x8xbf16>, vector<8x8xbf16>, vector<8x8xf32> -> vector<8x8xf32>
    %cst_123 = arith.constant 0.353553385 : f32
    %194 = vector.broadcast %cst_123 : f32 to vector<8x8xf32>
    %195 = arith.mulf %193, %194 : vector<8x8xf32>
    %cst_124 = arith.constant -1.000000e+30 : f32
    %196 = vector.broadcast %cst_124 : f32 to vector<8x8xf32>
    %197 = arith.select %30, %195, %196 : vector<8x8xi1>, vector<8x8xf32>
    %cst_125 = arith.constant dense<0xFF800000> : vector<8xf32>
    %198 = vector.multi_reduction <maximumf>, %197, %cst_125 [1] : vector<8x8xf32> to vector<8xf32>
    %199 = vector.shape_cast %198 : vector<8xf32> to vector<8x1xf32>
    %200 = vector.broadcast %199 : vector<8x1xf32> to vector<8x8xf32>
    %201 = arith.subf %197, %200 : vector<8x8xf32>
    %202 = math.exp %201 : vector<8x8xf32>
    %cst_126 = arith.constant dense<0.000000e+00> : vector<8xf32>
    %203 = vector.multi_reduction <add>, %202, %cst_126 [1] : vector<8x8xf32> to vector<8xf32>
    %204 = vector.shape_cast %203 : vector<8xf32> to vector<8x1xf32>
    %205 = tpu.reciprocal %204 {approx = true} : vector<8x1xf32> -> vector<8x1xf32>
    %206 = vector.broadcast %205 : vector<8x1xf32> to vector<8x8xf32>
    %207 = arith.mulf %202, %206 : vector<8x8xf32>
    %208 = arith.truncf %207 : vector<8x8xf32> to vector<8x8xbf16>
    %209 = arith.truncf %190 : vector<8x8xf32> to vector<8x8xbf16>
    %cst_127 = arith.constant dense<0.000000e+00> : vector<8x8xf32>
    %210 = tpu.matmul %208, %209, %cst_127 {dimension_numbers = #tpu.dot_dimension_numbers<[1], [0], [0], [1], [0, 0, 1, 1], [], []>} : vector<8x8xbf16>, vector<8x8xbf16>, vector<8x8xf32> -> vector<8x8xf32>
    %211 = arith.truncf %210 : vector<8x8xf32> to vector<8x8xbf16>
    %c3_128 = arith.constant 3 : index
    %c0_129 = arith.constant 0 : index
    %c0_130 = arith.constant 0 : index
    %212 = vector.load %arg10[%c3_128, %c0_129, %c0_130] : memref<4x8x32xbf16, #tpu.memory_space<vmem>>, vector<1x8x32xbf16>
    %213 = vector.shape_cast %212 : vector<1x8x32xbf16> to vector<8x32xbf16>
    %cst_131 = arith.constant dense<0.000000e+00> : vector<8x32xf32>
    %214 = tpu.matmul %211, %213, %cst_131 {dimension_numbers = #tpu.dot_dimension_numbers<[1], [0], [0], [1], [0, 0, 1, 1], [], []>} : vector<8x8xbf16>, vector<8x32xbf16>, vector<8x32xf32> -> vector<8x32xf32>
    %215 = arith.addf %169, %214 : vector<8x32xf32>
    %216 = arith.addf %2, %215 : vector<8x32xf32>
    %c0_132 = arith.constant 0 : index
    %c0_133 = arith.constant 0 : index
    %217 = vector.load %arg11[%c0_132, %c0_133] : memref<1x32xf32, #tpu.memory_space<vmem>>, vector<1x32xf32>
    %218 = vector.broadcast %217 : vector<1x32xf32> to vector<8x32xf32>
    %219 = arith.addf %216, %218 : vector<8x32xf32>
    %220 = arith.truncf %219 : vector<8x32xf32> to vector<8x32xbf16>
    %c0_134 = arith.constant 0 : index
    %c0_135 = arith.constant 0 : index
    %c0_136 = arith.constant 0 : index
    %221 = vector.load %arg12[%c0_134, %c0_135, %c0_136] : memref<1x8x32xbf16, #tpu.memory_space<vmem>>, vector<1x8x32xbf16>
    %222 = vector.shape_cast %221 : vector<1x8x32xbf16> to vector<8x32xbf16>
    %223 = vector.shape_cast %220 : vector<8x32xbf16> to vector<1x8x32xbf16>
    tpu.vector_store %arg12[%c0_134, %c0_135, %c0_136], %223 {strides = array<i32>} : memref<1x8x32xbf16, #tpu.memory_space<vmem>>, vector<1x8x32xbf16>,
    return
  }
  func.func @transform_0(%arg0: i32) -> (i32, i32, i32) {
    %c0_i32 = arith.constant 0 : i32
    %c0_i32_0 = arith.constant 0 : i32
    %c0_i32_1 = arith.constant 0 : i32
    return %arg0, %c0_i32, %c0_i32_0 : i32, i32, i32
  }
  func.func @transform_1(%arg0: i32) -> (i32, i32) {
    %c0_i32 = arith.constant 0 : i32
    %c0_i32_0 = arith.constant 0 : i32
    %c0_i32_1 = arith.constant 0 : i32
    return %c0_i32, %c0_i32_0 : i32, i32
  }
  func.func @transform_2(%arg0: i32) -> (i32, i32) {
    %c0_i32 = arith.constant 0 : i32
    %c0_i32_0 = arith.constant 0 : i32
    %c0_i32_1 = arith.constant 0 : i32
    return %c0_i32, %c0_i32_0 : i32, i32
  }
  func.func @transform_3(%arg0: i32) -> (i32, i32, i32) {
    %c0_i32 = arith.constant 0 : i32
    %c0_i32_0 = arith.constant 0 : i32
    %c0_i32_1 = arith.constant 0 : i32
    %c0_i32_2 = arith.constant 0 : i32
    return %c0_i32, %c0_i32_0, %c0_i32_1 : i32, i32, i32
  }
  func.func @transform_4(%arg0: i32) -> (i32, i32, i32) {
    %c0_i32 = arith.constant 0 : i32
    %c0_i32_0 = arith.constant 0 : i32
    %c0_i32_1 = arith.constant 0 : i32
    %c0_i32_2 = arith.constant 0 : i32
    return %c0_i32, %c0_i32_0, %c0_i32_1 : i32, i32, i32
  }
  func.func @transform_5(%arg0: i32) -> (i32, i32, i32) {
    %c0_i32 = arith.constant 0 : i32
    %c0_i32_0 = arith.constant 0 : i32
    %c0_i32_1 = arith.constant 0 : i32
    %c0_i32_2 = arith.constant 0 : i32
    return %c0_i32, %c0_i32_0, %c0_i32_1 : i32, i32, i32
  }
  func.func @transform_6(%arg0: i32) -> (i32, i32, i32) {
    %c0_i32 = arith.constant 0 : i32
    %c0_i32_0 = arith.constant 0 : i32
    %c0_i32_1 = arith.constant 0 : i32
    %c0_i32_2 = arith.constant 0 : i32
    return %c0_i32, %c0_i32_0, %c0_i32_1 : i32, i32, i32
  }
  func.func @transform_7(%arg0: i32) -> (i32, i32, i32) {
    %c0_i32 = arith.constant 0 : i32
    %c0_i32_0 = arith.constant 0 : i32
    %c0_i32_1 = arith.constant 0 : i32
    %c0_i32_2 = arith.constant 0 : i32
    return %c0_i32, %c0_i32_0, %c0_i32_1 : i32, i32, i32
  }
  func.func @transform_8(%arg0: i32) -> (i32, i32, i32) {
    %c0_i32 = arith.constant 0 : i32
    %c0_i32_0 = arith.constant 0 : i32
    %c0_i32_1 = arith.constant 0 : i32
    %c0_i32_2 = arith.constant 0 : i32
    return %c0_i32, %c0_i32_0, %c0_i32_1 : i32, i32, i32
  }
  func.func @transform_9(%arg0: i32) -> (i32, i32, i32) {
    %c0_i32 = arith.constant 0 : i32
    %c0_i32_0 = arith.constant 0 : i32
    %c0_i32_1 = arith.constant 0 : i32
    %c0_i32_2 = arith.constant 0 : i32
    return %c0_i32, %c0_i32_0, %c0_i32_1 : i32, i32, i32
  }
  func.func @transform_10(%arg0: i32) -> (i32, i32) {
    %c0_i32 = arith.constant 0 : i32
    %c0_i32_0 = arith.constant 0 : i32
    %c0_i32_1 = arith.constant 0 : i32
    return %c0_i32, %c0_i32_0 : i32, i32
  }
  func.func @transform_11(%arg0: i32) -> (i32, i32, i32) {
    %c0_i32 = arith.constant 0 : i32
    %c0_i32_0 = arith.constant 0 : i32
    %c0_i32_1 = arith.constant 0 : i32
    return %arg0, %c0_i32, %c0_i32_0 : i32, i32, i32
  }
}

module attributes {stable_mosaic.version = 11 : i64} {
  func.func @_mlp_kernel(%arg0: i32, %arg1: i32, %arg2: memref<8x32xbf16, #tpu.memory_space<vmem>>, %arg3: memref<1x32xf32, #tpu.memory_space<vmem>>, %arg4: memref<1x32xf32, #tpu.memory_space<vmem>>, %arg5: memref<32x128xbf16, #tpu.memory_space<vmem>>, %arg6: memref<1x128xf32, #tpu.memory_space<vmem>>, %arg7: memref<128x32xbf16, #tpu.memory_space<vmem>>, %arg8: memref<1x32xf32, #tpu.memory_space<vmem>>, %arg9: memref<8x32xbf16, #tpu.memory_space<vmem>>, %arg10: memref<8x32xbf16, #tpu.memory_space<vmem>>, %arg11: memref<8x32xf32, #tpu.memory_space<vmem>>) attributes {dimension_semantics = [#tpu.dimension_semantics<parallel>, #tpu.dimension_semantics<arbitrary>], iteration_bounds = array<i64: 2, 1>, scalar_prefetch = 0 : i64, scratch_operands = 2 : i64, tpu.core_type = #tpu.core_type<tc>, window_params = [{transform_indices = @transform_0, window_bounds = array<i64: 8, 32>}, {pipeline_mode = #tpu.pipeline_mode<synchronous>, transform_indices = @transform_1, window_bounds = array<i64: 1, 32>}, {pipeline_mode = #tpu.pipeline_mode<synchronous>, transform_indices = @transform_2, window_bounds = array<i64: 1, 32>}, {transform_indices = @transform_3, window_bounds = array<i64: 32, 128>}, {transform_indices = @transform_4, window_bounds = array<i64: 1, 128>}, {transform_indices = @transform_5, window_bounds = array<i64: 128, 32>}, {pipeline_mode = #tpu.pipeline_mode<synchronous>, transform_indices = @transform_6, window_bounds = array<i64: 1, 32>}, {transform_indices = @transform_7, window_bounds = array<i64: 8, 32>}]} {
    %c0_i32 = arith.constant 0 : i32
    %0 = arith.cmpi eq, %arg1, %c0_i32 : i32
    %1 = arith.extui %0 : i1 to i32
    %c0_i32_0 = arith.constant 0 : i32
    %2 = arith.cmpi ne, %1, %c0_i32_0 : i32
    scf.if %2 {
      %c0_29 = arith.constant 0 : index
      %c0_30 = arith.constant 0 : index
      %57 = vector.load %arg2[%c0_29, %c0_30] : memref<8x32xbf16, #tpu.memory_space<vmem>>, vector<8x32xbf16>
      %58 = arith.extf %57 : vector<8x32xbf16> to vector<8x32xf32>
      %c0_31 = arith.constant 0 : index
      %c0_32 = arith.constant 0 : index
      %59 = vector.load %arg3[%c0_31, %c0_32] : memref<1x32xf32, #tpu.memory_space<vmem>>, vector<1x32xf32>
      %c0_33 = arith.constant 0 : index
      %c0_34 = arith.constant 0 : index
      %60 = vector.load %arg4[%c0_33, %c0_34] : memref<1x32xf32, #tpu.memory_space<vmem>>, vector<1x32xf32>
      %cst_35 = arith.constant dense<0.000000e+00> : vector<8xf32>
      %61 = vector.multi_reduction <add>, %58, %cst_35 [1] : vector<8x32xf32> to vector<8xf32>
      %62 = vector.shape_cast %61 : vector<8xf32> to vector<8x1xf32>
      %cst_36 = arith.constant 3.200000e+01 : f32
      %63 = vector.broadcast %cst_36 : f32 to vector<8x1xf32>
      %64 = arith.divf %62, %63 : vector<8x1xf32>
      %65 = vector.broadcast %64 : vector<8x1xf32> to vector<8x32xf32>
      %66 = arith.subf %58, %65 : vector<8x32xf32>
      %67 = arith.mulf %66, %66 : vector<8x32xf32>
      %cst_37 = arith.constant dense<0.000000e+00> : vector<8xf32>
      %68 = vector.multi_reduction <add>, %67, %cst_37 [1] : vector<8x32xf32> to vector<8xf32>
      %69 = vector.shape_cast %68 : vector<8xf32> to vector<8x1xf32>
      %cst_38 = arith.constant 3.200000e+01 : f32
      %70 = vector.broadcast %cst_38 : f32 to vector<8x1xf32>
      %71 = arith.divf %69, %70 : vector<8x1xf32>
      %72 = vector.broadcast %64 : vector<8x1xf32> to vector<8x32xf32>
      %73 = arith.subf %58, %72 : vector<8x32xf32>
      %cst_39 = arith.constant 9.99999974E-6 : f32
      %74 = vector.broadcast %cst_39 : f32 to vector<8x1xf32>
      %75 = arith.addf %71, %74 : vector<8x1xf32>
      %76 = math.rsqrt %75 : vector<8x1xf32>
      %77 = vector.broadcast %76 : vector<8x1xf32> to vector<8x32xf32>
      %78 = arith.mulf %73, %77 : vector<8x32xf32>
      %79 = vector.broadcast %59 : vector<1x32xf32> to vector<8x32xf32>
      %80 = arith.mulf %78, %79 : vector<8x32xf32>
      %81 = vector.broadcast %60 : vector<1x32xf32> to vector<8x32xf32>
      %82 = arith.addf %80, %81 : vector<8x32xf32>
      %83 = arith.truncf %82 : vector<8x32xf32> to vector<8x32xbf16>
      %c0_40 = arith.constant 0 : index
      %c0_41 = arith.constant 0 : index
      %84 = vector.load %arg10[%c0_40, %c0_41] : memref<8x32xbf16, #tpu.memory_space<vmem>>, vector<8x32xbf16>
      tpu.vector_store %arg10[%c0_40, %c0_41], %83 {strides = array<i32>} : memref<8x32xbf16, #tpu.memory_space<vmem>>, vector<8x32xbf16>,
      %cst_42 = arith.constant 0.000000e+00 : f32
      %85 = vector.broadcast %cst_42 : f32 to vector<8x32xf32>
      %c0_43 = arith.constant 0 : index
      %c0_44 = arith.constant 0 : index
      %86 = vector.load %arg11[%c0_43, %c0_44] : memref<8x32xf32, #tpu.memory_space<vmem>>, vector<8x32xf32>
      tpu.vector_store %arg11[%c0_43, %c0_44], %85 {strides = array<i32>} : memref<8x32xf32, #tpu.memory_space<vmem>>, vector<8x32xf32>,
    } else {
    }
    %c0 = arith.constant 0 : index
    %c0_1 = arith.constant 0 : index
    %3 = vector.load %arg10[%c0, %c0_1] : memref<8x32xbf16, #tpu.memory_space<vmem>>, vector<8x32xbf16>
    %c0_2 = arith.constant 0 : index
    %c0_3 = arith.constant 0 : index
    %4 = vector.load %arg5[%c0_2, %c0_3] : memref<32x128xbf16, #tpu.memory_space<vmem>>, vector<32x128xbf16>
    %cst = arith.constant dense<0.000000e+00> : vector<8x128xf32>
    %5 = tpu.matmul %3, %4, %cst {dimension_numbers = #tpu.dot_dimension_numbers<[1], [0], [0], [1], [0, 0, 1, 1], [], []>} : vector<8x32xbf16>, vector<32x128xbf16>, vector<8x128xf32> -> vector<8x128xf32>
    %c0_4 = arith.constant 0 : index
    %c0_5 = arith.constant 0 : index
    %6 = vector.load %arg6[%c0_4, %c0_5] : memref<1x128xf32, #tpu.memory_space<vmem>>, vector<1x128xf32>
    %7 = vector.broadcast %6 : vector<1x128xf32> to vector<8x128xf32>
    %8 = arith.addf %5, %7 : vector<8x128xf32>
    %cst_6 = arith.constant 0.707106769 : f32
    %9 = vector.broadcast %cst_6 : f32 to vector<8x128xf32>
    %10 = arith.mulf %8, %9 : vector<8x128xf32>
    %11 = math.absf %10 : vector<8x128xf32>
    %cst_7 = arith.constant 0.327591091 : f32
    %12 = vector.broadcast %cst_7 : f32 to vector<8x128xf32>
    %13 = arith.mulf %12, %11 : vector<8x128xf32>
    %cst_8 = arith.constant 1.000000e+00 : f32
    %14 = vector.broadcast %cst_8 : f32 to vector<8x128xf32>
    %15 = arith.addf %14, %13 : vector<8x128xf32>
    %16 = tpu.reciprocal %15 {approx = true} : vector<8x128xf32> -> vector<8x128xf32>
    %cst_9 = arith.constant 1.06140542 : f32
    %17 = vector.broadcast %cst_9 : f32 to vector<8x128xf32>
    %18 = arith.mulf %16, %17 : vector<8x128xf32>
    %cst_10 = arith.constant -1.45315206 : f32
    %19 = vector.broadcast %cst_10 : f32 to vector<8x128xf32>
    %20 = arith.addf %19, %18 : vector<8x128xf32>
    %21 = arith.mulf %16, %20 : vector<8x128xf32>
    %cst_11 = arith.constant 1.42141378 : f32
    %22 = vector.broadcast %cst_11 : f32 to vector<8x128xf32>
    %23 = arith.addf %22, %21 : vector<8x128xf32>
    %24 = arith.mulf %16, %23 : vector<8x128xf32>
    %cst_12 = arith.constant -0.284496725 : f32
    %25 = vector.broadcast %cst_12 : f32 to vector<8x128xf32>
    %26 = arith.addf %25, %24 : vector<8x128xf32>
    %27 = arith.mulf %16, %26 : vector<8x128xf32>
    %cst_13 = arith.constant 0.254829586 : f32
    %28 = vector.broadcast %cst_13 : f32 to vector<8x128xf32>
    %29 = arith.addf %28, %27 : vector<8x128xf32>
    %30 = arith.mulf %16, %29 : vector<8x128xf32>
    %cst_14 = arith.constant 0.000000e+00 : f32
    %31 = vector.broadcast %cst_14 : f32 to vector<8x128xf32>
    %32 = arith.subf %31, %11 : vector<8x128xf32>
    %33 = arith.mulf %32, %11 : vector<8x128xf32>
    %34 = math.exp %33 : vector<8x128xf32>
    %35 = arith.mulf %30, %34 : vector<8x128xf32>
    %cst_15 = arith.constant 1.000000e+00 : f32
    %36 = vector.broadcast %cst_15 : f32 to vector<8x128xf32>
    %37 = arith.subf %36, %35 : vector<8x128xf32>
    %cst_16 = arith.constant 0.000000e+00 : f32
    %38 = vector.broadcast %cst_16 : f32 to vector<8x128xf32>
    %39 = arith.cmpf olt, %10, %38 : vector<8x128xf32>
    %cst_17 = arith.constant 0.000000e+00 : f32
    %40 = vector.broadcast %cst_17 : f32 to vector<8x128xf32>
    %41 = arith.subf %40, %37 : vector<8x128xf32>
    %42 = arith.select %39, %41, %37 : vector<8x128xi1>, vector<8x128xf32>
    %cst_18 = arith.constant 5.000000e-01 : f32
    %43 = vector.broadcast %cst_18 : f32 to vector<8x128xf32>
    %44 = arith.mulf %43, %8 : vector<8x128xf32>
    %cst_19 = arith.constant 1.000000e+00 : f32
    %45 = vector.broadcast %cst_19 : f32 to vector<8x128xf32>
    %46 = arith.addf %45, %42 : vector<8x128xf32>
    %47 = arith.mulf %44, %46 : vector<8x128xf32>
    %c0_20 = arith.constant 0 : index
    %c0_21 = arith.constant 0 : index
    %48 = vector.load %arg11[%c0_20, %c0_21] : memref<8x32xf32, #tpu.memory_space<vmem>>, vector<8x32xf32>
    %49 = arith.truncf %47 : vector<8x128xf32> to vector<8x128xbf16>
    %c0_22 = arith.constant 0 : index
    %c0_23 = arith.constant 0 : index
    %50 = vector.load %arg7[%c0_22, %c0_23] : memref<128x32xbf16, #tpu.memory_space<vmem>>, vector<128x32xbf16>
    %cst_24 = arith.constant dense<0.000000e+00> : vector<8x32xf32>
    %51 = tpu.matmul %49, %50, %cst_24 {dimension_numbers = #tpu.dot_dimension_numbers<[1], [0], [0], [1], [0, 0, 1, 1], [], []>} : vector<8x128xbf16>, vector<128x32xbf16>, vector<8x32xf32> -> vector<8x32xf32>
    %52 = arith.addf %48, %51 : vector<8x32xf32>
    %c0_25 = arith.constant 0 : index
    %c0_26 = arith.constant 0 : index
    %53 = vector.load %arg11[%c0_25, %c0_26] : memref<8x32xf32, #tpu.memory_space<vmem>>, vector<8x32xf32>
    tpu.vector_store %arg11[%c0_25, %c0_26], %52 {strides = array<i32>} : memref<8x32xf32, #tpu.memory_space<vmem>>, vector<8x32xf32>,
    %c0_i32_27 = arith.constant 0 : i32
    %54 = arith.cmpi eq, %arg1, %c0_i32_27 : i32
    %55 = arith.extui %54 : i1 to i32
    %c0_i32_28 = arith.constant 0 : i32
    %56 = arith.cmpi ne, %55, %c0_i32_28 : i32
    scf.if %56 {
      %c0_29 = arith.constant 0 : index
      %c0_30 = arith.constant 0 : index
      %57 = vector.load %arg11[%c0_29, %c0_30] : memref<8x32xf32, #tpu.memory_space<vmem>>, vector<8x32xf32>
      %c0_31 = arith.constant 0 : index
      %c0_32 = arith.constant 0 : index
      %58 = vector.load %arg8[%c0_31, %c0_32] : memref<1x32xf32, #tpu.memory_space<vmem>>, vector<1x32xf32>
      %59 = vector.broadcast %58 : vector<1x32xf32> to vector<8x32xf32>
      %60 = arith.addf %57, %59 : vector<8x32xf32>
      %c0_33 = arith.constant 0 : index
      %c0_34 = arith.constant 0 : index
      %61 = vector.load %arg2[%c0_33, %c0_34] : memref<8x32xbf16, #tpu.memory_space<vmem>>, vector<8x32xbf16>
      %62 = arith.extf %61 : vector<8x32xbf16> to vector<8x32xf32>
      %63 = arith.addf %60, %62 : vector<8x32xf32>
      %64 = arith.truncf %63 : vector<8x32xf32> to vector<8x32xbf16>
      %c0_35 = arith.constant 0 : index
      %c0_36 = arith.constant 0 : index
      %65 = vector.load %arg9[%c0_35, %c0_36] : memref<8x32xbf16, #tpu.memory_space<vmem>>, vector<8x32xbf16>
      tpu.vector_store %arg9[%c0_35, %c0_36], %64 {strides = array<i32>} : memref<8x32xbf16, #tpu.memory_space<vmem>>, vector<8x32xbf16>,
    } else {
    }
    return
  }
  func.func @transform_0(%arg0: i32, %arg1: i32) -> (i32, i32) {
    %c0_i32 = arith.constant 0 : i32
    %c0_i32_0 = arith.constant 0 : i32
    return %arg0, %c0_i32 : i32, i32
  }
  func.func @transform_1(%arg0: i32, %arg1: i32) -> (i32, i32) {
    %c0_i32 = arith.constant 0 : i32
    %c0_i32_0 = arith.constant 0 : i32
    %c0_i32_1 = arith.constant 0 : i32
    return %c0_i32, %c0_i32_0 : i32, i32
  }
  func.func @transform_2(%arg0: i32, %arg1: i32) -> (i32, i32) {
    %c0_i32 = arith.constant 0 : i32
    %c0_i32_0 = arith.constant 0 : i32
    %c0_i32_1 = arith.constant 0 : i32
    return %c0_i32, %c0_i32_0 : i32, i32
  }
  func.func @transform_3(%arg0: i32, %arg1: i32) -> (i32, i32) {
    %c0_i32 = arith.constant 0 : i32
    %c0_i32_0 = arith.constant 0 : i32
    return %c0_i32, %arg1 : i32, i32
  }
  func.func @transform_4(%arg0: i32, %arg1: i32) -> (i32, i32) {
    %c0_i32 = arith.constant 0 : i32
    %c0_i32_0 = arith.constant 0 : i32
    return %c0_i32, %arg1 : i32, i32
  }
  func.func @transform_5(%arg0: i32, %arg1: i32) -> (i32, i32) {
    %c0_i32 = arith.constant 0 : i32
    %c0_i32_0 = arith.constant 0 : i32
    return %arg1, %c0_i32 : i32, i32
  }
  func.func @transform_6(%arg0: i32, %arg1: i32) -> (i32, i32) {
    %c0_i32 = arith.constant 0 : i32
    %c0_i32_0 = arith.constant 0 : i32
    %c0_i32_1 = arith.constant 0 : i32
    return %c0_i32, %c0_i32_0 : i32, i32
  }
  func.func @transform_7(%arg0: i32, %arg1: i32) -> (i32, i32) {
    %c0_i32 = arith.constant 0 : i32
    %c0_i32_0 = arith.constant 0 : i32
    return %arg0, %c0_i32 : i32, i32
  }
}

module attributes {stable_mosaic.version = 11 : i64} {
  func.func @_ln_matmul_kernel(%arg0: i32, %arg1: i32, %arg2: memref<8x32xbf16, #tpu.memory_space<vmem>>, %arg3: memref<1x32xf32, #tpu.memory_space<vmem>>, %arg4: memref<1x32xf32, #tpu.memory_space<vmem>>, %arg5: memref<32x128xbf16, #tpu.memory_space<vmem>>, %arg6: memref<8x128xf32, #tpu.memory_space<vmem>>, %arg7: memref<8x32xbf16, #tpu.memory_space<vmem>>) attributes {dimension_semantics = [#tpu.dimension_semantics<parallel>, #tpu.dimension_semantics<arbitrary>], iteration_bounds = array<i64: 2, 1>, scalar_prefetch = 0 : i64, scratch_operands = 1 : i64, tpu.core_type = #tpu.core_type<tc>, window_params = [{transform_indices = @transform_0, window_bounds = array<i64: 8, 32>}, {pipeline_mode = #tpu.pipeline_mode<synchronous>, transform_indices = @transform_1, window_bounds = array<i64: 1, 32>}, {pipeline_mode = #tpu.pipeline_mode<synchronous>, transform_indices = @transform_2, window_bounds = array<i64: 1, 32>}, {transform_indices = @transform_3, window_bounds = array<i64: 32, 128>}, {transform_indices = @transform_4, window_bounds = array<i64: 8, 128>}]} {
    %c0_i32 = arith.constant 0 : i32
    %0 = arith.cmpi eq, %arg1, %c0_i32 : i32
    %1 = arith.extui %0 : i1 to i32
    %c0_i32_0 = arith.constant 0 : i32
    %2 = arith.cmpi ne, %1, %c0_i32_0 : i32
    scf.if %2 {
      %c0_6 = arith.constant 0 : index
      %c0_7 = arith.constant 0 : index
      %7 = vector.load %arg2[%c0_6, %c0_7] : memref<8x32xbf16, #tpu.memory_space<vmem>>, vector<8x32xbf16>
      %8 = arith.extf %7 : vector<8x32xbf16> to vector<8x32xf32>
      %c0_8 = arith.constant 0 : index
      %c0_9 = arith.constant 0 : index
      %9 = vector.load %arg3[%c0_8, %c0_9] : memref<1x32xf32, #tpu.memory_space<vmem>>, vector<1x32xf32>
      %c0_10 = arith.constant 0 : index
      %c0_11 = arith.constant 0 : index
      %10 = vector.load %arg4[%c0_10, %c0_11] : memref<1x32xf32, #tpu.memory_space<vmem>>, vector<1x32xf32>
      %cst_12 = arith.constant dense<0.000000e+00> : vector<8xf32>
      %11 = vector.multi_reduction <add>, %8, %cst_12 [1] : vector<8x32xf32> to vector<8xf32>
      %12 = vector.shape_cast %11 : vector<8xf32> to vector<8x1xf32>
      %cst_13 = arith.constant 3.200000e+01 : f32
      %13 = vector.broadcast %cst_13 : f32 to vector<8x1xf32>
      %14 = arith.divf %12, %13 : vector<8x1xf32>
      %15 = vector.broadcast %14 : vector<8x1xf32> to vector<8x32xf32>
      %16 = arith.subf %8, %15 : vector<8x32xf32>
      %17 = arith.mulf %16, %16 : vector<8x32xf32>
      %cst_14 = arith.constant dense<0.000000e+00> : vector<8xf32>
      %18 = vector.multi_reduction <add>, %17, %cst_14 [1] : vector<8x32xf32> to vector<8xf32>
      %19 = vector.shape_cast %18 : vector<8xf32> to vector<8x1xf32>
      %cst_15 = arith.constant 3.200000e+01 : f32
      %20 = vector.broadcast %cst_15 : f32 to vector<8x1xf32>
      %21 = arith.divf %19, %20 : vector<8x1xf32>
      %22 = vector.broadcast %14 : vector<8x1xf32> to vector<8x32xf32>
      %23 = arith.subf %8, %22 : vector<8x32xf32>
      %cst_16 = arith.constant 9.99999974E-6 : f32
      %24 = vector.broadcast %cst_16 : f32 to vector<8x1xf32>
      %25 = arith.addf %21, %24 : vector<8x1xf32>
      %26 = math.rsqrt %25 : vector<8x1xf32>
      %27 = vector.broadcast %26 : vector<8x1xf32> to vector<8x32xf32>
      %28 = arith.mulf %23, %27 : vector<8x32xf32>
      %29 = vector.broadcast %9 : vector<1x32xf32> to vector<8x32xf32>
      %30 = arith.mulf %28, %29 : vector<8x32xf32>
      %31 = vector.broadcast %10 : vector<1x32xf32> to vector<8x32xf32>
      %32 = arith.addf %30, %31 : vector<8x32xf32>
      %33 = arith.truncf %32 : vector<8x32xf32> to vector<8x32xbf16>
      %c0_17 = arith.constant 0 : index
      %c0_18 = arith.constant 0 : index
      %34 = vector.load %arg7[%c0_17, %c0_18] : memref<8x32xbf16, #tpu.memory_space<vmem>>, vector<8x32xbf16>
      tpu.vector_store %arg7[%c0_17, %c0_18], %33 {strides = array<i32>} : memref<8x32xbf16, #tpu.memory_space<vmem>>, vector<8x32xbf16>,
    } else {
    }
    %c0 = arith.constant 0 : index
    %c0_1 = arith.constant 0 : index
    %3 = vector.load %arg7[%c0, %c0_1] : memref<8x32xbf16, #tpu.memory_space<vmem>>, vector<8x32xbf16>
    %c0_2 = arith.constant 0 : index
    %c0_3 = arith.constant 0 : index
    %4 = vector.load %arg5[%c0_2, %c0_3] : memref<32x128xbf16, #tpu.memory_space<vmem>>, vector<32x128xbf16>
    %cst = arith.constant dense<0.000000e+00> : vector<8x128xf32>
    %5 = tpu.matmul %3, %4, %cst {dimension_numbers = #tpu.dot_dimension_numbers<[1], [0], [0], [1], [0, 0, 1, 1], [], []>} : vector<8x32xbf16>, vector<32x128xbf16>, vector<8x128xf32> -> vector<8x128xf32>
    %c0_4 = arith.constant 0 : index
    %c0_5 = arith.constant 0 : index
    %6 = vector.load %arg6[%c0_4, %c0_5] : memref<8x128xf32, #tpu.memory_space<vmem>>, vector<8x128xf32>
    tpu.vector_store %arg6[%c0_4, %c0_5], %5 {strides = array<i32>} : memref<8x128xf32, #tpu.memory_space<vmem>>, vector<8x128xf32>,
    return
  }
  func.func @transform_0(%arg0: i32, %arg1: i32) -> (i32, i32) {
    %c0_i32 = arith.constant 0 : i32
    %c0_i32_0 = arith.constant 0 : i32
    return %arg0, %c0_i32 : i32, i32
  }
  func.func @transform_1(%arg0: i32, %arg1: i32) -> (i32, i32) {
    %c0_i32 = arith.constant 0 : i32
    %c0_i32_0 = arith.constant 0 : i32
    %c0_i32_1 = arith.constant 0 : i32
    return %c0_i32, %c0_i32_0 : i32, i32
  }
  func.func @transform_2(%arg0: i32, %arg1: i32) -> (i32, i32) {
    %c0_i32 = arith.constant 0 : i32
    %c0_i32_0 = arith.constant 0 : i32
    %c0_i32_1 = arith.constant 0 : i32
    return %c0_i32, %c0_i32_0 : i32, i32
  }
  func.func @transform_3(%arg0: i32, %arg1: i32) -> (i32, i32) {
    %c0_i32 = arith.constant 0 : i32
    %c0_i32_0 = arith.constant 0 : i32
    return %c0_i32, %arg1 : i32, i32
  }
  func.func @transform_4(%arg0: i32, %arg1: i32) -> (i32, i32) {
    %c0_i32 = arith.constant 0 : i32
    return %arg0, %arg1 : i32, i32
  }
}

</mosaic_0001>

<llo_original>
// kernel: _lambda_.7
$region0: #{_lambda_.7}
  #allocation0 [shape = 'u32[]', space=smem, size = 0x4, offset = 0x4, fixed_abs, tag = 'smem constant byte address 0x4 - core index']
  #allocation1 [shape = 'u32[72,128]{1,0:T(1,128)}', space=vmem, size = 0x9000, scoped, tag = 'internal scratch']
  #allocation2 [shape = 'f32[14,32]{1,0:T(8,128)}', space=vmem, size = 0x2000, scoped, tag = 'scratch operand']
  %s0 = inlined_call_operand.vmem [shape: f32[14,4], index: 0, kind: input, shape index: {}]
  %s1 = inlined_call_operand.vmem [shape: bf16[4,32], index: 1, kind: input, shape index: {}]
  %s2 = inlined_call_operand.vmem [shape: f32[14,32], index: 2, kind: output, shape index: {}]
  %s3 = sld [smem:[#allocation0]]
  $region26: #{_lambda_.7} parent=0
    _
  %s5 = ssub.s32 1, %s3
  %s6 = scalar_select 0, %s5, %s3
  // Predicated region
  $region2: #{_lambda_.7} parent=0 // pred_check
    _
  $region3: #{_lambda_.7} parent=0 // pred_check_branch
    %8 = sbr.rel (0) target = $region5
  $region4: #{_lambda_.7} parent=0 // pred_region
    _
  $region5: #{_lambda_.7} parent=0 // pred_fallthru
    _
  // Predicated region
  $region6: #{_lambda_.7} parent=0 // pred_check
    _
  $region7: #{_lambda_.7} parent=0 // pred_check_branch
    %10 = sbr.rel (0) target = $region9
  $region8: #{_lambda_.7} parent=0 // pred_region
    _
  $region9: #{_lambda_.7} parent=0 // pred_fallthru
    _
  %p12 = scmp.eq.s32.totalorder 0, 0
  // Predicated region
  $region10: #{_lambda_.7} parent=0 // pred_check
    %p13 = pneg %p12
  $region11: #{_lambda_.7} parent=0 // pred_check_branch
    %15 = sbr.rel (%p13) target = $region13
  $region12: #{_lambda_.7} parent=0 // pred_region
    %vm16 = vcmask 261120
    %17 = vst.msk [vmem:[#allocation2] sm:$0xff] %vm16, 0.0
    %vm18 = vcmask 259072
    %19 = vst.msk [vmem:[#allocation2 + $0x8] sm:$0x3f] %vm18, 0.0
  $region13: #{_lambda_.7} parent=0 // pred_fallthru
    _
  %v20 = vld [vmem:[#allocation2] sm:$0xff]
  %v21 = vld [vmem:[#allocation2 + $0x8] sm:$0x3f]
  %v22 = vld [vmem:[%s0] sm:$0xff]
  %v23 = vld [vmem:[%s0 + $0x8] sm:$0x3f]
  %v24 = vpack.c.bf16 %v23, %v22
  %v25 = vld [vmem:[%s1] sm:$0x3]
  %vm26 = vcmask 31744
  %v28 = vsel %vm26, %v24, 0
  %vm30 = vcmask 1041408
  %v32 = vsel %vm30, %v25, 0
  %34 = vmatpush.bf16.msra.mxu0 0
  %35 = vmatpush.bf16.msra.mxu0 0
  %36 = vmatpush.bf16.msra.mxu0 0
  %37 = vmatpush.bf16.msra.mxu0 0
  %38 = vmatpush.bf16.msra.mxu0 0
  %39 = vmatpush.bf16.msra.mxu0 0
  %40 = vmatpush.bf16.msra.mxu0 0
  %41 = vmatpush.bf16.msra.mxu0 %v32
  %42 = vmatmul.bf16.gmra.mxu0 %v28
  %v43 = vpop.f32.mrf.mxu0
  %v44 = vadd.f32 0.0, %v43
  %v45 = vpop.f32.mrf.mxu0
  %v46 = vadd.f32 0.0, %v45
  %47 = vdwg.mxu0
  %v48 = vadd.f32 %v20, %v44
  %v49 = vadd.f32 %v21, %v46
  %vm50 = vcmask 261120
  %51 = vst.msk [vmem:[#allocation2] sm:$0xff] %vm50, %v48
  %vm52 = vcmask 259072
  %53 = vst.msk [vmem:[#allocation2 + $0x8] sm:$0x3f] %vm52, %v49
  // Predicated region
  $region14: #{_lambda_.7} parent=0 // pred_check
    %p54 = pneg %p12
  $region15: #{_lambda_.7} parent=0 // pred_check_branch
    %56 = sbr.rel (%p54) target = $region17
  $region16: #{_lambda_.7} parent=0 // pred_region
    %v57 = vld [vmem:[#allocation2] sm:$0xff]
    %v58 = vld [vmem:[#allocation2 + $0x8] sm:$0x3f]
    %59 = vst.msk [vmem:[%s2] sm:$0xff] %vm50, %v57
    %60 = vst.msk [vmem:[%s2 + $0x8] sm:$0x3f] %vm52, %v58
  $region17: #{_lambda_.7} parent=0 // pred_fallthru
    _
  // Predicated region
  $region18: #{_lambda_.7} parent=0 // pred_check
    _
  $region19: #{_lambda_.7} parent=0 // pred_check_branch
    %62 = sbr.rel (0) target = $region21
  $region20: #{_lambda_.7} parent=0 // pred_region
    _
  $region21: #{_lambda_.7} parent=0 // pred_fallthru
    _
  // Predicated region
  $region22: #{_lambda_.7} parent=0 // pred_check
    _
  $region23: #{_lambda_.7} parent=0 // pred_check_branch
    %64 = sbr.rel (0) target = $region25
  $region24: #{_lambda_.7} parent=0 // pred_region
    _
  $region25: #{_lambda_.7} parent=0 // pred_fallthru
    _

// kernel: _lambda_.8
$region0: #{_lambda_.8}
  #allocation0 [shape = 'u32[]', space=smem, size = 0x4, offset = 0x4, fixed_abs, tag = 'smem constant byte address 0x4 - core index']
  #allocation1 [shape = 'u32[72,128]{1,0:T(1,128)}', space=vmem, size = 0x9000, scoped, tag = 'internal scratch']
  #allocation2 [shape = 'f32[2,32]{1,0:T(2,128)}', space=vmem, size = 0x400, scoped, tag = 'scratch operand']
  %s0 = inlined_call_operand.vmem [shape: f32[2,3], index: 0, kind: input, shape index: {}]
  %s1 = inlined_call_operand.vmem [shape: bf16[3,32], index: 1, kind: input, shape index: {}]
  %s2 = inlined_call_operand.vmem [shape: f32[1,32], index: 2, kind: input, shape index: {}]
  %s3 = inlined_call_operand.vmem [shape: f32[2,32], index: 3, kind: output, shape index: {}]
  %s4 = sld [smem:[#allocation0]]
  $region30: #{_lambda_.8} parent=0
    _
  %s6 = ssub.s32 1, %s4
  %s7 = scalar_select 0, %s6, %s4
  // Predicated region
  $region2: #{_lambda_.8} parent=0 // pred_check
    _
  $region3: #{_lambda_.8} parent=0 // pred_check_branch
    %9 = sbr.rel (0) target = $region5
  $region4: #{_lambda_.8} parent=0 // pred_region
    _
  $region5: #{_lambda_.8} parent=0 // pred_fallthru
    _
  // Predicated region
  $region6: #{_lambda_.8} parent=0 // pred_check
    _
  $region7: #{_lambda_.8} parent=0 // pred_check_branch
    %11 = sbr.rel (0) target = $region9
  $region8: #{_lambda_.8} parent=0 // pred_region
    _
  $region9: #{_lambda_.8} parent=0 // pred_fallthru
    _
  // Predicated region
  $region10: #{_lambda_.8} parent=0 // pred_check
    _
  $region11: #{_lambda_.8} parent=0 // pred_check_branch
    %13 = sbr.rel (0) target = $region13
  $region12: #{_lambda_.8} parent=0 // pred_region
    _
  $region13: #{_lambda_.8} parent=0 // pred_fallthru
    _
  %p15 = scmp.eq.s32.totalorder 0, 0
  // Predicated region
  $region14: #{_lambda_.8} parent=0 // pred_check
    %p16 = pneg %p15
  $region15: #{_lambda_.8} parent=0 // pred_check_branch
    %18 = sbr.rel (%p16) target = $region17
  $region16: #{_lambda_.8} parent=0 // pred_region
    %vm19 = vcmask 254976
    %20 = vst.msk [vmem:[#allocation2] sm:$0x3] %vm19, 0.0
  $region17: #{_lambda_.8} parent=0 // pred_fallthru
    _
  %v21 = vld [vmem:[#allocation2] sm:$0x3]
  %v22 = vld [vmem:[%s0] sm:$0x3]
  %v23 = vpack.c.bf16 %v22, %v22
  %v24 = vld [vmem:[%s1] sm:$0x3]
  %vm25 = vcmask 23552
  %v27 = vsel %vm25, %v23, 0
  %vm29 = vcmask 1040384
  %vm30 = vcmask 1041408
  %v31 = vsel %vm29, 4294967295, 65535
  %v32 = vsel %vm30, %v31, 0
  %v34 = vand.u32 %v24, %v32
  %36 = vmatpush.bf16.msra.mxu0 0
  %37 = vmatpush.bf16.msra.mxu0 0
  %38 = vmatpush.bf16.msra.mxu0 0
  %39 = vmatpush.bf16.msra.mxu0 0
  %40 = vmatpush.bf16.msra.mxu0 0
  %41 = vmatpush.bf16.msra.mxu0 0
  %42 = vmatpush.bf16.msra.mxu0 0
  %43 = vmatpush.bf16.msra.mxu0 %v34
  %44 = vmatmul.bf16.gmra.mxu0 %v27
  %v45 = vpop.f32.mrf.mxu0
  %v46 = vadd.f32 0.0, %v45
  %v47 = vpop.f32.mrf.mxu0
  %48 = vdwg.mxu0
  %v49 = vadd.f32 %v21, %v46
  %vm50 = vcmask 254976
  %51 = vst.msk [vmem:[#allocation2] sm:$0x3] %vm50, %v49
  // Predicated region
  $region18: #{_lambda_.8} parent=0 // pred_check
    %p52 = pneg %p15
  $region19: #{_lambda_.8} parent=0 // pred_check_branch
    %54 = sbr.rel (%p52) target = $region21
  $region20: #{_lambda_.8} parent=0 // pred_region
    %v55 = vld [vmem:[#allocation2] sm:$0x3]
    %v56 = vld [vmem:[%s2] sm:$0x1]
    %v58 = vperm.slane %v56, 0
    %v60 = vadd.f32 %v55, %v58
    %61 = vst.msk [vmem:[%s3] sm:$0x3] %vm50, %v60
  $region21: #{_lambda_.8} parent=0 // pred_fallthru
    _
  // Predicated region
  $region22: #{_lambda_.8} parent=0 // pred_check
    _
  $region23: #{_lambda_.8} parent=0 // pred_check_branch
    %63 = sbr.rel (0) target = $region25
  $region24: #{_lambda_.8} parent=0 // pred_region
    _
  $region25: #{_lambda_.8} parent=0 // pred_fallthru
    _
  // Predicated region
  $region26: #{_lambda_.8} parent=0 // pred_check
    _
  $region27: #{_lambda_.8} parent=0 // pred_check_branch
    %65 = sbr.rel (0) target = $region29
  $region28: #{_lambda_.8} parent=0 // pred_region
    _
  $region29: #{_lambda_.8} parent=0 // pred_fallthru
    _

// kernel: _lambda_.10
$region0: #{_lambda_.10}
  #allocation0 [shape = 'u32[]', space=smem, size = 0x4, offset = 0x4, fixed_abs, tag = 'smem constant byte address 0x4 - core index']
  #allocation1 [shape = 'u32[72,128]{1,0:T(1,128)}', space=vmem, size = 0x9000, scoped, tag = 'internal scratch']
  #allocation2 [shape = 'bf16[8,32]{1,0:T(8,128)(2,1)}', space=vmem, size = 0x800, scoped, tag = 'scratch operand']
  #allocation3 [shape = 'f32[8,32]{1,0:T(8,128)}', space=vmem, size = 0x1000, scoped, tag = 'scratch operand']
  %s0 = inlined_call_operand.vmem [shape: bf16[16,32], index: 0, kind: input, shape index: {}]
  %s1 = inlined_call_operand.vmem [shape: f32[1,32], index: 1, kind: input, shape index: {}]
  %s2 = inlined_call_operand.vmem [shape: f32[1,32], index: 2, kind: input, shape index: {}]
  %s3 = inlined_call_operand.vmem [shape: bf16[32,128], index: 3, kind: input, shape index: {}]
  %s4 = inlined_call_operand.vmem [shape: f32[1,128], index: 4, kind: input, shape index: {}]
  %s5 = inlined_call_operand.vmem [shape: bf16[128,32], index: 5, kind: input, shape index: {}]
  %s6 = inlined_call_operand.vmem [shape: f32[1,32], index: 6, kind: input, shape index: {}]
  %s7 = inlined_call_operand.vmem [shape: bf16[16,32], index: 7, kind: output, shape index: {}]
  %s8 = sld [smem:[#allocation0]]
  $region69: #{_lambda_.10} parent=0
    _
  %s10 = ssub.s32 1, %s8
  %s11 = scalar_select 0, %s10, %s8
  loop: start=0, step=1, limit=4
  $region2: #{_lambda_.10} parent=0 // loop_pre_header
    _
  $region3: #{_lambda_.10} parent=0 // loop_header
    %s13 = sphi 0, %s17
    %p14 = scmp.ge.s32.totalorder %s13, 4
    %s20 = sphi 0, %s32
    %s21 = sphi 0, %s28
    %s22 = sphi 0, %s20
    %s23 = sphi 0, %s21
    %s24 = sphi 0, %s22
    %s25 = sphi 0, %s23
    %s35 = sphi 0, %s37
    %s38 = sphi 0, %s35
    %s39 = sphi 0, %s38
    %s55 = sphi 0, %s39
    %s59 = sphi 0, %s59
    %s61 = sphi 0, %s59
    %s62 = sphi 0, %s61
    %s76 = sphi 0, %s62
    %s80 = sphi 0, %s80
    %s82 = sphi 0, %s80
    %s83 = sphi 0, %s82
    %s97 = sphi 0, %s83
    %s103 = sphi 0, %s105
    %s106 = sphi 0, %s103
    %s107 = sphi 0, %s106
    %s123 = sphi 0, %s107
    %s129 = sphi 0, %s131
    %s132 = sphi 0, %s129
    %s133 = sphi 0, %s132
    %s149 = sphi 0, %s133
    %s155 = sphi 0, %s157
    %s158 = sphi 0, %s155
    %s159 = sphi 0, %s158
    %s175 = sphi 0, %s159
    %s179 = sphi 0, %s179
    %s181 = sphi 0, %s179
    %s182 = sphi 0, %s181
    %s196 = sphi 0, %s182
    %s202 = sphi 0, %s204
    %s205 = sphi 0, %s202
    %s206 = sphi 0, %s205
    %s222 = sphi 0, %s206
  $region4: #{_lambda_.10} parent=0 // loop_header_branch
    %16 = sbr.rel (%p14) target = $region8
  $region5: #{_lambda_.10} parent=0 // loop_body
    %s18 = ssub.s32 %s13, 1
    %s19 = ssub.s32 %s13, 2
    %s26 = sadd.s32 1, %s21
    %p27 = scmp.ge.s32.totalorder %s26, 1
    %s28 = scalar_select %p27, 0, %s26
    %s29 = sadd.s32 1, %s20
    %s30 = scalar_select %p27, %s29, %s20
    %p31 = scmp.ge.s32.totalorder %s30, 2
    %s32 = scalar_select %p31, 0, %s30
    %s33 = ssub.s32 %s20, %s32
    %p34 = scmp.eq.s32.totalorder %s33, 0
    %s36 = sadd.s32 %s35, 1
    %s37 = scalar_select %p34, %s35, %s36
    %p40 = pneg %p34
    %p41 = scmp.eq.s32.totalorder %s13, 1
    %p42 = por %p40, %p41
    %p43 = scmp.ne.s32.totalorder %s35, %s38
    %p44 = scmp.eq.s32.totalorder %s13, 0
    %p45 = por %p43, %p44
    %p46 = scmp.ne.s32.totalorder %s35, %s38
    %p47 = scmp.eq.s32.totalorder %s18, 1
    %p48 = por %p46, %p47
    %p49 = scmp.ne.s32.totalorder %s38, %s39
    %p50 = scmp.eq.s32.totalorder %s18, 0
    %p51 = por %p49, %p50
    %p52 = scmp.ne.s32.totalorder %s38, %s39
    %p53 = scmp.eq.s32.totalorder %s19, 1
    %p54 = por %p52, %p53
    %p56 = scmp.ne.s32.totalorder %s39, %s55
    %p57 = scmp.eq.s32.totalorder %s19, 0
    %p58 = por %p56, %p57
    %s60 = sadd.s32 %s59, 1
    %p63 = scmp.eq.s32.totalorder %s13, 1
    %p64 = scmp.ne.s32.totalorder %s59, %s61
    %p65 = scmp.eq.s32.totalorder %s13, 0
    %p66 = por %p64, %p65
    %p67 = scmp.ne.s32.totalorder %s59, %s61
    %p68 = scmp.eq.s32.totalorder %s18, 1
    %p69 = por %p67, %p68
    %p70 = scmp.ne.s32.totalorder %s61, %s62
    %p71 = scmp.eq.s32.totalorder %s18, 0
    %p72 = por %p70, %p71
    %p73 = scmp.ne.s32.totalorder %s61, %s62
    %p74 = scmp.eq.s32.totalorder %s19, 1
    %p75 = por %p73, %p74
    %p77 = scmp.ne.s32.totalorder %s62, %s76
    %p78 = scmp.eq.s32.totalorder %s19, 0
    %p79 = por %p77, %p78
    %s81 = sadd.s32 %s80, 1
    %p84 = scmp.eq.s32.totalorder %s13, 1
    %p85 = scmp.ne.s32.totalorder %s80, %s82
    %p86 = scmp.eq.s32.totalorder %s13, 0
    %p87 = por %p85, %p86
    %p88 = scmp.ne.s32.totalorder %s80, %s82
    %p89 = scmp.eq.s32.totalorder %s18, 1
    %p90 = por %p88, %p89
    %p91 = scmp.ne.s32.totalorder %s82, %s83
    %p92 = scmp.eq.s32.totalorder %s18, 0
    %p93 = por %p91, %p92
    %p94 = scmp.ne.s32.totalorder %s82, %s83
    %p95 = scmp.eq.s32.totalorder %s19, 1
    %p96 = por %p94, %p95
    %p98 = scmp.ne.s32.totalorder %s83, %s97
    %p99 = scmp.eq.s32.totalorder %s19, 0
    %p100 = por %p98, %p99
    %s101 = ssub.s32 %s21, %s28
    %p102 = scmp.eq.s32.totalorder %s101, 0
    %s104 = sadd.s32 %s103, 1
    %s105 = scalar_select %p102, %s103, %s104
    %p108 = pneg %p102
    %p109 = scmp.eq.s32.totalorder %s13, 1
    %p110 = por %p108, %p109
    %p111 = scmp.ne.s32.totalorder %s103, %s106
    %p112 = scmp.eq.s32.totalorder %s13, 0
    %p113 = por %p111, %p112
    %p114 = scmp.ne.s32.totalorder %s103, %s106
    %p115 = scmp.eq.s32.totalorder %s18, 1
    %p116 = por %p114, %p115
    %p117 = scmp.ne.s32.totalorder %s106, %s107
    %p118 = scmp.eq.s32.totalorder %s18, 0
    %p119 = por %p117, %p118
    %p120 = scmp.ne.s32.totalorder %s106, %s107
    %p121 = scmp.eq.s32.totalorder %s19, 1
    %p122 = por %p120, %p121
    %p124 = scmp.ne.s32.totalorder %s107, %s123
    %p125 = scmp.eq.s32.totalorder %s19, 0
    %p126 = por %p124, %p125
    %s127 = ssub.s32 %s21, %s28
    %p128 = scmp.eq.s32.totalorder %s127, 0
    %s130 = sadd.s32 %s129, 1
    %s131 = scalar_select %p128, %s129, %s130
    %p134 = pneg %p128
    %p135 = scmp.eq.s32.totalorder %s13, 1
    %p136 = por %p134, %p135
    %p137 = scmp.ne.s32.totalorder %s129, %s132
    %p138 = scmp.eq.s32.totalorder %s13, 0
    %p139 = por %p137, %p138
    %p140 = scmp.ne.s32.totalorder %s129, %s132
    %p141 = scmp.eq.s32.totalorder %s18, 1
    %p142 = por %p140, %p141
    %p143 = scmp.ne.s32.totalorder %s132, %s133
    %p144 = scmp.eq.s32.totalorder %s18, 0
    %p145 = por %p143, %p144
    %p146 = scmp.ne.s32.totalorder %s132, %s133
    %p147 = scmp.eq.s32.totalorder %s19, 1
    %p148 = por %p146, %p147
    %p150 = scmp.ne.s32.totalorder %s133, %s149
    %p151 = scmp.eq.s32.totalorder %s19, 0
    %p152 = por %p150, %p151
    %s153 = ssub.s32 %s21, %s28
    %p154 = scmp.eq.s32.totalorder %s153, 0
    %s156 = sadd.s32 %s155, 1
    %s157 = scalar_select %p154, %s155, %s156
    %p160 = pneg %p154
    %p161 = scmp.eq.s32.totalorder %s13, 1
    %p162 = por %p160, %p161
    %p163 = scmp.ne.s32.totalorder %s155, %s158
    %p164 = scmp.eq.s32.totalorder %s13, 0
    %p165 = por %p163, %p164
    %p166 = scmp.ne.s32.totalorder %s155, %s158
    %p167 = scmp.eq.s32.totalorder %s18, 1
    %p168 = por %p166, %p167
    %p169 = scmp.ne.s32.totalorder %s158, %s159
    %p170 = scmp.eq.s32.totalorder %s18, 0
    %p171 = por %p169, %p170
    %p172 = scmp.ne.s32.totalorder %s158, %s159
    %p173 = scmp.eq.s32.totalorder %s19, 1
    %p174 = por %p172, %p173
    %p176 = scmp.ne.s32.totalorder %s159, %s175
    %p177 = scmp.eq.s32.totalorder %s19, 0
    %p178 = por %p176, %p177
    %s180 = sadd.s32 %s179, 1
    %p183 = scmp.eq.s32.totalorder %s13, 1
    %p184 = scmp.ne.s32.totalorder %s179, %s181
    %p185 = scmp.eq.s32.totalorder %s13, 0
    %p186 = por %p184, %p185
    %p187 = scmp.ne.s32.totalorder %s179, %s181
    %p188 = scmp.eq.s32.totalorder %s18, 1
    %p189 = por %p187, %p188
    %p190 = scmp.ne.s32.totalorder %s181, %s182
    %p191 = scmp.eq.s32.totalorder %s18, 0
    %p192 = por %p190, %p191
    %p193 = scmp.ne.s32.totalorder %s181, %s182
    %p194 = scmp.eq.s32.totalorder %s19, 1
    %p195 = por %p193, %p194
    %p197 = scmp.ne.s32.totalorder %s182, %s196
    %p198 = scmp.eq.s32.totalorder %s19, 0
    %p199 = por %p197, %p198
    %s200 = ssub.s32 %s20, %s32
    %p201 = scmp.eq.s32.totalorder %s200, 0
    %s203 = sadd.s32 %s202, 1
    %s204 = scalar_select %p201, %s202, %s203
    %p207 = pneg %p201
    %p208 = scmp.eq.s32.totalorder %s13, 1
    %p209 = por %p207, %p208
    %p210 = scmp.ne.s32.totalorder %s202, %s205
    %p211 = scmp.eq.s32.totalorder %s13, 0
    %p212 = por %p210, %p211
    %p213 = scmp.ne.s32.totalorder %s202, %s205
    %p214 = scmp.eq.s32.totalorder %s18, 1
    %p215 = por %p213, %p214
    %p216 = scmp.ne.s32.totalorder %s205, %s206
    %p217 = scmp.eq.s32.totalorder %s18, 0
    %p218 = por %p216, %p217
    %p219 = scmp.ne.s32.totalorder %s205, %s206
    %p220 = scmp.eq.s32.totalorder %s19, 1
    %p221 = por %p219, %p220
    %p223 = scmp.ne.s32.totalorder %s206, %s222
    %p224 = scmp.eq.s32.totalorder %s19, 0
    %p225 = por %p223, %p224
    %p226 = scmp.le.s32.totalorder 1, %s13
    %p227 = scmp.lt.s32.totalorder %s13, 3
    %p228 = pnand %p226, %p227
    %p229 = pneg %p228
    // Predicated region
    $region9: #{_lambda_.10} parent=5 // pred_check
      _
    $region10: #{_lambda_.10} parent=5 // pred_check_branch
      %231 = sbr.rel (%p228) target = $region12
    $region11: #{_lambda_.10} parent=5 // pred_region
      %s232 = ssub.s32 %s13, 1
      // Predicated region
      $region13: #{_lambda_.10} parent=11 // pred_check
        %p233 = pneg %p72
      $region14: #{_lambda_.10} parent=11 // pred_check_branch
        %235 = sbr.rel (%p233) target = $region16
      $region15: #{_lambda_.10} parent=11 // pred_region
        _
      $region16: #{_lambda_.10} parent=11 // pred_fallthru
        _
      // Predicated region
      $region17: #{_lambda_.10} parent=11 // pred_check
        %p236 = pneg %p93
      $region18: #{_lambda_.10} parent=11 // pred_check_branch
        %238 = sbr.rel (%p236) target = $region20
      $region19: #{_lambda_.10} parent=11 // pred_region
        _
      $region20: #{_lambda_.10} parent=11 // pred_fallthru
        _
      // Predicated region
      $region21: #{_lambda_.10} parent=11 // pred_check
        %p239 = pneg %p119
      $region22: #{_lambda_.10} parent=11 // pred_check_branch
        %241 = sbr.rel (%p239) target = $region24
      $region23: #{_lambda_.10} parent=11 // pred_region
        %p242 = scmp.lt.s32.totalorder %s23, 0
        %s243 = scalar_select %p242, %s23, 0
        %s244 = smul.addr %s243, 4
        %s245 = scalar_lea.vmem %s3, %s244
      $region24: #{_lambda_.10} parent=11 // pred_fallthru
        _
      // Predicated region
      $region25: #{_lambda_.10} parent=11 // pred_check
        %p246 = pneg %p145
      $region26: #{_lambda_.10} parent=11 // pred_check_branch
        %248 = sbr.rel (%p246) target = $region28
      $region27: #{_lambda_.10} parent=11 // pred_region
        %p249 = scmp.lt.s32.totalorder %s23, 0
        %s250 = scalar_select %p249, %s23, 0
        %s251 = scalar_lea.vmem %s4, %s250
      $region28: #{_lambda_.10} parent=11 // pred_fallthru
        _
      // Predicated region
      $region29: #{_lambda_.10} parent=11 // pred_check
        %p252 = pneg %p171
      $region30: #{_lambda_.10} parent=11 // pred_check_branch
        %254 = sbr.rel (%p252) target = $region32
      $region31: #{_lambda_.10} parent=11 // pred_region
        %s255 = smul.u32 16, %s23
        %p256 = scmp.lt.s32.totalorder %s255, 15
        %s257 = scalar_select %p256, %s255, 15
        %s258 = smul.addr %s257, 4
        %s259 = scalar_lea.vmem %s5, %s258
        %s260 = smul.u32 16, %s23
      $region32: #{_lambda_.10} parent=11 // pred_fallthru
        _
      // Predicated region
      $region33: #{_lambda_.10} parent=11 // pred_check
        %p261 = pneg %p192
      $region34: #{_lambda_.10} parent=11 // pred_check_branch
        %263 = sbr.rel (%p261) target = $region36
      $region35: #{_lambda_.10} parent=11 // pred_region
        _
      $region36: #{_lambda_.10} parent=11 // pred_fallthru
        _
    $region12: #{_lambda_.10} parent=5 // pred_fallthru
      _
    %p264 = scmp.lt.s32.totalorder %s13, 2
    // Predicated region
    $region37: #{_lambda_.10} parent=5 // pred_check
      %p265 = pneg %p264
    $region38: #{_lambda_.10} parent=5 // pred_check_branch
      %267 = sbr.rel (%p265) target = $region40
    $region39: #{_lambda_.10} parent=5 // pred_region
      // Predicated region
      $region41: #{_lambda_.10} parent=39 // pred_check
        %p268 = pneg %p45
      $region42: #{_lambda_.10} parent=39 // pred_check_branch
        %270 = sbr.rel (%p268) target = $region44
      $region43: #{_lambda_.10} parent=39 // pred_region
        %p271 = scmp.lt.s32.totalorder %s20, 1
        %s272 = scalar_select %p271, %s20, 1
        %s273 = smul.addr %s272, 4
        %s274 = scalar_lea.vmem %s0, %s273
      $region44: #{_lambda_.10} parent=39 // pred_fallthru
        _
    $region40: #{_lambda_.10} parent=5 // pred_fallthru
      _
    %p275 = scmp.le.s32.totalorder 1, %s13
    %p276 = scmp.lt.s32.totalorder %s13, 3
    %p277 = pnand %p275, %p276
    %p278 = pneg %p277
    // Predicated region
    $region45: #{_lambda_.10} parent=5 // pred_check
      _
    $region46: #{_lambda_.10} parent=5 // pred_check_branch
      %280 = sbr.rel (%p277) target = $region48
    $region47: #{_lambda_.10} parent=5 // pred_region
      %s281 = ssub.s32 %s13, 1
      %p282 = scmp.lt.s32.totalorder %s22, 1
      %s283 = scalar_select %p282, %s22, 1
      %s284 = smul.addr %s283, 4
      %s285 = scalar_lea.vmem %s0, %s284
      %p286 = pneg %p51
      %p287 = pneg %p48
      %p288 = pneg %p72
      %p289 = pneg %p69
      %p290 = pneg %p93
      %p291 = pneg %p90
      %p292 = scmp.lt.s32.totalorder %s23, 0
      %s293 = scalar_select %p292, %s23, 0
      %s294 = smul.addr %s293, 4
      %s295 = scalar_lea.vmem %s3, %s294
      %p296 = pneg %p119
      %p297 = pneg %p116
      %p298 = scmp.lt.s32.totalorder %s23, 0
      %s299 = scalar_select %p298, %s23, 0
      %s300 = scalar_lea.vmem %s4, %s299
      %p301 = pneg %p145
      %p302 = pneg %p142
      %s303 = smul.u32 16, %s23
      %p304 = scmp.lt.s32.totalorder %s303, 15
      %s305 = scalar_select %p304, %s303, 15
      %s306 = smul.addr %s305, 4
      %s307 = scalar_lea.vmem %s5, %s306
      %p308 = pneg %p171
      %p309 = pneg %p168
      %p310 = pneg %p192
      %p311 = pneg %p189
      %p312 = pneg %p218
      %p313 = pneg %p215
      %p314 = scmp.lt.s32.totalorder %s22, 1
      %s315 = scalar_select %p314, %s22, 1
      %s316 = smul.addr %s315, 4
      %s317 = scalar_lea.vmem %s7, %s316
      %p318 = scmp.lt.s32.totalorder %s22, 1
      %s319 = scalar_select %p318, %s22, 1
      %s320 = smul.addr %s319, 4
      %s321 = scalar_lea.vmem %s0, %s320
      %p322 = scmp.lt.s32.totalorder %s23, 0
      %s323 = scalar_select %p322, %s23, 0
      %s324 = smul.addr %s323, 4
      %s325 = scalar_lea.vmem %s3, %s324
      %p326 = scmp.lt.s32.totalorder %s23, 0
      %s327 = scalar_select %p326, %s23, 0
      %s328 = scalar_lea.vmem %s4, %s327
      %s329 = smul.u32 16, %s23
      %p330 = scmp.lt.s32.totalorder %s329, 15
      %s331 = scalar_select %p330, %s329, 15
      %s332 = smul.addr %s331, 4
      %s333 = scalar_lea.vmem %s5, %s332
      %s334 = smul.u32 16, %s23
      %p335 = scmp.lt.s32.totalorder %s22, 1
      %s336 = scalar_select %p335, %s22, 1
      %s337 = smul.addr %s336, 4
      %s338 = scalar_lea.vmem %s7, %s337
      %p340 = scmp.eq.s32.totalorder %s23, 0
      // Predicated region
      $region49: #{_lambda_.10} parent=47 // pred_check
        %p341 = pneg %p340
      $region50: #{_lambda_.10} parent=47 // pred_check_branch
        %343 = sbr.rel (%p341) target = $region52
      $region51: #{_lambda_.10} parent=47 // pred_region
        %v344 = vld [vmem:[%s321] sm:$0xf]
        %v345 = vunpack.c.l.bf16 %v344
        %v346 = vld [vmem:[%s1] sm:$0x1]
        %v347 = vld [vmem:[%s2] sm:$0x1]
        %vm348 = vcmask 261120
        %v349 = vsel %vm348, %v345, 0.0
        %350 = vadd.xlane.f32.xlu0 %v349
        %v351 = vpop.xlane.xlu0 %350
        %v352 = vrcp.pop 32.0
        %v353 = vmul.f32 32.0, %v352
        %v354 = vsub.f32 1.0, %v353
        %v355 = vmul.f32 %v352, %v354
        %v356 = vadd.f32 %v352, %v355
        %vm357 = vweird.f32 %v352
        %v358 = vsel %vm357, %v352, %v356
        %v359 = vmul.f32 %v351, %v358
        %v360 = vsub.f32 %v345, %v359
        %v361 = vmul.f32 %v360, %v360
        %v362 = vsel %vm348, %v361, 0.0
        %363 = vadd.xlane.f32.xlu0 %v362
        %v364 = vpop.xlane.xlu0 %363
        %v365 = vmul.f32 %v364, %v358
        %v366 = vadd.f32 %v365, 1e-05
        %v367 = vrsqrt.pop %v366
        %v368 = vmul.f32 %v367, %v366
        %v369 = vmul.f32 %v368, %v367
        %v370 = vmul.f32 0.5, %v369
        %v371 = vsub.f32 1.5, %v370
        %v372 = vmul.f32 %v367, %v371
        %vm373 = vweird.f32 %v366
        %vm374 = vweird.f32 %v367
        %vm375 = vmor %vm373, %vm374
        %v376 = vsel %vm375, %v367, %v372
        %v377 = vmul.f32 %v360, %v376
        %v379 = vperm.slane %v346, 0
        %v381 = vmul.f32 %v377, %v379
        %v383 = vperm.slane %v347, 0
        %v385 = vadd.f32 %v381, %v383
        %v386 = vpack.c.bf16 %v385, %v385
        %vm387 = vcmask 257024
        %388 = vst.msk [vmem:[#allocation2] sm:$0xf] %vm387, %v386
        %389 = vst.msk [vmem:[#allocation3] sm:$0xff] %vm348, 0.0
      $region52: #{_lambda_.10} parent=47 // pred_fallthru
        _
      %v390 = vld [vmem:[#allocation2] sm:$0xf]
      %v391 = vld [vmem:[%s325] sm:$0xf]
      %v392 = vld [vmem:[%s325 + $0x4] sm:$0xf]
      %v393 = vld [vmem:[%s325 + $0x8] sm:$0xf]
      %v394 = vld [vmem:[%s325 + $0xc] sm:$0xf]
      %v395 = vld [vmem:[%s328] sm:$0x1]
      %v397 = vperm.slane %v395, 0
      %v403 = vunpack.c.l.b16 %v391
      %v404 = vunpack.c.l.b16 %v392
      %v405 = vunpack.c.l.b16 %v393
      %v406 = vunpack.c.l.b16 %v394
      %v407 = vpack.c.b16 %v404, %v403
      %v408 = vpack.c.b16 %v406, %v405
      %vm411 = vcmask 261120
      %v413 = vsel %vm411, %v390, 0
      %415 = vmatpush.bf16.msra.mxu0 0
      %416 = vmatpush.bf16.msra.mxu0 0
      %417 = vmatpush.bf16.msra.mxu0 0
      %418 = vmatpush.bf16.msra.mxu0 0
      %419 = vmatpush.bf16.msra.mxu0 0
      %420 = vmatpush.bf16.msra.mxu0 0
      %421 = vmatpush.bf16.msra.mxu0 %v408
      %422 = vmatpush.bf16.msra.mxu0 %v407
      %423 = vmatmul.bf16.gmra.mxu0 %v413
      %v424 = vpop.f32.mrf.mxu0
      %v425 = vadd.f32 %v397, %v424
      %v426 = vpop.f32.mrf.mxu0
      %427 = vdwg.mxu0
      %v428 = vmul.f32 %v425, 0.70710677
      %v429 = vand.u32 2147483647, %v428
      %v430 = vmul.f32 %v429, 0.3275911
      %v431 = vadd.f32 %v430, 1.0
      %v432 = vrcp.pop %v431
      %v433 = vmul.f32 %v432, 1.0614054
      %v434 = vadd.f32 %v433, -1.4531521
      %v435 = vmul.f32 %v432, %v434
      %v436 = vadd.f32 %v435, 1.4214138
      %v437 = vmul.f32 %v432, %v436
      %v438 = vadd.f32 %v437, -0.28449672
      %v439 = vmul.f32 %v432, %v438
      %v440 = vadd.f32 %v439, 0.2548296
      %v441 = vmul.f32 %v432, %v440
      %v442 = vsub.f32 0.0, %v429
      %v443 = vmul.f32 %v442, %v429
      %v444 = vmul.f32 %v443, 1.442695
      %v445 = vpow.pop %v444
      %v446 = vmul.f32 %v441, %v445
      %v447 = vsub.f32 1.0, %v446
      %vm448 = vcmp.lt.f32.partialorder %v428, 0.0
      %v449 = vsub.f32 0.0, %v447
      %v450 = vsel %vm448, %v449, %v447
      %v451 = vmul.f32 %v425, 0.5
      %v452 = vadd.f32 %v450, 1.0
      %v453 = vmul.f32 %v451, %v452
      %v454 = vld [vmem:[#allocation3] sm:$0xff]
      %v455 = vpack.c.bf16 %v453, %v453
      %v456 = vld [vmem:[%s333] sm:$0xf]
      %v457 = vld [vmem:[%s333 + $0x4] sm:$0xf]
      %v458 = vld [vmem:[%s333 + $0x8] sm:$0xf]
      %v459 = vld [vmem:[%s333 + $0xc] sm:$0xf]
      %v460 = vld [vmem:[%s333 + $0x10] sm:$0xf]
      %v461 = vld [vmem:[%s333 + $0x14] sm:$0xf]
      %v462 = vld [vmem:[%s333 + $0x18] sm:$0xf]
      %v463 = vld [vmem:[%s333 + $0x1c] sm:$0xf]
      %v464 = vld [vmem:[%s333 + $0x20] sm:$0xf]
      %v465 = vld [vmem:[%s333 + $0x24] sm:$0xf]
      %v466 = vld [vmem:[%s333 + $0x28] sm:$0xf]
      %v467 = vld [vmem:[%s333 + $0x2c] sm:$0xf]
      %v468 = vld [vmem:[%s333 + $0x30] sm:$0xf]
      %v469 = vld [vmem:[%s333 + $0x34] sm:$0xf]
      %v470 = vld [vmem:[%s333 + $0x38] sm:$0xf]
      %v471 = vld [vmem:[%s333 + $0x3c] sm:$0xf]
      %v488 = vunpack.c.l.b16 %v456
      %v489 = vunpack.c.l.b16 %v457
      %v490 = vunpack.c.l.b16 %v458
      %v491 = vunpack.c.l.b16 %v459
      %v492 = vunpack.c.l.b16 %v460
      %v493 = vunpack.c.l.b16 %v461
      %v494 = vunpack.c.l.b16 %v462
      %v495 = vunpack.c.l.b16 %v463
      %v496 = vunpack.c.l.b16 %v464
      %v497 = vunpack.c.l.b16 %v465
      %v498 = vunpack.c.l.b16 %v466
      %v499 = vunpack.c.l.b16 %v467
      %v500 = vunpack.c.l.b16 %v468
      %v501 = vunpack.c.l.b16 %v469
      %v502 = vunpack.c.l.b16 %v470
      %v503 = vunpack.c.l.b16 %v471
      %v504 = vpack.c.b16 %v489, %v488
      %v505 = vpack.c.b16 %v491, %v490
      %v506 = vpack.c.b16 %v493, %v492
      %v507 = vpack.c.b16 %v495, %v494
      %v508 = vpack.c.b16 %v497, %v496
      %v509 = vpack.c.b16 %v499, %v498
      %v510 = vpack.c.b16 %v501, %v500
      %v511 = vpack.c.b16 %v503, %v502
      %520 = vmatpush.bf16.msra.mxu0 %v511
      %521 = vmatpush.bf16.msra.mxu0 %v510
      %522 = vmatpush.bf16.msra.mxu0 %v509
      %523 = vmatpush.bf16.msra.mxu0 %v508
      %524 = vmatpush.bf16.msra.mxu0 %v507
      %525 = vmatpush.bf16.msra.mxu0 %v506
      %526 = vmatpush.bf16.msra.mxu0 %v505
      %527 = vmatpush.bf16.msra.mxu0 %v504
      %528 = vmatmul.bf16.gmra.mxu0 %v455
      %v529 = vpop.f32.mrf.mxu0
      %v530 = vadd.f32 0.0, %v529
      %v531 = vpop.f32.mrf.mxu0
      %532 = vdwg.mxu0
      %v533 = vadd.f32 %v454, %v530
      %534 = vst.msk [vmem:[#allocation3] sm:$0xff] %vm411, %v533
      // Predicated region
      $region53: #{_lambda_.10} parent=47 // pred_check
        %p535 = pneg %p340
      $region54: #{_lambda_.10} parent=47 // pred_check_branch
        %537 = sbr.rel (%p535) target = $region56
      $region55: #{_lambda_.10} parent=47 // pred_region
        %v538 = vld [vmem:[#allocation3] sm:$0xff]
        %v539 = vld [vmem:[%s6] sm:$0x1]
        %v541 = vperm.slane %v539, 0
        %v543 = vadd.f32 %v538, %v541
        %v544 = vld [vmem:[%s321] sm:$0xf]
        %v545 = vunpack.c.l.bf16 %v544
        %v546 = vadd.f32 %v543, %v545
        %v547 = vpack.c.bf16 %v546, %v546
        %vm548 = vcmask 257024
        %549 = vst.msk [vmem:[%s338] sm:$0xf] %vm548, %v547
      $region56: #{_lambda_.10} parent=47 // pred_fallthru
        _
      %p550 = scmp.lt.s32.totalorder %s22, 1
      %s551 = scalar_select %p550, %s22, 1
      %s552 = smul.addr %s551, 4
      %s553 = scalar_lea.vmem %s7, %s552
      // Predicated region
      $region57: #{_lambda_.10} parent=47 // pred_check
        %p554 = pneg %p215
      $region58: #{_lambda_.10} parent=47 // pred_check_branch
        %556 = sbr.rel (%p554) target = $region60
      $region59: #{_lambda_.10} parent=47 // pred_region
        _
      $region60: #{_lambda_.10} parent=47 // pred_fallthru
        _
    $region48: #{_lambda_.10} parent=5 // pred_fallthru
      _
    %p557 = scmp.le.s32.totalorder 2, %s13
    // Predicated region
    $region61: #{_lambda_.10} parent=5 // pred_check
      %p558 = pneg %p557
    $region62: #{_lambda_.10} parent=5 // pred_check_branch
      %560 = sbr.rel (%p558) target = $region64
    $region63: #{_lambda_.10} parent=5 // pred_region
      %s561 = ssub.s32 %s13, 2
      // Predicated region
      $region65: #{_lambda_.10} parent=63 // pred_check
        %p562 = pneg %p221
      $region66: #{_lambda_.10} parent=63 // pred_check_branch
        %564 = sbr.rel (%p562) target = $region68
      $region67: #{_lambda_.10} parent=63 // pred_region
        %p565 = scmp.lt.s32.totalorder %s24, 1
        %s566 = scalar_select %p565, %s24, 1
        %s567 = smul.addr %s566, 4
        %s568 = scalar_lea.vmem %s7, %s567
      $region68: #{_lambda_.10} parent=63 // pred_fallthru
        _
    $region64: #{_lambda_.10} parent=5 // pred_fallthru
      _
  $region6: #{_lambda_.10} parent=0 // loop_footer
    %s17 = sadd.s32 1, %s13
  $region7: #{_lambda_.10} parent=0 // loop_footer_branch
    %12 = sbr.rel target = $region3
  $region8: #{_lambda_.10} parent=0 // loop_exit
    _

// kernel: _lambda_.13
$region0: #{_lambda_.13}
  #allocation0 [shape = 'u32[]', space=smem, size = 0x4, offset = 0x4, fixed_abs, tag = 'smem constant byte address 0x4 - core index']
  #allocation1 [shape = 'u32[72,128]{1,0:T(1,128)}', space=vmem, size = 0x9000, scoped, tag = 'internal scratch']
  #allocation2 [shape = 'bf16[8,32]{1,0:T(8,128)(2,1)}', space=vmem, size = 0x800, scoped, tag = 'scratch operand']
  %s0 = inlined_call_operand.vmem [shape: bf16[16,32], index: 0, kind: input, shape index: {}]
  %s1 = inlined_call_operand.vmem [shape: f32[1,32], index: 1, kind: input, shape index: {}]
  %s2 = inlined_call_operand.vmem [shape: f32[1,32], index: 2, kind: input, shape index: {}]
  %s3 = inlined_call_operand.vmem [shape: bf16[32,128], index: 3, kind: input, shape index: {}]
  %s4 = inlined_call_operand.vmem [shape: f32[16,128], index: 4, kind: output, shape index: {}]
  %s5 = sld [smem:[#allocation0]]
  $region53: #{_lambda_.13} parent=0
    _
  %s7 = ssub.s32 1, %s5
  %s8 = scalar_select 0, %s7, %s5
  loop: start=0, step=1, limit=4
  $region2: #{_lambda_.13} parent=0 // loop_pre_header
    _
  $region3: #{_lambda_.13} parent=0 // loop_header
    %s10 = sphi 0, %s14
    %p11 = scmp.ge.s32.totalorder %s10, 4
    %s17 = sphi 0, %s29
    %s18 = sphi 0, %s25
    %s19 = sphi 0, %s17
    %s20 = sphi 0, %s18
    %s21 = sphi 0, %s19
    %s22 = sphi 0, %s20
    %s32 = sphi 0, %s34
    %s35 = sphi 0, %s32
    %s36 = sphi 0, %s35
    %s52 = sphi 0, %s36
    %s56 = sphi 0, %s56
    %s58 = sphi 0, %s56
    %s59 = sphi 0, %s58
    %s73 = sphi 0, %s59
    %s77 = sphi 0, %s77
    %s79 = sphi 0, %s77
    %s80 = sphi 0, %s79
    %s94 = sphi 0, %s80
    %s100 = sphi 0, %s102
    %s103 = sphi 0, %s100
    %s104 = sphi 0, %s103
    %s120 = sphi 0, %s104
    %s128 = sphi 0, %s130
    %s131 = sphi 0, %s128
    %s132 = sphi 0, %s131
    %s148 = sphi 0, %s132
  $region4: #{_lambda_.13} parent=0 // loop_header_branch
    %13 = sbr.rel (%p11) target = $region8
  $region5: #{_lambda_.13} parent=0 // loop_body
    %s15 = ssub.s32 %s10, 1
    %s16 = ssub.s32 %s10, 2
    %s23 = sadd.s32 1, %s18
    %p24 = scmp.ge.s32.totalorder %s23, 1
    %s25 = scalar_select %p24, 0, %s23
    %s26 = sadd.s32 1, %s17
    %s27 = scalar_select %p24, %s26, %s17
    %p28 = scmp.ge.s32.totalorder %s27, 2
    %s29 = scalar_select %p28, 0, %s27
    %s30 = ssub.s32 %s17, %s29
    %p31 = scmp.eq.s32.totalorder %s30, 0
    %s33 = sadd.s32 %s32, 1
    %s34 = scalar_select %p31, %s32, %s33
    %p37 = pneg %p31
    %p38 = scmp.eq.s32.totalorder %s10, 1
    %p39 = por %p37, %p38
    %p40 = scmp.ne.s32.totalorder %s32, %s35
    %p41 = scmp.eq.s32.totalorder %s10, 0
    %p42 = por %p40, %p41
    %p43 = scmp.ne.s32.totalorder %s32, %s35
    %p44 = scmp.eq.s32.totalorder %s15, 1
    %p45 = por %p43, %p44
    %p46 = scmp.ne.s32.totalorder %s35, %s36
    %p47 = scmp.eq.s32.totalorder %s15, 0
    %p48 = por %p46, %p47
    %p49 = scmp.ne.s32.totalorder %s35, %s36
    %p50 = scmp.eq.s32.totalorder %s16, 1
    %p51 = por %p49, %p50
    %p53 = scmp.ne.s32.totalorder %s36, %s52
    %p54 = scmp.eq.s32.totalorder %s16, 0
    %p55 = por %p53, %p54
    %s57 = sadd.s32 %s56, 1
    %p60 = scmp.eq.s32.totalorder %s10, 1
    %p61 = scmp.ne.s32.totalorder %s56, %s58
    %p62 = scmp.eq.s32.totalorder %s10, 0
    %p63 = por %p61, %p62
    %p64 = scmp.ne.s32.totalorder %s56, %s58
    %p65 = scmp.eq.s32.totalorder %s15, 1
    %p66 = por %p64, %p65
    %p67 = scmp.ne.s32.totalorder %s58, %s59
    %p68 = scmp.eq.s32.totalorder %s15, 0
    %p69 = por %p67, %p68
    %p70 = scmp.ne.s32.totalorder %s58, %s59
    %p71 = scmp.eq.s32.totalorder %s16, 1
    %p72 = por %p70, %p71
    %p74 = scmp.ne.s32.totalorder %s59, %s73
    %p75 = scmp.eq.s32.totalorder %s16, 0
    %p76 = por %p74, %p75
    %s78 = sadd.s32 %s77, 1
    %p81 = scmp.eq.s32.totalorder %s10, 1
    %p82 = scmp.ne.s32.totalorder %s77, %s79
    %p83 = scmp.eq.s32.totalorder %s10, 0
    %p84 = por %p82, %p83
    %p85 = scmp.ne.s32.totalorder %s77, %s79
    %p86 = scmp.eq.s32.totalorder %s15, 1
    %p87 = por %p85, %p86
    %p88 = scmp.ne.s32.totalorder %s79, %s80
    %p89 = scmp.eq.s32.totalorder %s15, 0
    %p90 = por %p88, %p89
    %p91 = scmp.ne.s32.totalorder %s79, %s80
    %p92 = scmp.eq.s32.totalorder %s16, 1
    %p93 = por %p91, %p92
    %p95 = scmp.ne.s32.totalorder %s80, %s94
    %p96 = scmp.eq.s32.totalorder %s16, 0
    %p97 = por %p95, %p96
    %s98 = ssub.s32 %s18, %s25
    %p99 = scmp.eq.s32.totalorder %s98, 0
    %s101 = sadd.s32 %s100, 1
    %s102 = scalar_select %p99, %s100, %s101
    %p105 = pneg %p99
    %p106 = scmp.eq.s32.totalorder %s10, 1
    %p107 = por %p105, %p106
    %p108 = scmp.ne.s32.totalorder %s100, %s103
    %p109 = scmp.eq.s32.totalorder %s10, 0
    %p110 = por %p108, %p109
    %p111 = scmp.ne.s32.totalorder %s100, %s103
    %p112 = scmp.eq.s32.totalorder %s15, 1
    %p113 = por %p111, %p112
    %p114 = scmp.ne.s32.totalorder %s103, %s104
    %p115 = scmp.eq.s32.totalorder %s15, 0
    %p116 = por %p114, %p115
    %p117 = scmp.ne.s32.totalorder %s103, %s104
    %p118 = scmp.eq.s32.totalorder %s16, 1
    %p119 = por %p117, %p118
    %p121 = scmp.ne.s32.totalorder %s104, %s120
    %p122 = scmp.eq.s32.totalorder %s16, 0
    %p123 = por %p121, %p122
    %s124 = ssub.s32 %s17, %s29
    %s125 = ssub.s32 %s18, %s25
    %s126 = sor.u32 %s124, %s125
    %p127 = scmp.eq.s32.totalorder %s126, 0
    %s129 = sadd.s32 %s128, 1
    %s130 = scalar_select %p127, %s128, %s129
    %p133 = pneg %p127
    %p134 = scmp.eq.s32.totalorder %s10, 1
    %p135 = por %p133, %p134
    %p136 = scmp.ne.s32.totalorder %s128, %s131
    %p137 = scmp.eq.s32.totalorder %s10, 0
    %p138 = por %p136, %p137
    %p139 = scmp.ne.s32.totalorder %s128, %s131
    %p140 = scmp.eq.s32.totalorder %s15, 1
    %p141 = por %p139, %p140
    %p142 = scmp.ne.s32.totalorder %s131, %s132
    %p143 = scmp.eq.s32.totalorder %s15, 0
    %p144 = por %p142, %p143
    %p145 = scmp.ne.s32.totalorder %s131, %s132
    %p146 = scmp.eq.s32.totalorder %s16, 1
    %p147 = por %p145, %p146
    %p149 = scmp.ne.s32.totalorder %s132, %s148
    %p150 = scmp.eq.s32.totalorder %s16, 0
    %p151 = por %p149, %p150
    %p152 = scmp.le.s32.totalorder 1, %s10
    %p153 = scmp.lt.s32.totalorder %s10, 3
    %p154 = pnand %p152, %p153
    %p155 = pneg %p154
    // Predicated region
    $region9: #{_lambda_.13} parent=5 // pred_check
      _
    $region10: #{_lambda_.13} parent=5 // pred_check_branch
      %157 = sbr.rel (%p154) target = $region12
    $region11: #{_lambda_.13} parent=5 // pred_region
      %s158 = ssub.s32 %s10, 1
      // Predicated region
      $region13: #{_lambda_.13} parent=11 // pred_check
        %p159 = pneg %p69
      $region14: #{_lambda_.13} parent=11 // pred_check_branch
        %161 = sbr.rel (%p159) target = $region16
      $region15: #{_lambda_.13} parent=11 // pred_region
        _
      $region16: #{_lambda_.13} parent=11 // pred_fallthru
        _
      // Predicated region
      $region17: #{_lambda_.13} parent=11 // pred_check
        %p162 = pneg %p90
      $region18: #{_lambda_.13} parent=11 // pred_check_branch
        %164 = sbr.rel (%p162) target = $region20
      $region19: #{_lambda_.13} parent=11 // pred_region
        _
      $region20: #{_lambda_.13} parent=11 // pred_fallthru
        _
      // Predicated region
      $region21: #{_lambda_.13} parent=11 // pred_check
        %p165 = pneg %p116
      $region22: #{_lambda_.13} parent=11 // pred_check_branch
        %167 = sbr.rel (%p165) target = $region24
      $region23: #{_lambda_.13} parent=11 // pred_region
        %p168 = scmp.lt.s32.totalorder %s20, 0
        %s169 = scalar_select %p168, %s20, 0
        %s170 = smul.addr %s169, 4
        %s171 = scalar_lea.vmem %s3, %s170
      $region24: #{_lambda_.13} parent=11 // pred_fallthru
        _
    $region12: #{_lambda_.13} parent=5 // pred_fallthru
      _
    %p172 = scmp.lt.s32.totalorder %s10, 2
    // Predicated region
    $region25: #{_lambda_.13} parent=5 // pred_check
      %p173 = pneg %p172
    $region26: #{_lambda_.13} parent=5 // pred_check_branch
      %175 = sbr.rel (%p173) target = $region28
    $region27: #{_lambda_.13} parent=5 // pred_region
      // Predicated region
      $region29: #{_lambda_.13} parent=27 // pred_check
        %p176 = pneg %p42
      $region30: #{_lambda_.13} parent=27 // pred_check_branch
        %178 = sbr.rel (%p176) target = $region32
      $region31: #{_lambda_.13} parent=27 // pred_region
        %p179 = scmp.lt.s32.totalorder %s17, 1
        %s180 = scalar_select %p179, %s17, 1
        %s181 = smul.addr %s180, 4
        %s182 = scalar_lea.vmem %s0, %s181
      $region32: #{_lambda_.13} parent=27 // pred_fallthru
        _
    $region28: #{_lambda_.13} parent=5 // pred_fallthru
      _
    %p183 = scmp.le.s32.totalorder 1, %s10
    %p184 = scmp.lt.s32.totalorder %s10, 3
    %p185 = pnand %p183, %p184
    %p186 = pneg %p185
    // Predicated region
    $region33: #{_lambda_.13} parent=5 // pred_check
      _
    $region34: #{_lambda_.13} parent=5 // pred_check_branch
      %188 = sbr.rel (%p185) target = $region36
    $region35: #{_lambda_.13} parent=5 // pred_region
      %s189 = ssub.s32 %s10, 1
      %p190 = scmp.lt.s32.totalorder %s19, 1
      %s191 = scalar_select %p190, %s19, 1
      %s192 = smul.addr %s191, 4
      %s193 = scalar_lea.vmem %s0, %s192
      %p194 = pneg %p48
      %p195 = pneg %p45
      %p196 = pneg %p69
      %p197 = pneg %p66
      %p198 = pneg %p90
      %p199 = pneg %p87
      %p200 = scmp.lt.s32.totalorder %s20, 0
      %s201 = scalar_select %p200, %s20, 0
      %s202 = smul.addr %s201, 4
      %s203 = scalar_lea.vmem %s3, %s202
      %p204 = pneg %p116
      %p205 = pneg %p113
      %p206 = pneg %p144
      %p207 = pneg %p141
      %p208 = scmp.lt.s32.totalorder %s19, 1
      %s209 = scalar_select %p208, %s19, 1
      %p210 = scmp.lt.s32.totalorder %s20, 0
      %s211 = scalar_select %p210, %s20, 0
      %s212 = sadd.s32 %s211, %s209
      %s213 = smul.addr %s212, 8
      %s214 = scalar_lea.vmem %s4, %s213
      %p215 = scmp.lt.s32.totalorder %s19, 1
      %s216 = scalar_select %p215, %s19, 1
      %s217 = smul.addr %s216, 4
      %s218 = scalar_lea.vmem %s0, %s217
      %p219 = scmp.lt.s32.totalorder %s20, 0
      %s220 = scalar_select %p219, %s20, 0
      %s221 = smul.addr %s220, 4
      %s222 = scalar_lea.vmem %s3, %s221
      %p223 = scmp.lt.s32.totalorder %s19, 1
      %s224 = scalar_select %p223, %s19, 1
      %p225 = scmp.lt.s32.totalorder %s20, 0
      %s226 = scalar_select %p225, %s20, 0
      %s227 = sadd.s32 %s226, %s224
      %s228 = smul.addr %s227, 8
      %s229 = scalar_lea.vmem %s4, %s228
      %p231 = scmp.eq.s32.totalorder %s20, 0
      // Predicated region
      $region37: #{_lambda_.13} parent=35 // pred_check
        %p232 = pneg %p231
      $region38: #{_lambda_.13} parent=35 // pred_check_branch
        %234 = sbr.rel (%p232) target = $region40
      $region39: #{_lambda_.13} parent=35 // pred_region
        %v235 = vld [vmem:[%s218] sm:$0xf]
        %v236 = vunpack.c.l.bf16 %v235
        %v237 = vld [vmem:[%s1] sm:$0x1]
        %v238 = vld [vmem:[%s2] sm:$0x1]
        %vm239 = vcmask 261120
        %v240 = vsel %vm239, %v236, 0.0
        %241 = vadd.xlane.f32.xlu0 %v240
        %v242 = vpop.xlane.xlu0 %241
        %v243 = vrcp.pop 32.0
        %v244 = vmul.f32 32.0, %v243
        %v245 = vsub.f32 1.0, %v244
        %v246 = vmul.f32 %v243, %v245
        %v247 = vadd.f32 %v243, %v246
        %vm248 = vweird.f32 %v243
        %v249 = vsel %vm248, %v243, %v247
        %v250 = vmul.f32 %v242, %v249
        %v251 = vsub.f32 %v236, %v250
        %v252 = vmul.f32 %v251, %v251
        %v253 = vsel %vm239, %v252, 0.0
        %254 = vadd.xlane.f32.xlu0 %v253
        %v255 = vpop.xlane.xlu0 %254
        %v256 = vmul.f32 %v255, %v249
        %v257 = vadd.f32 %v256, 1e-05
        %v258 = vrsqrt.pop %v257
        %v259 = vmul.f32 %v258, %v257
        %v260 = vmul.f32 %v259, %v258
        %v261 = vmul.f32 0.5, %v260
        %v262 = vsub.f32 1.5, %v261
        %v263 = vmul.f32 %v258, %v262
        %vm264 = vweird.f32 %v257
        %vm265 = vweird.f32 %v258
        %vm266 = vmor %vm264, %vm265
        %v267 = vsel %vm266, %v258, %v263
        %v268 = vmul.f32 %v251, %v267
        %v270 = vperm.slane %v237, 0
        %v272 = vmul.f32 %v268, %v270
        %v274 = vperm.slane %v238, 0
        %v276 = vadd.f32 %v272, %v274
        %v277 = vpack.c.bf16 %v276, %v276
        %vm278 = vcmask 257024
        %279 = vst.msk [vmem:[#allocation2] sm:$0xf] %vm278, %v277
      $region40: #{_lambda_.13} parent=35 // pred_fallthru
        _
      %v280 = vld [vmem:[#allocation2] sm:$0xf]
      %v281 = vld [vmem:[%s222] sm:$0xf]
      %v282 = vld [vmem:[%s222 + $0x4] sm:$0xf]
      %v283 = vld [vmem:[%s222 + $0x8] sm:$0xf]
      %v284 = vld [vmem:[%s222 + $0xc] sm:$0xf]
      %v289 = vunpack.c.l.b16 %v281
      %v290 = vunpack.c.l.b16 %v282
      %v291 = vunpack.c.l.b16 %v283
      %v292 = vunpack.c.l.b16 %v284
      %v293 = vpack.c.b16 %v290, %v289
      %v294 = vpack.c.b16 %v292, %v291
      %vm297 = vcmask 261120
      %v299 = vsel %vm297, %v280, 0
      %301 = vmatpush.bf16.msra.mxu0 0
      %302 = vmatpush.bf16.msra.mxu0 0
      %303 = vmatpush.bf16.msra.mxu0 0
      %304 = vmatpush.bf16.msra.mxu0 0
      %305 = vmatpush.bf16.msra.mxu0 0
      %306 = vmatpush.bf16.msra.mxu0 0
      %307 = vmatpush.bf16.msra.mxu0 %v294
      %308 = vmatpush.bf16.msra.mxu0 %v293
      %309 = vmatmul.bf16.gmra.mxu0 %v299
      %v310 = vpop.f32.mrf.mxu0
      %v311 = vadd.f32 0.0, %v310
      %v312 = vpop.f32.mrf.mxu0
      %313 = vdwg.mxu0
      %314 = vst [vmem:[%s229] sm:$0xff] %v311
      %p315 = scmp.lt.s32.totalorder %s19, 1
      %s316 = scalar_select %p315, %s19, 1
      %p317 = scmp.lt.s32.totalorder %s20, 0
      %s318 = scalar_select %p317, %s20, 0
      %s319 = sadd.s32 %s318, %s316
      %s320 = smul.addr %s319, 8
      %s321 = scalar_lea.vmem %s4, %s320
      // Predicated region
      $region41: #{_lambda_.13} parent=35 // pred_check
        %p322 = pneg %p141
      $region42: #{_lambda_.13} parent=35 // pred_check_branch
        %324 = sbr.rel (%p322) target = $region44
      $region43: #{_lambda_.13} parent=35 // pred_region
        _
      $region44: #{_lambda_.13} parent=35 // pred_fallthru
        _
    $region36: #{_lambda_.13} parent=5 // pred_fallthru
      _
    %p325 = scmp.le.s32.totalorder 2, %s10
    // Predicated region
    $region45: #{_lambda_.13} parent=5 // pred_check
      %p326 = pneg %p325
    $region46: #{_lambda_.13} parent=5 // pred_check_branch
      %328 = sbr.rel (%p326) target = $region48
    $region47: #{_lambda_.13} parent=5 // pred_region
      %s329 = ssub.s32 %s10, 2
      // Predicated region
      $region49: #{_lambda_.13} parent=47 // pred_check
        %p330 = pneg %p147
      $region50: #{_lambda_.13} parent=47 // pred_check_branch
        %332 = sbr.rel (%p330) target = $region52
      $region51: #{_lambda_.13} parent=47 // pred_region
        %p333 = scmp.lt.s32.totalorder %s21, 1
        %s334 = scalar_select %p333, %s21, 1
        %p335 = scmp.lt.s32.totalorder %s22, 0
        %s336 = scalar_select %p335, %s22, 0
        %s337 = sadd.s32 %s336, %s334
        %s338 = smul.addr %s337, 8
        %s339 = scalar_lea.vmem %s4, %s338
      $region52: #{_lambda_.13} parent=47 // pred_fallthru
        _
    $region48: #{_lambda_.13} parent=5 // pred_fallthru
      _
  $region6: #{_lambda_.13} parent=0 // loop_footer
    %s14 = sadd.s32 1, %s10
  $region7: #{_lambda_.13} parent=0 // loop_footer_branch
    %9 = sbr.rel target = $region3
  $region8: #{_lambda_.13} parent=0 // loop_exit
    _

// kernel: _lambda_.9
$region0: #{_lambda_.9}
  #allocation0 [shape = 'u32[]', space=smem, size = 0x4, offset = 0x4, fixed_abs, tag = 'smem constant byte address 0x4 - core index']
  #allocation1 [shape = 'u32[72,128]{1,0:T(1,128)}', space=vmem, size = 0x9000, scoped, tag = 'internal scratch']
  %s0 = inlined_call_operand.vmem [shape: bf16[2,8,32], index: 0, kind: input, shape index: {}]
  %s1 = inlined_call_operand.vmem [shape: f32[1,32], index: 1, kind: input, shape index: {}]
  %s2 = inlined_call_operand.vmem [shape: f32[1,32], index: 2, kind: input, shape index: {}]
  %s3 = inlined_call_operand.vmem [shape: bf16[4,32,8], index: 3, kind: input, shape index: {}]
  %s4 = inlined_call_operand.vmem [shape: bf16[4,32,8], index: 4, kind: input, shape index: {}]
  %s5 = inlined_call_operand.vmem [shape: bf16[4,32,8], index: 5, kind: input, shape index: {}]
  %s6 = inlined_call_operand.vmem [shape: f32[4,1,8], index: 6, kind: input, shape index: {}]
  %s7 = inlined_call_operand.vmem [shape: f32[4,1,8], index: 7, kind: input, shape index: {}]
  %s8 = inlined_call_operand.vmem [shape: f32[4,1,8], index: 8, kind: input, shape index: {}]
  %s9 = inlined_call_operand.vmem [shape: bf16[4,8,32], index: 9, kind: input, shape index: {}]
  %s10 = inlined_call_operand.vmem [shape: f32[1,32], index: 10, kind: input, shape index: {}]
  %s11 = inlined_call_operand.vmem [shape: bf16[2,8,32], index: 11, kind: output, shape index: {}]
  %s12 = sld [smem:[#allocation0]]
  $region77: #{_lambda_.9} parent=0
    _
  %s14 = ssub.s32 1, %s12
  %s15 = scalar_select 0, %s14, %s12
  loop: start=0, step=1, limit=4
  $region2: #{_lambda_.9} parent=0 // loop_pre_header
    _
  $region3: #{_lambda_.9} parent=0 // loop_header
    %s17 = sphi 0, %s21
    %p18 = scmp.ge.s32.totalorder %s17, 4
    %s27 = sphi 0, %s29
    %s30 = sphi 0, %s27
    %s31 = sphi 0, %s30
    %s47 = sphi 0, %s31
    %s51 = sphi 0, %s51
    %s53 = sphi 0, %s51
    %s54 = sphi 0, %s53
    %s68 = sphi 0, %s54
    %s72 = sphi 0, %s72
    %s74 = sphi 0, %s72
    %s75 = sphi 0, %s74
    %s89 = sphi 0, %s75
    %s93 = sphi 0, %s93
    %s95 = sphi 0, %s93
    %s96 = sphi 0, %s95
    %s110 = sphi 0, %s96
    %s114 = sphi 0, %s114
    %s116 = sphi 0, %s114
    %s117 = sphi 0, %s116
    %s131 = sphi 0, %s117
    %s135 = sphi 0, %s135
    %s137 = sphi 0, %s135
    %s138 = sphi 0, %s137
    %s152 = sphi 0, %s138
    %s156 = sphi 0, %s156
    %s158 = sphi 0, %s156
    %s159 = sphi 0, %s158
    %s173 = sphi 0, %s159
    %s177 = sphi 0, %s177
    %s179 = sphi 0, %s177
    %s180 = sphi 0, %s179
    %s194 = sphi 0, %s180
    %s198 = sphi 0, %s198
    %s200 = sphi 0, %s198
    %s201 = sphi 0, %s200
    %s215 = sphi 0, %s201
    %s219 = sphi 0, %s219
    %s221 = sphi 0, %s219
    %s222 = sphi 0, %s221
    %s236 = sphi 0, %s222
    %s240 = sphi 0, %s240
    %s242 = sphi 0, %s240
    %s243 = sphi 0, %s242
    %s257 = sphi 0, %s243
    %s263 = sphi 0, %s265
    %s266 = sphi 0, %s263
    %s267 = sphi 0, %s266
    %s283 = sphi 0, %s267
  $region4: #{_lambda_.9} parent=0 // loop_header_branch
    %20 = sbr.rel (%p18) target = $region8
  $region5: #{_lambda_.9} parent=0 // loop_body
    %s22 = ssub.s32 %s17, 1
    %s23 = ssub.s32 %s17, 2
    %s24 = sadd.s32 %s17, 1
    %s25 = ssub.s32 %s17, %s24
    %p26 = scmp.eq.s32.totalorder %s25, 0
    %s28 = sadd.s32 %s27, 1
    %s29 = scalar_select %p26, %s27, %s28
    %p32 = pneg %p26
    %p33 = scmp.eq.s32.totalorder %s17, 1
    %p34 = por %p32, %p33
    %p35 = scmp.ne.s32.totalorder %s27, %s30
    %p36 = scmp.eq.s32.totalorder %s17, 0
    %p37 = por %p35, %p36
    %p38 = scmp.ne.s32.totalorder %s27, %s30
    %p39 = scmp.eq.s32.totalorder %s22, 1
    %p40 = por %p38, %p39
    %p41 = scmp.ne.s32.totalorder %s30, %s31
    %p42 = scmp.eq.s32.totalorder %s22, 0
    %p43 = por %p41, %p42
    %p44 = scmp.ne.s32.totalorder %s30, %s31
    %p45 = scmp.eq.s32.totalorder %s23, 1
    %p46 = por %p44, %p45
    %p48 = scmp.ne.s32.totalorder %s31, %s47
    %p49 = scmp.eq.s32.totalorder %s23, 0
    %p50 = por %p48, %p49
    %s52 = sadd.s32 %s51, 1
    %p55 = scmp.eq.s32.totalorder %s17, 1
    %p56 = scmp.ne.s32.totalorder %s51, %s53
    %p57 = scmp.eq.s32.totalorder %s17, 0
    %p58 = por %p56, %p57
    %p59 = scmp.ne.s32.totalorder %s51, %s53
    %p60 = scmp.eq.s32.totalorder %s22, 1
    %p61 = por %p59, %p60
    %p62 = scmp.ne.s32.totalorder %s53, %s54
    %p63 = scmp.eq.s32.totalorder %s22, 0
    %p64 = por %p62, %p63
    %p65 = scmp.ne.s32.totalorder %s53, %s54
    %p66 = scmp.eq.s32.totalorder %s23, 1
    %p67 = por %p65, %p66
    %p69 = scmp.ne.s32.totalorder %s54, %s68
    %p70 = scmp.eq.s32.totalorder %s23, 0
    %p71 = por %p69, %p70
    %s73 = sadd.s32 %s72, 1
    %p76 = scmp.eq.s32.totalorder %s17, 1
    %p77 = scmp.ne.s32.totalorder %s72, %s74
    %p78 = scmp.eq.s32.totalorder %s17, 0
    %p79 = por %p77, %p78
    %p80 = scmp.ne.s32.totalorder %s72, %s74
    %p81 = scmp.eq.s32.totalorder %s22, 1
    %p82 = por %p80, %p81
    %p83 = scmp.ne.s32.totalorder %s74, %s75
    %p84 = scmp.eq.s32.totalorder %s22, 0
    %p85 = por %p83, %p84
    %p86 = scmp.ne.s32.totalorder %s74, %s75
    %p87 = scmp.eq.s32.totalorder %s23, 1
    %p88 = por %p86, %p87
    %p90 = scmp.ne.s32.totalorder %s75, %s89
    %p91 = scmp.eq.s32.totalorder %s23, 0
    %p92 = por %p90, %p91
    %s94 = sadd.s32 %s93, 1
    %p97 = scmp.eq.s32.totalorder %s17, 1
    %p98 = scmp.ne.s32.totalorder %s93, %s95
    %p99 = scmp.eq.s32.totalorder %s17, 0
    %p100 = por %p98, %p99
    %p101 = scmp.ne.s32.totalorder %s93, %s95
    %p102 = scmp.eq.s32.totalorder %s22, 1
    %p103 = por %p101, %p102
    %p104 = scmp.ne.s32.totalorder %s95, %s96
    %p105 = scmp.eq.s32.totalorder %s22, 0
    %p106 = por %p104, %p105
    %p107 = scmp.ne.s32.totalorder %s95, %s96
    %p108 = scmp.eq.s32.totalorder %s23, 1
    %p109 = por %p107, %p108
    %p111 = scmp.ne.s32.totalorder %s96, %s110
    %p112 = scmp.eq.s32.totalorder %s23, 0
    %p113 = por %p111, %p112
    %s115 = sadd.s32 %s114, 1
    %p118 = scmp.eq.s32.totalorder %s17, 1
    %p119 = scmp.ne.s32.totalorder %s114, %s116
    %p120 = scmp.eq.s32.totalorder %s17, 0
    %p121 = por %p119, %p120
    %p122 = scmp.ne.s32.totalorder %s114, %s116
    %p123 = scmp.eq.s32.totalorder %s22, 1
    %p124 = por %p122, %p123
    %p125 = scmp.ne.s32.totalorder %s116, %s117
    %p126 = scmp.eq.s32.totalorder %s22, 0
    %p127 = por %p125, %p126
    %p128 = scmp.ne.s32.totalorder %s116, %s117
    %p129 = scmp.eq.s32.totalorder %s23, 1
    %p130 = por %p128, %p129
    %p132 = scmp.ne.s32.totalorder %s117, %s131
    %p133 = scmp.eq.s32.totalorder %s23, 0
    %p134 = por %p132, %p133
    %s136 = sadd.s32 %s135, 1
    %p139 = scmp.eq.s32.totalorder %s17, 1
    %p140 = scmp.ne.s32.totalorder %s135, %s137
    %p141 = scmp.eq.s32.totalorder %s17, 0
    %p142 = por %p140, %p141
    %p143 = scmp.ne.s32.totalorder %s135, %s137
    %p144 = scmp.eq.s32.totalorder %s22, 1
    %p145 = por %p143, %p144
    %p146 = scmp.ne.s32.totalorder %s137, %s138
    %p147 = scmp.eq.s32.totalorder %s22, 0
    %p148 = por %p146, %p147
    %p149 = scmp.ne.s32.totalorder %s137, %s138
    %p150 = scmp.eq.s32.totalorder %s23, 1
    %p151 = por %p149, %p150
    %p153 = scmp.ne.s32.totalorder %s138, %s152
    %p154 = scmp.eq.s32.totalorder %s23, 0
    %p155 = por %p153, %p154
    %s157 = sadd.s32 %s156, 1
    %p160 = scmp.eq.s32.totalorder %s17, 1
    %p161 = scmp.ne.s32.totalorder %s156, %s158
    %p162 = scmp.eq.s32.totalorder %s17, 0
    %p163 = por %p161, %p162
    %p164 = scmp.ne.s32.totalorder %s156, %s158
    %p165 = scmp.eq.s32.totalorder %s22, 1
    %p166 = por %p164, %p165
    %p167 = scmp.ne.s32.totalorder %s158, %s159
    %p168 = scmp.eq.s32.totalorder %s22, 0
    %p169 = por %p167, %p168
    %p170 = scmp.ne.s32.totalorder %s158, %s159
    %p171 = scmp.eq.s32.totalorder %s23, 1
    %p172 = por %p170, %p171
    %p174 = scmp.ne.s32.totalorder %s159, %s173
    %p175 = scmp.eq.s32.totalorder %s23, 0
    %p176 = por %p174, %p175
    %s178 = sadd.s32 %s177, 1
    %p181 = scmp.eq.s32.totalorder %s17, 1
    %p182 = scmp.ne.s32.totalorder %s177, %s179
    %p183 = scmp.eq.s32.totalorder %s17, 0
    %p184 = por %p182, %p183
    %p185 = scmp.ne.s32.totalorder %s177, %s179
    %p186 = scmp.eq.s32.totalorder %s22, 1
    %p187 = por %p185, %p186
    %p188 = scmp.ne.s32.totalorder %s179, %s180
    %p189 = scmp.eq.s32.totalorder %s22, 0
    %p190 = por %p188, %p189
    %p191 = scmp.ne.s32.totalorder %s179, %s180
    %p192 = scmp.eq.s32.totalorder %s23, 1
    %p193 = por %p191, %p192
    %p195 = scmp.ne.s32.totalorder %s180, %s194
    %p196 = scmp.eq.s32.totalorder %s23, 0
    %p197 = por %p195, %p196
    %s199 = sadd.s32 %s198, 1
    %p202 = scmp.eq.s32.totalorder %s17, 1
    %p203 = scmp.ne.s32.totalorder %s198, %s200
    %p204 = scmp.eq.s32.totalorder %s17, 0
    %p205 = por %p203, %p204
    %p206 = scmp.ne.s32.totalorder %s198, %s200
    %p207 = scmp.eq.s32.totalorder %s22, 1
    %p208 = por %p206, %p207
    %p209 = scmp.ne.s32.totalorder %s200, %s201
    %p210 = scmp.eq.s32.totalorder %s22, 0
    %p211 = por %p209, %p210
    %p212 = scmp.ne.s32.totalorder %s200, %s201
    %p213 = scmp.eq.s32.totalorder %s23, 1
    %p214 = por %p212, %p213
    %p216 = scmp.ne.s32.totalorder %s201, %s215
    %p217 = scmp.eq.s32.totalorder %s23, 0
    %p218 = por %p216, %p217
    %s220 = sadd.s32 %s219, 1
    %p223 = scmp.eq.s32.totalorder %s17, 1
    %p224 = scmp.ne.s32.totalorder %s219, %s221
    %p225 = scmp.eq.s32.totalorder %s17, 0
    %p226 = por %p224, %p225
    %p227 = scmp.ne.s32.totalorder %s219, %s221
    %p228 = scmp.eq.s32.totalorder %s22, 1
    %p229 = por %p227, %p228
    %p230 = scmp.ne.s32.totalorder %s221, %s222
    %p231 = scmp.eq.s32.totalorder %s22, 0
    %p232 = por %p230, %p231
    %p233 = scmp.ne.s32.totalorder %s221, %s222
    %p234 = scmp.eq.s32.totalorder %s23, 1
    %p235 = por %p233, %p234
    %p237 = scmp.ne.s32.totalorder %s222, %s236
    %p238 = scmp.eq.s32.totalorder %s23, 0
    %p239 = por %p237, %p238
    %s241 = sadd.s32 %s240, 1
    %p244 = scmp.eq.s32.totalorder %s17, 1
    %p245 = scmp.ne.s32.totalorder %s240, %s242
    %p246 = scmp.eq.s32.totalorder %s17, 0
    %p247 = por %p245, %p246
    %p248 = scmp.ne.s32.totalorder %s240, %s242
    %p249 = scmp.eq.s32.totalorder %s22, 1
    %p250 = por %p248, %p249
    %p251 = scmp.ne.s32.totalorder %s242, %s243
    %p252 = scmp.eq.s32.totalorder %s22, 0
    %p253 = por %p251, %p252
    %p254 = scmp.ne.s32.totalorder %s242, %s243
    %p255 = scmp.eq.s32.totalorder %s23, 1
    %p256 = por %p254, %p255
    %p258 = scmp.ne.s32.totalorder %s243, %s257
    %p259 = scmp.eq.s32.totalorder %s23, 0
    %p260 = por %p258, %p259
    %s261 = ssub.s32 %s17, %s24
    %p262 = scmp.eq.s32.totalorder %s261, 0
    %s264 = sadd.s32 %s263, 1
    %s265 = scalar_select %p262, %s263, %s264
    %p268 = pneg %p262
    %p269 = scmp.eq.s32.totalorder %s17, 1
    %p270 = por %p268, %p269
    %p271 = scmp.ne.s32.totalorder %s263, %s266
    %p272 = scmp.eq.s32.totalorder %s17, 0
    %p273 = por %p271, %p272
    %p274 = scmp.ne.s32.totalorder %s263, %s266
    %p275 = scmp.eq.s32.totalorder %s22, 1
    %p276 = por %p274, %p275
    %p277 = scmp.ne.s32.totalorder %s266, %s267
    %p278 = scmp.eq.s32.totalorder %s22, 0
    %p279 = por %p277, %p278
    %p280 = scmp.ne.s32.totalorder %s266, %s267
    %p281 = scmp.eq.s32.totalorder %s23, 1
    %p282 = por %p280, %p281
    %p284 = scmp.ne.s32.totalorder %s267, %s283
    %p285 = scmp.eq.s32.totalorder %s23, 0
    %p286 = por %p284, %p285
    %p287 = scmp.le.s32.totalorder 1, %s17
    %p288 = scmp.lt.s32.totalorder %s17, 3
    %p289 = pnand %p287, %p288
    %p290 = pneg %p289
    // Predicated region
    $region9: #{_lambda_.9} parent=5 // pred_check
      _
    $region10: #{_lambda_.9} parent=5 // pred_check_branch
      %292 = sbr.rel (%p289) target = $region12
    $region11: #{_lambda_.9} parent=5 // pred_region
      %s293 = ssub.s32 %s17, 1
      // Predicated region
      $region13: #{_lambda_.9} parent=11 // pred_check
        %p294 = pneg %p64
      $region14: #{_lambda_.9} parent=11 // pred_check_branch
        %296 = sbr.rel (%p294) target = $region16
      $region15: #{_lambda_.9} parent=11 // pred_region
        _
      $region16: #{_lambda_.9} parent=11 // pred_fallthru
        _
      // Predicated region
      $region17: #{_lambda_.9} parent=11 // pred_check
        %p297 = pneg %p85
      $region18: #{_lambda_.9} parent=11 // pred_check_branch
        %299 = sbr.rel (%p297) target = $region20
      $region19: #{_lambda_.9} parent=11 // pred_region
        _
      $region20: #{_lambda_.9} parent=11 // pred_fallthru
        _
      // Predicated region
      $region21: #{_lambda_.9} parent=11 // pred_check
        %p300 = pneg %p106
      $region22: #{_lambda_.9} parent=11 // pred_check_branch
        %302 = sbr.rel (%p300) target = $region24
      $region23: #{_lambda_.9} parent=11 // pred_region
        _
      $region24: #{_lambda_.9} parent=11 // pred_fallthru
        _
      // Predicated region
      $region25: #{_lambda_.9} parent=11 // pred_check
        %p303 = pneg %p127
      $region26: #{_lambda_.9} parent=11 // pred_check_branch
        %305 = sbr.rel (%p303) target = $region28
      $region27: #{_lambda_.9} parent=11 // pred_region
        _
      $region28: #{_lambda_.9} parent=11 // pred_fallthru
        _
      // Predicated region
      $region29: #{_lambda_.9} parent=11 // pred_check
        %p306 = pneg %p148
      $region30: #{_lambda_.9} parent=11 // pred_check_branch
        %308 = sbr.rel (%p306) target = $region32
      $region31: #{_lambda_.9} parent=11 // pred_region
        _
      $region32: #{_lambda_.9} parent=11 // pred_fallthru
        _
      // Predicated region
      $region33: #{_lambda_.9} parent=11 // pred_check
        %p309 = pneg %p169
      $region34: #{_lambda_.9} parent=11 // pred_check_branch
        %311 = sbr.rel (%p309) target = $region36
      $region35: #{_lambda_.9} parent=11 // pred_region
        _
      $region36: #{_lambda_.9} parent=11 // pred_fallthru
        _
      // Predicated region
      $region37: #{_lambda_.9} parent=11 // pred_check
        %p312 = pneg %p190
      $region38: #{_lambda_.9} parent=11 // pred_check_branch
        %314 = sbr.rel (%p312) target = $region40
      $region39: #{_lambda_.9} parent=11 // pred_region
        _
      $region40: #{_lambda_.9} parent=11 // pred_fallthru
        _
      // Predicated region
      $region41: #{_lambda_.9} parent=11 // pred_check
        %p315 = pneg %p211
      $region42: #{_lambda_.9} parent=11 // pred_check_branch
        %317 = sbr.rel (%p315) target = $region44
      $region43: #{_lambda_.9} parent=11 // pred_region
        _
      $region44: #{_lambda_.9} parent=11 // pred_fallthru
        _
      // Predicated region
      $region45: #{_lambda_.9} parent=11 // pred_check
        %p318 = pneg %p232
      $region46: #{_lambda_.9} parent=11 // pred_check_branch
        %320 = sbr.rel (%p318) target = $region48
      $region47: #{_lambda_.9} parent=11 // pred_region
        _
      $region48: #{_lambda_.9} parent=11 // pred_fallthru
        _
      // Predicated region
      $region49: #{_lambda_.9} parent=11 // pred_check
        %p321 = pneg %p253
      $region50: #{_lambda_.9} parent=11 // pred_check_branch
        %323 = sbr.rel (%p321) target = $region52
      $region51: #{_lambda_.9} parent=11 // pred_region
        _
      $region52: #{_lambda_.9} parent=11 // pred_fallthru
        _
    $region12: #{_lambda_.9} parent=5 // pred_fallthru
      _
    %p324 = scmp.lt.s32.totalorder %s17, 2
    // Predicated region
    $region53: #{_lambda_.9} parent=5 // pred_check
      %p325 = pneg %p324
    $region54: #{_lambda_.9} parent=5 // pred_check_branch
      %327 = sbr.rel (%p325) target = $region56
    $region55: #{_lambda_.9} parent=5 // pred_region
      // Predicated region
      $region57: #{_lambda_.9} parent=55 // pred_check
        %p328 = pneg %p37
      $region58: #{_lambda_.9} parent=55 // pred_check_branch
        %330 = sbr.rel (%p328) target = $region60
      $region59: #{_lambda_.9} parent=55 // pred_region
        %p331 = scmp.lt.s32.totalorder %s17, 1
        %s332 = scalar_select %p331, %s17, 1
        %s333 = smul.addr %s332, 4
        %s334 = scalar_lea.vmem %s0, %s333
      $region60: #{_lambda_.9} parent=55 // pred_fallthru
        _
    $region56: #{_lambda_.9} parent=5 // pred_fallthru
      _
    %p335 = scmp.le.s32.totalorder 1, %s17
    %p336 = scmp.lt.s32.totalorder %s17, 3
    %p337 = pnand %p335, %p336
    %p338 = pneg %p337
    // Predicated region
    $region61: #{_lambda_.9} parent=5 // pred_check
      _
    $region62: #{_lambda_.9} parent=5 // pred_check_branch
      %340 = sbr.rel (%p337) target = $region64
    $region63: #{_lambda_.9} parent=5 // pred_region
      %s341 = ssub.s32 %s17, 1
      %p342 = scmp.lt.s32.totalorder %s22, 1
      %s343 = scalar_select %p342, %s22, 1
      %s344 = smul.addr %s343, 4
      %s345 = scalar_lea.vmem %s0, %s344
      %p346 = pneg %p43
      %p347 = pneg %p40
      %p348 = pneg %p64
      %p349 = pneg %p61
      %p350 = pneg %p85
      %p351 = pneg %p82
      %p352 = pneg %p106
      %p353 = pneg %p103
      %p354 = pneg %p127
      %p355 = pneg %p124
      %p356 = pneg %p148
      %p357 = pneg %p145
      %p358 = pneg %p169
      %p359 = pneg %p166
      %p360 = pneg %p190
      %p361 = pneg %p187
      %p362 = pneg %p211
      %p363 = pneg %p208
      %p364 = pneg %p232
      %p365 = pneg %p229
      %p366 = pneg %p253
      %p367 = pneg %p250
      %p368 = pneg %p279
      %p369 = pneg %p276
      %p370 = scmp.lt.s32.totalorder %s22, 1
      %s371 = scalar_select %p370, %s22, 1
      %s372 = smul.addr %s371, 4
      %s373 = scalar_lea.vmem %s11, %s372
      %p374 = scmp.lt.s32.totalorder %s22, 1
      %s375 = scalar_select %p374, %s22, 1
      %s376 = smul.addr %s375, 4
      %s377 = scalar_lea.vmem %s0, %s376
      %p378 = scmp.lt.s32.totalorder %s22, 1
      %s379 = scalar_select %p378, %s22, 1
      %s380 = smul.addr %s379, 4
      %s381 = scalar_lea.vmem %s11, %s380
      %v383 = vld [vmem:[%s377] sm:$0xf]
      %v384 = vunpack.c.l.bf16 %v383
      %v385 = vld [vmem:[%s1] sm:$0x1]
      %v386 = vld [vmem:[%s2] sm:$0x1]
      %vm387 = vcmask 261120
      %v388 = vsel %vm387, %v384, 0.0
      %389 = vadd.xlane.f32.xlu0 %v388
      %v390 = vpop.xlane.xlu0 %389
      %v391 = vrcp.pop 32.0
      %v392 = vmul.f32 32.0, %v391
      %v393 = vsub.f32 1.0, %v392
      %v394 = vmul.f32 %v391, %v393
      %v395 = vadd.f32 %v391, %v394
      %vm396 = vweird.f32 %v391
      %v397 = vsel %vm396, %v391, %v395
      %v398 = vmul.f32 %v390, %v397
      %v399 = vsub.f32 %v384, %v398
      %v400 = vmul.f32 %v399, %v399
      %v401 = vsel %vm387, %v400, 0.0
      %402 = vadd.xlane.f32.xlu0 %v401
      %v403 = vpop.xlane.xlu0 %402
      %v404 = vmul.f32 %v403, %v397
      %v405 = vadd.f32 %v404, 1e-05
      %v406 = vrsqrt.pop %v405
      %v407 = vmul.f32 %v406, %v405
      %v408 = vmul.f32 %v407, %v406
      %v409 = vmul.f32 0.5, %v408
      %v410 = vsub.f32 1.5, %v409
      %v411 = vmul.f32 %v406, %v410
      %vm412 = vweird.f32 %v405
      %vm413 = vweird.f32 %v406
      %vm414 = vmor %vm412, %vm413
      %v415 = vsel %vm414, %v406, %v411
      %v416 = vmul.f32 %v399, %v415
      %v418 = vperm.slane %v385, 0
      %v420 = vmul.f32 %v416, %v418
      %v422 = vperm.slane %v386, 0
      %v424 = vadd.f32 %v420, %v422
      %v425 = vpack.c.bf16 %v424, %v424
      %v426 = vlaneseq
      %v427 = vshrl.u32 %v426, 7
      %v428 = vlaneseq
      %v429 = vand.u32 %v428, 127
      %vm430 = vcmp.le.s32.totalorder %v429, %v427
      %v431 = vld [vmem:[%s3] sm:$0xf]
      %v432 = vld [vmem:[%s3 + $0x4] sm:$0xf]
      %v433 = vld [vmem:[%s3 + $0x8] sm:$0xf]
      %v434 = vld [vmem:[%s3 + $0xc] sm:$0xf]
      %v435 = vld [vmem:[%s6] sm:$0x1]
      %v437 = vperm.slane %v435, 0
      %v443 = vunpack.c.l.b16 %v431
      %v444 = vunpack.c.l.b16 %v432
      %v445 = vunpack.c.l.b16 %v433
      %v446 = vunpack.c.l.b16 %v434
      %v447 = vpack.c.b16 %v444, %v443
      %v448 = vpack.c.b16 %v446, %v445
      %v452 = vsel %vm387, %v425, 0
      %454 = vmatpush.bf16.msra.mxu0 0
      %455 = vmatpush.bf16.msra.mxu0 0
      %456 = vmatpush.bf16.msra.mxu0 0
      %457 = vmatpush.bf16.msra.mxu0 0
      %458 = vmatpush.bf16.msra.mxu0 0
      %459 = vmatpush.bf16.msra.mxu0 0
      %460 = vmatpush.bf16.msra.mxu0 %v448
      %461 = vmatpush.bf16.msra.mxu0 %v447
      %462 = vmatmul.bf16.gmra.mxu0 %v452
      %v463 = vpop.f32.mrf.mxu0
      %v464 = vadd.f32 %v437, %v463
      %v465 = vpop.f32.mrf.mxu0
      %466 = vdwg.mxu0
      %v467 = vld [vmem:[%s4] sm:$0xf]
      %v468 = vld [vmem:[%s4 + $0x4] sm:$0xf]
      %v469 = vld [vmem:[%s4 + $0x8] sm:$0xf]
      %v470 = vld [vmem:[%s4 + $0xc] sm:$0xf]
      %v471 = vld [vmem:[%s7] sm:$0x1]
      %v473 = vperm.slane %v471, 0
      %v479 = vunpack.c.l.b16 %v467
      %v480 = vunpack.c.l.b16 %v468
      %v481 = vunpack.c.l.b16 %v469
      %v482 = vunpack.c.l.b16 %v470
      %v483 = vpack.c.b16 %v480, %v479
      %v484 = vpack.c.b16 %v482, %v481
      %487 = vmatpush.bf16.msra.mxu0 0
      %488 = vmatpush.bf16.msra.mxu0 0
      %489 = vmatpush.bf16.msra.mxu0 0
      %490 = vmatpush.bf16.msra.mxu0 0
      %491 = vmatpush.bf16.msra.mxu0 0
      %492 = vmatpush.bf16.msra.mxu0 0
      %493 = vmatpush.bf16.msra.mxu0 %v484
      %494 = vmatpush.bf16.msra.mxu0 %v483
      %495 = vmatmul.bf16.gmra.mxu0 %v452
      %v496 = vpop.f32.mrf.mxu0
      %v497 = vadd.f32 %v473, %v496
      %v498 = vpop.f32.mrf.mxu0
      %499 = vdwg.mxu0
      %v500 = vld [vmem:[%s5] sm:$0xf]
      %v501 = vld [vmem:[%s5 + $0x4] sm:$0xf]
      %v502 = vld [vmem:[%s5 + $0x8] sm:$0xf]
      %v503 = vld [vmem:[%s5 + $0xc] sm:$0xf]
      %v504 = vld [vmem:[%s8] sm:$0x1]
      %v506 = vperm.slane %v504, 0
      %v512 = vunpack.c.l.b16 %v500
      %v513 = vunpack.c.l.b16 %v501
      %v514 = vunpack.c.l.b16 %v502
      %v515 = vunpack.c.l.b16 %v503
      %v516 = vpack.c.b16 %v513, %v512
      %v517 = vpack.c.b16 %v515, %v514
      %520 = vmatpush.bf16.msra.mxu0 0
      %521 = vmatpush.bf16.msra.mxu0 0
      %522 = vmatpush.bf16.msra.mxu0 0
      %523 = vmatpush.bf16.msra.mxu0 0
      %524 = vmatpush.bf16.msra.mxu0 0
      %525 = vmatpush.bf16.msra.mxu0 0
      %526 = vmatpush.bf16.msra.mxu0 %v517
      %527 = vmatpush.bf16.msra.mxu0 %v516
      %528 = vmatmul.bf16.gmra.mxu0 %v452
      %v529 = vpop.f32.mrf.mxu0
      %v530 = vadd.f32 %v506, %v529
      %v531 = vpop.f32.mrf.mxu0
      %532 = vdwg.mxu0
      %v533 = vpack.c.bf16 %v464, %v464
      %v534 = vpack.c.bf16 %v497, %v497
      %vm535 = vcmask 64512
      %v537 = vsel %vm535, %v533, 0
      %v540 = vsel %vm535, %v534, 0
      %542 = vmatpush.bf16.xpose.msra.mxu0 0
      %543 = vmatpush.bf16.xpose.msra.mxu0 0
      %544 = vmatpush.bf16.xpose.msra.mxu0 0
      %545 = vmatpush.bf16.xpose.msra.mxu0 0
      %546 = vmatpush.bf16.xpose.msra.mxu0 0
      %547 = vmatpush.bf16.xpose.msra.mxu0 0
      %548 = vmatpush.bf16.xpose.msra.mxu0 0
      %549 = vmatpush.bf16.xpose.msra.mxu0 %v540
      %550 = vmatmul.bf16.gmra.mxu0 %v537
      %v551 = vpop.f32.mrf.mxu0
      %v552 = vadd.f32 0.0, %v551
      %v553 = vpop.f32.mrf.mxu0
      %554 = vdwg.mxu0
      %v555 = vmul.f32 %v552, 0.35355338
      %v556 = vsel %vm430, %v555, -1e+30
      %v557 = vsel %vm535, %v556, -inf
      %558 = vmax.xlane.f32.xlu0 %v557
      %v559 = vpop.xlane.xlu0 %558
      %v560 = vsub.f32 %v556, %v559
      %v561 = vmul.f32 %v560, 1.442695
      %v562 = vpow.pop %v561
      %v563 = vsel %vm535, %v562, 0.0
      %564 = vadd.xlane.f32.xlu0 %v563
      %v565 = vpop.xlane.xlu0 %564
      %v566 = vrcp.pop %v565
      %v567 = vmul.f32 %v562, %v566
      %v568 = vpack.c.bf16 %v567, %v567
      %v569 = vpack.c.bf16 %v530, %v530
      %v571 = vsel %vm535, %v568, 0
      %vm573 = vcmask 1043456
      %v575 = vsel %vm573, %v569, 0
      %577 = vmatpush.bf16.msra.mxu0 0
      %578 = vmatpush.bf16.msra.mxu0 0
      %579 = vmatpush.bf16.msra.mxu0 0
      %580 = vmatpush.bf16.msra.mxu0 0
      %581 = vmatpush.bf16.msra.mxu0 0
      %582 = vmatpush.bf16.msra.mxu0 0
      %583 = vmatpush.bf16.msra.mxu0 0
      %584 = vmatpush.bf16.msra.mxu0 %v575
      %585 = vmatmul.bf16.gmra.mxu0 %v571
      %v586 = vpop.f32.mrf.mxu0
      %v587 = vadd.f32 0.0, %v586
      %v588 = vpop.f32.mrf.mxu0
      %589 = vdwg.mxu0
      %v590 = vpack.c.bf16 %v587, %v587
      %v591 = vld [vmem:[%s9] sm:$0xf]
      %s592 = scalar_lea.vmem %s3, 16
      %v593 = vld [vmem:[%s592] sm:$0xf]
      %v594 = vld [vmem:[%s592 + $0x4] sm:$0xf]
      %v595 = vld [vmem:[%s592 + $0x8] sm:$0xf]
      %v596 = vld [vmem:[%s592 + $0xc] sm:$0xf]
      %s597 = scalar_lea.vmem %s6, 1
      %v598 = vld [vmem:[%s597] sm:$0x1]
      %v600 = vperm.slane %v598, 0
      %v606 = vunpack.c.l.b16 %v593
      %v607 = vunpack.c.l.b16 %v594
      %v608 = vunpack.c.l.b16 %v595
      %v609 = vunpack.c.l.b16 %v596
      %v610 = vpack.c.b16 %v607, %v606
      %v611 = vpack.c.b16 %v609, %v608
      %614 = vmatpush.bf16.msra.mxu0 0
      %615 = vmatpush.bf16.msra.mxu0 0
      %616 = vmatpush.bf16.msra.mxu0 0
      %617 = vmatpush.bf16.msra.mxu0 0
      %618 = vmatpush.bf16.msra.mxu0 0
      %619 = vmatpush.bf16.msra.mxu0 0
      %620 = vmatpush.bf16.msra.mxu0 %v611
      %621 = vmatpush.bf16.msra.mxu0 %v610
      %622 = vmatmul.bf16.gmra.mxu0 %v452
      %v623 = vpop.f32.mrf.mxu0
      %v624 = vadd.f32 %v600, %v623
      %v625 = vpop.f32.mrf.mxu0
      %626 = vdwg.mxu0
      %s627 = scalar_lea.vmem %s4, 16
      %v628 = vld [vmem:[%s627] sm:$0xf]
      %v629 = vld [vmem:[%s627 + $0x4] sm:$0xf]
      %v630 = vld [vmem:[%s627 + $0x8] sm:$0xf]
      %v631 = vld [vmem:[%s627 + $0xc] sm:$0xf]
      %s632 = scalar_lea.vmem %s7, 1
      %v633 = vld [vmem:[%s632] sm:$0x1]
      %v635 = vperm.slane %v633, 0
      %v641 = vunpack.c.l.b16 %v628
      %v642 = vunpack.c.l.b16 %v629
      %v643 = vunpack.c.l.b16 %v630
      %v644 = vunpack.c.l.b16 %v631
      %v645 = vpack.c.b16 %v642, %v641
      %v646 = vpack.c.b16 %v644, %v643
      %649 = vmatpush.bf16.msra.mxu0 0
      %650 = vmatpush.bf16.msra.mxu0 0
      %651 = vmatpush.bf16.msra.mxu0 0
      %652 = vmatpush.bf16.msra.mxu0 0
      %653 = vmatpush.bf16.msra.mxu0 0
      %654 = vmatpush.bf16.msra.mxu0 0
      %655 = vmatpush.bf16.msra.mxu0 %v646
      %656 = vmatpush.bf16.msra.mxu0 %v645
      %657 = vmatmul.bf16.gmra.mxu0 %v452
      %v658 = vpop.f32.mrf.mxu0
      %v659 = vadd.f32 %v635, %v658
      %v660 = vpop.f32.mrf.mxu0
      %661 = vdwg.mxu0
      %s662 = scalar_lea.vmem %s5, 16
      %v663 = vld [vmem:[%s662] sm:$0xf]
      %v664 = vld [vmem:[%s662 + $0x4] sm:$0xf]
      %v665 = vld [vmem:[%s662 + $0x8] sm:$0xf]
      %v666 = vld [vmem:[%s662 + $0xc] sm:$0xf]
      %s667 = scalar_lea.vmem %s8, 1
      %v668 = vld [vmem:[%s667] sm:$0x1]
      %v670 = vperm.slane %v668, 0
      %v676 = vunpack.c.l.b16 %v663
      %v677 = vunpack.c.l.b16 %v664
      %v678 = vunpack.c.l.b16 %v665
      %v679 = vunpack.c.l.b16 %v666
      %v680 = vpack.c.b16 %v677, %v676
      %v681 = vpack.c.b16 %v679, %v678
      %684 = vmatpush.bf16.msra.mxu0 0
      %685 = vmatpush.bf16.msra.mxu0 0
      %686 = vmatpush.bf16.msra.mxu0 0
      %687 = vmatpush.bf16.msra.mxu0 0
      %688 = vmatpush.bf16.msra.mxu0 0
      %689 = vmatpush.bf16.msra.mxu0 0
      %690 = vmatpush.bf16.msra.mxu0 %v681
      %691 = vmatpush.bf16.msra.mxu0 %v680
      %692 = vmatmul.bf16.gmra.mxu0 %v452
      %v693 = vpop.f32.mrf.mxu0
      %v694 = vadd.f32 %v670, %v693
      %v695 = vpop.f32.mrf.mxu0
      %696 = vdwg.mxu0
      %v697 = vpack.c.bf16 %v624, %v624
      %v698 = vpack.c.bf16 %v659, %v659
      %v700 = vsel %vm535, %v697, 0
      %v703 = vsel %vm535, %v698, 0
      %705 = vmatpush.bf16.xpose.msra.mxu0 0
      %706 = vmatpush.bf16.xpose.msra.mxu0 0
      %707 = vmatpush.bf16.xpose.msra.mxu0 0
      %708 = vmatpush.bf16.xpose.msra.mxu0 0
      %709 = vmatpush.bf16.xpose.msra.mxu0 0
      %710 = vmatpush.bf16.xpose.msra.mxu0 0
      %711 = vmatpush.bf16.xpose.msra.mxu0 0
      %712 = vmatpush.bf16.xpose.msra.mxu0 %v703
      %713 = vmatmul.bf16.gmra.mxu0 %v700
      %v714 = vpop.f32.mrf.mxu0
      %v715 = vadd.f32 0.0, %v714
      %v716 = vpop.f32.mrf.mxu0
      %717 = vdwg.mxu0
      %v718 = vmul.f32 %v715, 0.35355338
      %v719 = vsel %vm430, %v718, -1e+30
      %v720 = vsel %vm535, %v719, -inf
      %721 = vmax.xlane.f32.xlu0 %v720
      %v722 = vpop.xlane.xlu0 %721
      %v723 = vsub.f32 %v719, %v722
      %v724 = vmul.f32 %v723, 1.442695
      %v725 = vpow.pop %v724
      %v726 = vsel %vm535, %v725, 0.0
      %727 = vadd.xlane.f32.xlu0 %v726
      %v728 = vpop.xlane.xlu0 %727
      %v729 = vrcp.pop %v728
      %v730 = vmul.f32 %v725, %v729
      %v731 = vpack.c.bf16 %v730, %v730
      %v732 = vpack.c.bf16 %v694, %v694
      %v734 = vsel %vm535, %v731, 0
      %v737 = vsel %vm573, %v732, 0
      %739 = vmatpush.bf16.msra.mxu0 0
      %740 = vmatpush.bf16.msra.mxu0 0
      %741 = vmatpush.bf16.msra.mxu0 0
      %742 = vmatpush.bf16.msra.mxu0 0
      %743 = vmatpush.bf16.msra.mxu0 0
      %744 = vmatpush.bf16.msra.mxu0 0
      %745 = vmatpush.bf16.msra.mxu0 0
      %746 = vmatpush.bf16.msra.mxu0 %v737
      %747 = vmatmul.bf16.gmra.mxu0 %v734
      %v748 = vpop.f32.mrf.mxu0
      %v749 = vadd.f32 0.0, %v748
      %v750 = vpop.f32.mrf.mxu0
      %751 = vdwg.mxu0
      %v752 = vpack.c.bf16 %v749, %v749
      %s753 = scalar_lea.vmem %s9, 4
      %v754 = vld [vmem:[%s753] sm:$0xf]
      %v756 = vsel %vm535, %v752, 0
      %v759 = vsel %vm573, %v754, 0
      %761 = vmatpush.bf16.msra.mxu0 0
      %762 = vmatpush.bf16.msra.mxu0 0
      %763 = vmatpush.bf16.msra.mxu0 0
      %764 = vmatpush.bf16.msra.mxu0 0
      %765 = vmatpush.bf16.msra.mxu0 0
      %766 = vmatpush.bf16.msra.mxu0 0
      %767 = vmatpush.bf16.msra.mxu0 0
      %768 = vmatpush.bf16.msra.mxu0 %v759
      %769 = vmatmul.bf16.gmra.mxu0 %v756
      %v770 = vpop.f32.mrf.mxu0
      %v771 = vadd.f32 0.0, %v770
      %v772 = vpop.f32.mrf.mxu0
      %773 = vdwg.mxu0
      %v775 = vsel %vm535, %v590, 0
      %v778 = vsel %vm573, %v591, 0
      %780 = vmatpush.bf16.msra.mxu0 0
      %781 = vmatpush.bf16.msra.mxu0 0
      %782 = vmatpush.bf16.msra.mxu0 0
      %783 = vmatpush.bf16.msra.mxu0 0
      %784 = vmatpush.bf16.msra.mxu0 0
      %785 = vmatpush.bf16.msra.mxu0 0
      %786 = vmatpush.bf16.msra.mxu0 0
      %787 = vmatpush.bf16.msra.mxu0 %v778
      %788 = vmatmul.bf16.gmra.mxu0 %v775
      %v789 = vpop.f32.mrf.mxu0
      %v790 = vadd.f32 %v771, %v789
      %v791 = vpop.f32.mrf.mxu0
      %792 = vdwg.mxu0
      %s793 = scalar_lea.vmem %s3, 32
      %v794 = vld [vmem:[%s793] sm:$0xf]
      %v795 = vld [vmem:[%s793 + $0x4] sm:$0xf]
      %v796 = vld [vmem:[%s793 + $0x8] sm:$0xf]
      %v797 = vld [vmem:[%s793 + $0xc] sm:$0xf]
      %s798 = scalar_lea.vmem %s6, 2
      %v799 = vld [vmem:[%s798] sm:$0x1]
      %v801 = vperm.slane %v799, 0
      %v807 = vunpack.c.l.b16 %v794
      %v808 = vunpack.c.l.b16 %v795
      %v809 = vunpack.c.l.b16 %v796
      %v810 = vunpack.c.l.b16 %v797
      %v811 = vpack.c.b16 %v808, %v807
      %v812 = vpack.c.b16 %v810, %v809
      %815 = vmatpush.bf16.msra.mxu0 0
      %816 = vmatpush.bf16.msra.mxu0 0
      %817 = vmatpush.bf16.msra.mxu0 0
      %818 = vmatpush.bf16.msra.mxu0 0
      %819 = vmatpush.bf16.msra.mxu0 0
      %820 = vmatpush.bf16.msra.mxu0 0
      %821 = vmatpush.bf16.msra.mxu0 %v812
      %822 = vmatpush.bf16.msra.mxu0 %v811
      %823 = vmatmul.bf16.gmra.mxu0 %v452
      %v824 = vpop.f32.mrf.mxu0
      %v825 = vadd.f32 %v801, %v824
      %v826 = vpop.f32.mrf.mxu0
      %827 = vdwg.mxu0
      %s828 = scalar_lea.vmem %s4, 32
      %v829 = vld [vmem:[%s828] sm:$0xf]
      %v830 = vld [vmem:[%s828 + $0x4] sm:$0xf]
      %v831 = vld [vmem:[%s828 + $0x8] sm:$0xf]
      %v832 = vld [vmem:[%s828 + $0xc] sm:$0xf]
      %s833 = scalar_lea.vmem %s7, 2
      %v834 = vld [vmem:[%s833] sm:$0x1]
      %v836 = vperm.slane %v834, 0
      %v842 = vunpack.c.l.b16 %v829
      %v843 = vunpack.c.l.b16 %v830
      %v844 = vunpack.c.l.b16 %v831
      %v845 = vunpack.c.l.b16 %v832
      %v846 = vpack.c.b16 %v843, %v842
      %v847 = vpack.c.b16 %v845, %v844
      %850 = vmatpush.bf16.msra.mxu0 0
      %851 = vmatpush.bf16.msra.mxu0 0
      %852 = vmatpush.bf16.msra.mxu0 0
      %853 = vmatpush.bf16.msra.mxu0 0
      %854 = vmatpush.bf16.msra.mxu0 0
      %855 = vmatpush.bf16.msra.mxu0 0
      %856 = vmatpush.bf16.msra.mxu0 %v847
      %857 = vmatpush.bf16.msra.mxu0 %v846
      %858 = vmatmul.bf16.gmra.mxu0 %v452
      %v859 = vpop.f32.mrf.mxu0
      %v860 = vadd.f32 %v836, %v859
      %v861 = vpop.f32.mrf.mxu0
      %862 = vdwg.mxu0
      %s863 = scalar_lea.vmem %s5, 32
      %v864 = vld [vmem:[%s863] sm:$0xf]
      %v865 = vld [vmem:[%s863 + $0x4] sm:$0xf]
      %v866 = vld [vmem:[%s863 + $0x8] sm:$0xf]
      %v867 = vld [vmem:[%s863 + $0xc] sm:$0xf]
      %s868 = scalar_lea.vmem %s8, 2
      %v869 = vld [vmem:[%s868] sm:$0x1]
      %v871 = vperm.slane %v869, 0
      %v877 = vunpack.c.l.b16 %v864
      %v878 = vunpack.c.l.b16 %v865
      %v879 = vunpack.c.l.b16 %v866
      %v880 = vunpack.c.l.b16 %v867
      %v881 = vpack.c.b16 %v878, %v877
      %v882 = vpack.c.b16 %v880, %v879
      %885 = vmatpush.bf16.msra.mxu0 0
      %886 = vmatpush.bf16.msra.mxu0 0
      %887 = vmatpush.bf16.msra.mxu0 0
      %888 = vmatpush.bf16.msra.mxu0 0
      %889 = vmatpush.bf16.msra.mxu0 0
      %890 = vmatpush.bf16.msra.mxu0 0
      %891 = vmatpush.bf16.msra.mxu0 %v882
      %892 = vmatpush.bf16.msra.mxu0 %v881
      %893 = vmatmul.bf16.gmra.mxu0 %v452
      %v894 = vpop.f32.mrf.mxu0
      %v895 = vadd.f32 %v871, %v894
      %v896 = vpop.f32.mrf.mxu0
      %897 = vdwg.mxu0
      %v898 = vpack.c.bf16 %v825, %v825
      %v899 = vpack.c.bf16 %v860, %v860
      %v901 = vsel %vm535, %v898, 0
      %v904 = vsel %vm535, %v899, 0
      %906 = vmatpush.bf16.xpose.msra.mxu0 0
      %907 = vmatpush.bf16.xpose.msra.mxu0 0
      %908 = vmatpush.bf16.xpose.msra.mxu0 0
      %909 = vmatpush.bf16.xpose.msra.mxu0 0
      %910 = vmatpush.bf16.xpose.msra.mxu0 0
      %911 = vmatpush.bf16.xpose.msra.mxu0 0
      %912 = vmatpush.bf16.xpose.msra.mxu0 0
      %913 = vmatpush.bf16.xpose.msra.mxu0 %v904
      %914 = vmatmul.bf16.gmra.mxu0 %v901
      %v915 = vpop.f32.mrf.mxu0
      %v916 = vadd.f32 0.0, %v915
      %v917 = vpop.f32.mrf.mxu0
      %918 = vdwg.mxu0
      %v919 = vmul.f32 %v916, 0.35355338
      %v920 = vsel %vm430, %v919, -1e+30
      %v921 = vsel %vm535, %v920, -inf
      %922 = vmax.xlane.f32.xlu0 %v921
      %v923 = vpop.xlane.xlu0 %922
      %v924 = vsub.f32 %v920, %v923
      %v925 = vmul.f32 %v924, 1.442695
      %v926 = vpow.pop %v925
      %v927 = vsel %vm535, %v926, 0.0
      %928 = vadd.xlane.f32.xlu0 %v927
      %v929 = vpop.xlane.xlu0 %928
      %v930 = vrcp.pop %v929
      %v931 = vmul.f32 %v926, %v930
      %v932 = vpack.c.bf16 %v931, %v931
      %v933 = vpack.c.bf16 %v895, %v895
      %v935 = vsel %vm535, %v932, 0
      %v938 = vsel %vm573, %v933, 0
      %940 = vmatpush.bf16.msra.mxu0 0
      %941 = vmatpush.bf16.msra.mxu0 0
      %942 = vmatpush.bf16.msra.mxu0 0
      %943 = vmatpush.bf16.msra.mxu0 0
      %944 = vmatpush.bf16.msra.mxu0 0
      %945 = vmatpush.bf16.msra.mxu0 0
      %946 = vmatpush.bf16.msra.mxu0 0
      %947 = vmatpush.bf16.msra.mxu0 %v938
      %948 = vmatmul.bf16.gmra.mxu0 %v935
      %v949 = vpop.f32.mrf.mxu0
      %v950 = vadd.f32 0.0, %v949
      %v951 = vpop.f32.mrf.mxu0
      %952 = vdwg.mxu0
      %v953 = vpack.c.bf16 %v950, %v950
      %s954 = scalar_lea.vmem %s9, 8
      %v955 = vld [vmem:[%s954] sm:$0xf]
      %v957 = vsel %vm535, %v953, 0
      %v960 = vsel %vm573, %v955, 0
      %962 = vmatpush.bf16.msra.mxu0 0
      %963 = vmatpush.bf16.msra.mxu0 0
      %964 = vmatpush.bf16.msra.mxu0 0
      %965 = vmatpush.bf16.msra.mxu0 0
      %966 = vmatpush.bf16.msra.mxu0 0
      %967 = vmatpush.bf16.msra.mxu0 0
      %968 = vmatpush.bf16.msra.mxu0 0
      %969 = vmatpush.bf16.msra.mxu0 %v960
      %970 = vmatmul.bf16.gmra.mxu0 %v957
      %v971 = vpop.f32.mrf.mxu0
      %v972 = vadd.f32 0.0, %v971
      %v973 = vpop.f32.mrf.mxu0
      %974 = vdwg.mxu0
      %v975 = vadd.f32 %v790, %v972
      %s976 = scalar_lea.vmem %s3, 48
      %v977 = vld [vmem:[%s976] sm:$0xf]
      %v978 = vld [vmem:[%s976 + $0x4] sm:$0xf]
      %v979 = vld [vmem:[%s976 + $0x8] sm:$0xf]
      %v980 = vld [vmem:[%s976 + $0xc] sm:$0xf]
      %s981 = scalar_lea.vmem %s6, 3
      %v982 = vld [vmem:[%s981] sm:$0x1]
      %v984 = vperm.slane %v982, 0
      %v990 = vunpack.c.l.b16 %v977
      %v991 = vunpack.c.l.b16 %v978
      %v992 = vunpack.c.l.b16 %v979
      %v993 = vunpack.c.l.b16 %v980
      %v994 = vpack.c.b16 %v991, %v990
      %v995 = vpack.c.b16 %v993, %v992
      %998 = vmatpush.bf16.msra.mxu0 0
      %999 = vmatpush.bf16.msra.mxu0 0
      %1000 = vmatpush.bf16.msra.mxu0 0
      %1001 = vmatpush.bf16.msra.mxu0 0
      %1002 = vmatpush.bf16.msra.mxu0 0
      %1003 = vmatpush.bf16.msra.mxu0 0
      %1004 = vmatpush.bf16.msra.mxu0 %v995
      %1005 = vmatpush.bf16.msra.mxu0 %v994
      %1006 = vmatmul.bf16.gmra.mxu0 %v452
      %v1007 = vpop.f32.mrf.mxu0
      %v1008 = vadd.f32 %v984, %v1007
      %v1009 = vpop.f32.mrf.mxu0
      %1010 = vdwg.mxu0
      %s1011 = scalar_lea.vmem %s4, 48
      %v1012 = vld [vmem:[%s1011] sm:$0xf]
      %v1013 = vld [vmem:[%s1011 + $0x4] sm:$0xf]
      %v1014 = vld [vmem:[%s1011 + $0x8] sm:$0xf]
      %v1015 = vld [vmem:[%s1011 + $0xc] sm:$0xf]
      %s1016 = scalar_lea.vmem %s7, 3
      %v1017 = vld [vmem:[%s1016] sm:$0x1]
      %v1019 = vperm.slane %v1017, 0
      %v1025 = vunpack.c.l.b16 %v1012
      %v1026 = vunpack.c.l.b16 %v1013
      %v1027 = vunpack.c.l.b16 %v1014
      %v1028 = vunpack.c.l.b16 %v1015
      %v1029 = vpack.c.b16 %v1026, %v1025
      %v1030 = vpack.c.b16 %v1028, %v1027
      %1033 = vmatpush.bf16.msra.mxu0 0
      %1034 = vmatpush.bf16.msra.mxu0 0
      %1035 = vmatpush.bf16.msra.mxu0 0
      %1036 = vmatpush.bf16.msra.mxu0 0
      %1037 = vmatpush.bf16.msra.mxu0 0
      %1038 = vmatpush.bf16.msra.mxu0 0
      %1039 = vmatpush.bf16.msra.mxu0 %v1030
      %1040 = vmatpush.bf16.msra.mxu0 %v1029
      %1041 = vmatmul.bf16.gmra.mxu0 %v452
      %v1042 = vpop.f32.mrf.mxu0
      %v1043 = vadd.f32 %v1019, %v1042
      %v1044 = vpop.f32.mrf.mxu0
      %1045 = vdwg.mxu0
      %s1046 = scalar_lea.vmem %s5, 48
      %v1047 = vld [vmem:[%s1046] sm:$0xf]
      %v1048 = vld [vmem:[%s1046 + $0x4] sm:$0xf]
      %v1049 = vld [vmem:[%s1046 + $0x8] sm:$0xf]
      %v1050 = vld [vmem:[%s1046 + $0xc] sm:$0xf]
      %s1051 = scalar_lea.vmem %s8, 3
      %v1052 = vld [vmem:[%s1051] sm:$0x1]
      %v1054 = vperm.slane %v1052, 0
      %v1060 = vunpack.c.l.b16 %v1047
      %v1061 = vunpack.c.l.b16 %v1048
      %v1062 = vunpack.c.l.b16 %v1049
      %v1063 = vunpack.c.l.b16 %v1050
      %v1064 = vpack.c.b16 %v1061, %v1060
      %v1065 = vpack.c.b16 %v1063, %v1062
      %1068 = vmatpush.bf16.msra.mxu0 0
      %1069 = vmatpush.bf16.msra.mxu0 0
      %1070 = vmatpush.bf16.msra.mxu0 0
      %1071 = vmatpush.bf16.msra.mxu0 0
      %1072 = vmatpush.bf16.msra.mxu0 0
      %1073 = vmatpush.bf16.msra.mxu0 0
      %1074 = vmatpush.bf16.msra.mxu0 %v1065
      %1075 = vmatpush.bf16.msra.mxu0 %v1064
      %1076 = vmatmul.bf16.gmra.mxu0 %v452
      %v1077 = vpop.f32.mrf.mxu0
      %v1078 = vadd.f32 %v1054, %v1077
      %v1079 = vpop.f32.mrf.mxu0
      %1080 = vdwg.mxu0
      %v1081 = vpack.c.bf16 %v1008, %v1008
      %v1082 = vpack.c.bf16 %v1043, %v1043
      %v1084 = vsel %vm535, %v1081, 0
      %v1087 = vsel %vm535, %v1082, 0
      %1089 = vmatpush.bf16.xpose.msra.mxu0 0
      %1090 = vmatpush.bf16.xpose.msra.mxu0 0
      %1091 = vmatpush.bf16.xpose.msra.mxu0 0
      %1092 = vmatpush.bf16.xpose.msra.mxu0 0
      %1093 = vmatpush.bf16.xpose.msra.mxu0 0
      %1094 = vmatpush.bf16.xpose.msra.mxu0 0
      %1095 = vmatpush.bf16.xpose.msra.mxu0 0
      %1096 = vmatpush.bf16.xpose.msra.mxu0 %v1087
      %1097 = vmatmul.bf16.gmra.mxu0 %v1084
      %v1098 = vpop.f32.mrf.mxu0
      %v1099 = vadd.f32 0.0, %v1098
      %v1100 = vpop.f32.mrf.mxu0
      %1101 = vdwg.mxu0
      %v1102 = vmul.f32 %v1099, 0.35355338
      %v1103 = vsel %vm430, %v1102, -1e+30
      %v1104 = vsel %vm535, %v1103, -inf
      %1105 = vmax.xlane.f32.xlu0 %v1104
      %v1106 = vpop.xlane.xlu0 %1105
      %v1107 = vsub.f32 %v1103, %v1106
      %v1108 = vmul.f32 %v1107, 1.442695
      %v1109 = vpow.pop %v1108
      %v1110 = vsel %vm535, %v1109, 0.0
      %1111 = vadd.xlane.f32.xlu0 %v1110
      %v1112 = vpop.xlane.xlu0 %1111
      %v1113 = vrcp.pop %v1112
      %v1114 = vmul.f32 %v1109, %v1113
      %v1115 = vpack.c.bf16 %v1114, %v1114
      %v1116 = vpack.c.bf16 %v1078, %v1078
      %v1118 = vsel %vm535, %v1115, 0
      %v1121 = vsel %vm573, %v1116, 0
      %1123 = vmatpush.bf16.msra.mxu0 0
      %1124 = vmatpush.bf16.msra.mxu0 0
      %1125 = vmatpush.bf16.msra.mxu0 0
      %1126 = vmatpush.bf16.msra.mxu0 0
      %1127 = vmatpush.bf16.msra.mxu0 0
      %1128 = vmatpush.bf16.msra.mxu0 0
      %1129 = vmatpush.bf16.msra.mxu0 0
      %1130 = vmatpush.bf16.msra.mxu0 %v1121
      %1131 = vmatmul.bf16.gmra.mxu0 %v1118
      %v1132 = vpop.f32.mrf.mxu0
      %v1133 = vadd.f32 0.0, %v1132
      %v1134 = vpop.f32.mrf.mxu0
      %1135 = vdwg.mxu0
      %v1136 = vpack.c.bf16 %v1133, %v1133
      %s1137 = scalar_lea.vmem %s9, 12
      %v1138 = vld [vmem:[%s1137] sm:$0xf]
      %v1140 = vsel %vm535, %v1136, 0
      %v1143 = vsel %vm573, %v1138, 0
      %1145 = vmatpush.bf16.msra.mxu0 0
      %1146 = vmatpush.bf16.msra.mxu0 0
      %1147 = vmatpush.bf16.msra.mxu0 0
      %1148 = vmatpush.bf16.msra.mxu0 0
      %1149 = vmatpush.bf16.msra.mxu0 0
      %1150 = vmatpush.bf16.msra.mxu0 0
      %1151 = vmatpush.bf16.msra.mxu0 0
      %1152 = vmatpush.bf16.msra.mxu0 %v1143
      %1153 = vmatmul.bf16.gmra.mxu0 %v1140
      %v1154 = vpop.f32.mrf.mxu0
      %v1155 = vadd.f32 0.0, %v1154
      %v1156 = vpop.f32.mrf.mxu0
      %1157 = vdwg.mxu0
      %v1158 = vadd.f32 %v975, %v1155
      %v1159 = vadd.f32 %v384, %v1158
      %v1160 = vld [vmem:[%s10] sm:$0x1]
      %v1162 = vperm.slane %v1160, 0
      %v1164 = vadd.f32 %v1159, %v1162
      %v1165 = vpack.c.bf16 %v1164, %v1164
      %vm1166 = vcmask 257024
      %1167 = vst.msk [vmem:[%s381] sm:$0xf] %vm1166, %v1165
      %p1168 = scmp.lt.s32.totalorder %s22, 1
      %s1169 = scalar_select %p1168, %s22, 1
      %s1170 = smul.addr %s1169, 4
      %s1171 = scalar_lea.vmem %s11, %s1170
      // Predicated region
      $region65: #{_lambda_.9} parent=63 // pred_check
        %p1172 = pneg %p276
      $region66: #{_lambda_.9} parent=63 // pred_check_branch
        %1174 = sbr.rel (%p1172) target = $region68
      $region67: #{_lambda_.9} parent=63 // pred_region
        _
      $region68: #{_lambda_.9} parent=63 // pred_fallthru
        _
    $region64: #{_lambda_.9} parent=5 // pred_fallthru
      _
    %p1175 = scmp.le.s32.totalorder 2, %s17
    // Predicated region
    $region69: #{_lambda_.9} parent=5 // pred_check
      %p1176 = pneg %p1175
    $region70: #{_lambda_.9} parent=5 // pred_check_branch
      %1178 = sbr.rel (%p1176) target = $region72
    $region71: #{_lambda_.9} parent=5 // pred_region
      %s1179 = ssub.s32 %s17, 2
      // Predicated region
      $region73: #{_lambda_.9} parent=71 // pred_check
        %p1180 = pneg %p282
      $region74: #{_lambda_.9} parent=71 // pred_check_branch
        %1182 = sbr.rel (%p1180) target = $region76
      $region75: #{_lambda_.9} parent=71 // pred_region
        %p1183 = scmp.lt.s32.totalorder %s23, 1
        %s1184 = scalar_select %p1183, %s23, 1
        %s1185 = smul.addr %s1184, 4
        %s1186 = scalar_lea.vmem %s11, %s1185
      $region76: #{_lambda_.9} parent=71 // pred_fallthru
        _
    $region72: #{_lambda_.9} parent=5 // pred_fallthru
      _
  $region6: #{_lambda_.9} parent=0 // loop_footer
    %s21 = sadd.s32 1, %s17
  $region7: #{_lambda_.9} parent=0 // loop_footer_branch
    %16 = sbr.rel target = $region3
  $region8: #{_lambda_.9} parent=0 // loop_exit
    _

</llo_original>
